<compile_context>
chip_gen: v6e
topology: v6e:2x2x1
jax: 0.10.0
libtpu: 0.0.40
codegen_flags: <defaults>
</compile_context>

<pallas_src>
import functools

import jax
import jax.numpy as jnp
from jax.experimental import pallas as pl
from jax.experimental.pallas import tpu as pltpu

TN_MAX = 2048     # max lane-tile (spatial*batch columns) per grid step
MAX_DISP = 192.0  # from SSDNet(max_disp=192)


# ----------------------------------------------------------------------------
# Pallas kernel: fused  W @ patches  + bias, optional relu / sigmoid*max_disp
# ----------------------------------------------------------------------------
def _matmul_bias_act_kernel(w_ref, a_ref, bias_ref, o_ref, *, act):
    # (Cout, K) @ (K, tn) on the MXU; f32 accumulation.
    acc = jnp.dot(w_ref[...], a_ref[...], preferred_element_type=jnp.float32)
    acc = acc + bias_ref[...]                      # (Cout, 1) lane-broadcast, f32
    if act == "relu":
        acc = jnp.maximum(acc, 0.0)
    elif act == "sigmoid_scale":
        acc = jax.nn.sigmoid(acc) * MAX_DISP       # fused disparity epilogue (EUP)
    o_ref[...] = acc.astype(o_ref.dtype)


def pallas_conv_matmul(w, a, bias, act="none", out_dtype=jnp.bfloat16):
    """w: (Cout, K), a: (K, M), bias: (Cout,) -> (Cout, M).

    Weights and bias are VMEM-resident across the grid; the patch matrix and
    the output are streamed in lane-dense tiles of up to TN_MAX columns.
    K and Cout are never padded (block dims equal full array dims); M is only
    padded in the rare ragged case (M > TN_MAX and not a multiple of it).
    """
    cout, K = w.shape
    K2, M = a.shape
    assert K == K2

    w = w.astype(jnp.bfloat16)
    a = a.astype(jnp.bfloat16)
    bias2 = bias.reshape(cout, 1).astype(jnp.float32)

    tn = M if M <= TN_MAX else TN_MAX
    grid_n = pl.cdiv(M, tn)
    Mp = grid_n * tn
    if Mp != M:  # rare ragged case only
        a = jnp.pad(a, ((0, 0), (0, Mp - M)))

    kernel = functools.partial(_matmul_bias_act_kernel, act=act)
    out_isize = jnp.dtype(out_dtype).itemsize
    cost = pl.CostEstimate(
        flops=2 * cout * K * Mp,
        transcendentals=(cout * Mp if act == "sigmoid_scale" else 0),
        bytes_accessed=K * Mp * 2 + cout * K * 2 + cout * 4 + cout * Mp * out_isize,
    )

    out = pl.pallas_call(
        kernel,
        out_shape=jax.ShapeDtypeStruct((cout, Mp), out_dtype),
        grid_spec=pltpu.PrefetchScalarGridSpec(
            num_scalar_prefetch=0,
            grid=(grid_n,),
            in_specs=[
                pl.BlockSpec((cout, K), lambda i: (0, 0)),   # resident weights
                pl.BlockSpec((K, tn), lambda i: (0, i)),     # streamed patch tile
                pl.BlockSpec((cout, 1), lambda i: (0, 0)),   # resident bias
            ],
            out_specs=pl.BlockSpec((cout, tn), lambda i: (0, i)),
        ),
        compiler_params=pltpu.CompilerParams(
            dimension_semantics=("parallel",),
            vmem_limit_bytes=32 * 1024 * 1024,   # safe on v5e/v6e/v7x
        ),
        cost_estimate=cost,
    )(w, a, bias2)

    if Mp != M:
        out = out[:, :M]
    return out


# ----------------------------------------------------------------------------
# Conv2d = channel-first im2col (bf16 glue) + Pallas matmul kernel
# ----------------------------------------------------------------------------
def _im2col_cf(x, kh, kw, stride, pad):
    """x: (C, N, H, W) -> (kh*kw*C, N*Ho*Wo) patch matrix, plus (N, Ho, Wo)."""
    x = jnp.pad(x, ((0, 0), (0, 0), (pad, pad), (pad, pad)))
    c, n, h, w = x.shape
    ho = (h - kh) // stride + 1
    wo = (w - kw) // stride + 1
    cols = []
    for i in range(kh):
        for j in range(kw):
            cols.append(
                x[:, :, i:i + (ho - 1) * stride + 1:stride,
                         j:j + (wo - 1) * stride + 1:stride])
    cols = jnp.concatenate(cols, axis=0)            # (kh*kw*C, N, Ho, Wo)
    return cols.reshape(kh * kw * c, n * ho * wo), (n, ho, wo)


def conv2d(x, w, b, stride=1, pad=1, act="none", out_dtype=jnp.bfloat16):
    """x: (Cin, N, H, W) bf16, w: (Cout, KH, KW, Cin), b: (Cout,).

    Returns (Cout, N, Ho, Wo) in `out_dtype` (the reshape from the Pallas
    (Cout, N*Ho*Wo) output is a free row-major view).
    """
    cout, kh, kw, cin = w.shape
    cols, (n, ho, wo) = _im2col_cf(x.astype(jnp.bfloat16), kh, kw, stride, pad)
    wmat = w.reshape(cout, kh * kw * cin)           # K order matches im2col
    out = pallas_conv_matmul(wmat, cols, b, act=act, out_dtype=out_dtype)
    return out.reshape(cout, n, ho, wo)


def upsample2x(x):
    """Nearest-neighbour 2x upsample on (C, N, H, W) bf16."""
    # TODO(synk): fold this into the patch gather of the following conv
    # instead of materializing the 4x-sized tensor.
    return jnp.repeat(jnp.repeat(x, 2, axis=2), 2, axis=3)


# ----------------------------------------------------------------------------
# Deterministic parameter init (synthetic, not a checkpoint load)
# ----------------------------------------------------------------------------
def _conv_param(key, kh, kw, cin, cout):
    k1, k2 = jax.random.split(key)
    scale = 1.0 / jnp.sqrt(float(kh * kw * cin))
    w = jax.random.normal(k1, (cout, kh, kw, cin), jnp.float32) * scale
    b = jax.random.normal(k2, (cout,), jnp.float32) * scale
    return w, b


def init_params(key):
    ks = jax.random.split(key, 6)
    return {
        # encoder (num_ch_enc = [8, 16, 32], scales 1/2, 1/4, 1/8)
        "enc_conv1": _conv_param(ks[0], 7, 7, 3, 8),
        "enc_conv2": _conv_param(ks[1], 3, 3, 8, 16),
        "enc_conv3": _conv_param(ks[2], 3, 3, 16, 32),
        # decoder (skip-concat upconvs + disparity head)
        "dec_upconv2": _conv_param(ks[3], 3, 3, 32 + 16, 16),
        "dec_upconv1": _conv_param(ks[4], 3, 3, 16 + 8, 8),
        "dec_dispconv": _conv_param(ks[5], 3, 3, 8, 1),
    }


# ----------------------------------------------------------------------------
# Encoder / Decoder / SSDNet forward
# ----------------------------------------------------------------------------
def encoder_forward(x_nchw, params):
    # NCHW -> channel-first (C, N, H, W) bf16 working layout.
    x = jnp.transpose(x_nchw, (1, 0, 2, 3)).astype(jnp.bfloat16)
    f0 = conv2d(x, *params["enc_conv1"], stride=2, pad=3, act="relu")   # 1/2,  8ch
    f1 = conv2d(f0, *params["enc_conv2"], stride=2, pad=1, act="relu")  # 1/4, 16ch
    f2 = conv2d(f1, *params["enc_conv3"], stride=2, pad=1, act="relu")  # 1/8, 32ch
    return [f0, f1, f2]


def decoder_forward(features, params):
    f0, f1, f2 = features
    x = upsample2x(f2)                                 # -> 1/4
    x = jnp.concatenate([x, f1], axis=0)               # channel concat
    x = conv2d(x, *params["dec_upconv2"], stride=1, pad=1, act="relu")
    x = upsample2x(x)                                  # -> 1/2
    x = jnp.concatenate([x, f0], axis=0)
    x = conv2d(x, *params["dec_upconv1"], stride=1, pad=1, act="relu")
    x = upsample2x(x)                                  # -> full res
    # sigmoid * max_disp fused into the kernel epilogue; f32 output.
    disp = conv2d(x, *params["dec_dispconv"], stride=1, pad=1,
                  act="sigmoid_scale", out_dtype=jnp.float32)
    return jnp.transpose(disp, (1, 0, 2, 3))           # (C,N,H,W) -> (N,1,H,W)


def ssdnet_forward(input_images, params):
    """Siamese forward: encoder+decoder applied to left and right images.

    Left and right are run as one batch (concatenated along N) so every
    pallas_call sees 2x the lane rows and half the launches; results are split
    back, which is semantically identical to two independent passes since
    conv/upsample never mix batch elements.
    """
    assert len(input_images) == 2, "Only accept image pairs"
    nb = input_images[0].shape[0]
    x = jnp.concatenate([input_images[0], input_images[1]], axis=0)
    disp = decoder_forward(encoder_forward(x, params), params)
    return (disp[:nb], disp[nb:])


# ----------------------------------------------------------------------------
if __name__ == "__main__":
    key = jax.random.PRNGKey(0)
    k_params, k_left, k_right = jax.random.split(key, 3)
    params = init_params(k_params)

    # small NCHW stereo pair: batch=2, channels=3, 32x32
    left_img = jax.random.normal(k_left, (2, 3, 32, 32), jnp.float32)
    right_img = jax.random.normal(k_right, (2, 3, 32, 32), jnp.float32)

    fwd = jax.jit(lambda l, r, p: ssdnet_forward([l, r], p))
    left_out, right_out = fwd(left_img, right_img, params)
    jax.block_until_ready((left_out, right_out))

    assert left_out.shape == (2, 1, 32, 32)
    assert right_out.shape == (2, 1, 32, 32)
    assert bool(jnp.all(jnp.isfinite(left_out)))
    assert bool(jnp.all(jnp.isfinite(right_out)))
    assert bool(jnp.all(left_out >= 0.0)) and bool(jnp.all(left_out <= MAX_DISP))
    print("KERNEL_OK")
</pallas_src>

<mosaic_0001>
module attributes {stable_mosaic.version = 11 : i64} {
  func.func @_matmul_bias_act_kernel(%arg0: i32, %arg1: memref<8x147xbf16, #tpu.memory_space<vmem>>, %arg2: memref<147x1024xbf16, #tpu.memory_space<vmem>>, %arg3: memref<8x1xf32, #tpu.memory_space<vmem>>, %arg4: memref<8x1024xbf16, #tpu.memory_space<vmem>>) attributes {dimension_semantics = [#tpu.dimension_semantics<parallel>], iteration_bounds = array<i64: 1>, scalar_prefetch = 0 : i64, scratch_operands = 0 : i64, tpu.core_type = #tpu.core_type<tc>, window_params = [{pipeline_mode = #tpu.pipeline_mode<synchronous>, transform_indices = @transform_0, window_bounds = array<i64: 8, 147>}, {transform_indices = @transform_1, window_bounds = array<i64: 147, 1024>}, {pipeline_mode = #tpu.pipeline_mode<synchronous>, transform_indices = @transform_2, window_bounds = array<i64: 8, 1>}, {transform_indices = @transform_3, window_bounds = array<i64: 8, 1024>}]} {
    %c0 = arith.constant 0 : index
    %c0_0 = arith.constant 0 : index
    %0 = vector.load %arg1[%c0, %c0_0] : memref<8x147xbf16, #tpu.memory_space<vmem>>, vector<8x147xbf16>
    %c0_1 = arith.constant 0 : index
    %c0_2 = arith.constant 0 : index
    %1 = vector.load %arg2[%c0_1, %c0_2] : memref<147x1024xbf16, #tpu.memory_space<vmem>>, vector<147x1024xbf16>
    %cst = arith.constant dense<0.000000e+00> : vector<8x1024xf32>
    %2 = tpu.matmul %0, %1, %cst {dimension_numbers = #tpu.dot_dimension_numbers<[1], [0], [0], [1], [0, 0, 1, 1], [], []>} : vector<8x147xbf16>, vector<147x1024xbf16>, vector<8x1024xf32> -> vector<8x1024xf32>
    %c0_3 = arith.constant 0 : index
    %c0_4 = arith.constant 0 : index
    %3 = vector.load %arg3[%c0_3, %c0_4] : memref<8x1xf32, #tpu.memory_space<vmem>>, vector<8x1xf32>
    %4 = vector.broadcast %3 : vector<8x1xf32> to vector<8x1024xf32>
    %5 = arith.addf %2, %4 : vector<8x1024xf32>
    %cst_5 = arith.constant 0.000000e+00 : f32
    %6 = vector.broadcast %cst_5 : f32 to vector<8x1024xf32>
    %7 = arith.maximumf %5, %6 : vector<8x1024xf32>
    %8 = arith.truncf %7 : vector<8x1024xf32> to vector<8x1024xbf16>
    %c0_6 = arith.constant 0 : index
    %c0_7 = arith.constant 0 : index
    %9 = vector.load %arg4[%c0_6, %c0_7] : memref<8x1024xbf16, #tpu.memory_space<vmem>>, vector<8x1024xbf16>
    tpu.vector_store %arg4[%c0_6, %c0_7], %8 {strides = array<i32>} : memref<8x1024xbf16, #tpu.memory_space<vmem>>, vector<8x1024xbf16>,
    return
  }
  func.func @transform_0(%arg0: i32) -> (i32, i32) {
    %c0_i32 = arith.constant 0 : i32
    %c0_i32_0 = arith.constant 0 : i32
    %c0_i32_1 = arith.constant 0 : i32
    return %c0_i32, %c0_i32_0 : i32, i32
  }
  func.func @transform_1(%arg0: i32) -> (i32, i32) {
    %c0_i32 = arith.constant 0 : i32
    %c0_i32_0 = arith.constant 0 : i32
    return %c0_i32, %arg0 : i32, i32
  }
  func.func @transform_2(%arg0: i32) -> (i32, i32) {
    %c0_i32 = arith.constant 0 : i32
    %c0_i32_0 = arith.constant 0 : i32
    %c0_i32_1 = arith.constant 0 : i32
    return %c0_i32, %c0_i32_0 : i32, i32
  }
  func.func @transform_3(%arg0: i32) -> (i32, i32) {
    %c0_i32 = arith.constant 0 : i32
    %c0_i32_0 = arith.constant 0 : i32
    return %c0_i32, %arg0 : i32, i32
  }
}

module attributes {stable_mosaic.version = 11 : i64} {
  func.func @_matmul_bias_act_kernel(%arg0: i32, %arg1: memref<16x72xbf16, #tpu.memory_space<vmem>>, %arg2: memref<72x256xbf16, #tpu.memory_space<vmem>>, %arg3: memref<16x1xf32, #tpu.memory_space<vmem>>, %arg4: memref<16x256xbf16, #tpu.memory_space<vmem>>) attributes {dimension_semantics = [#tpu.dimension_semantics<parallel>], iteration_bounds = array<i64: 1>, scalar_prefetch = 0 : i64, scratch_operands = 0 : i64, tpu.core_type = #tpu.core_type<tc>, window_params = [{pipeline_mode = #tpu.pipeline_mode<synchronous>, transform_indices = @transform_0, window_bounds = array<i64: 16, 72>}, {transform_indices = @transform_1, window_bounds = array<i64: 72, 256>}, {pipeline_mode = #tpu.pipeline_mode<synchronous>, transform_indices = @transform_2, window_bounds = array<i64: 16, 1>}, {transform_indices = @transform_3, window_bounds = array<i64: 16, 256>}]} {
    %c0 = arith.constant 0 : index
    %c0_0 = arith.constant 0 : index
    %0 = vector.load %arg1[%c0, %c0_0] : memref<16x72xbf16, #tpu.memory_space<vmem>>, vector<16x72xbf16>
    %c0_1 = arith.constant 0 : index
    %c0_2 = arith.constant 0 : index
    %1 = vector.load %arg2[%c0_1, %c0_2] : memref<72x256xbf16, #tpu.memory_space<vmem>>, vector<72x256xbf16>
    %cst = arith.constant dense<0.000000e+00> : vector<16x256xf32>
    %2 = tpu.matmul %0, %1, %cst {dimension_numbers = #tpu.dot_dimension_numbers<[1], [0], [0], [1], [0, 0, 1, 1], [], []>} : vector<16x72xbf16>, vector<72x256xbf16>, vector<16x256xf32> -> vector<16x256xf32>
    %c0_3 = arith.constant 0 : index
    %c0_4 = arith.constant 0 : index
    %3 = vector.load %arg3[%c0_3, %c0_4] : memref<16x1xf32, #tpu.memory_space<vmem>>, vector<16x1xf32>
    %4 = vector.broadcast %3 : vector<16x1xf32> to vector<16x256xf32>
    %5 = arith.addf %2, %4 : vector<16x256xf32>
    %cst_5 = arith.constant 0.000000e+00 : f32
    %6 = vector.broadcast %cst_5 : f32 to vector<16x256xf32>
    %7 = arith.maximumf %5, %6 : vector<16x256xf32>
    %8 = arith.truncf %7 : vector<16x256xf32> to vector<16x256xbf16>
    %c0_6 = arith.constant 0 : index
    %c0_7 = arith.constant 0 : index
    %9 = vector.load %arg4[%c0_6, %c0_7] : memref<16x256xbf16, #tpu.memory_space<vmem>>, vector<16x256xbf16>
    tpu.vector_store %arg4[%c0_6, %c0_7], %8 {strides = array<i32>} : memref<16x256xbf16, #tpu.memory_space<vmem>>, vector<16x256xbf16>,
    return
  }
  func.func @transform_0(%arg0: i32) -> (i32, i32) {
    %c0_i32 = arith.constant 0 : i32
    %c0_i32_0 = arith.constant 0 : i32
    %c0_i32_1 = arith.constant 0 : i32
    return %c0_i32, %c0_i32_0 : i32, i32
  }
  func.func @transform_1(%arg0: i32) -> (i32, i32) {
    %c0_i32 = arith.constant 0 : i32
    %c0_i32_0 = arith.constant 0 : i32
    return %c0_i32, %arg0 : i32, i32
  }
  func.func @transform_2(%arg0: i32) -> (i32, i32) {
    %c0_i32 = arith.constant 0 : i32
    %c0_i32_0 = arith.constant 0 : i32
    %c0_i32_1 = arith.constant 0 : i32
    return %c0_i32, %c0_i32_0 : i32, i32
  }
  func.func @transform_3(%arg0: i32) -> (i32, i32) {
    %c0_i32 = arith.constant 0 : i32
    %c0_i32_0 = arith.constant 0 : i32
    return %c0_i32, %arg0 : i32, i32
  }
}

module attributes {stable_mosaic.version = 11 : i64} {
  func.func @_matmul_bias_act_kernel(%arg0: i32, %arg1: memref<32x144xbf16, #tpu.memory_space<vmem>>, %arg2: memref<144x64xbf16, #tpu.memory_space<vmem>>, %arg3: memref<32x1xf32, #tpu.memory_space<vmem>>, %arg4: memref<32x64xbf16, #tpu.memory_space<vmem>>) attributes {dimension_semantics = [#tpu.dimension_semantics<parallel>], iteration_bounds = array<i64: 1>, scalar_prefetch = 0 : i64, scratch_operands = 0 : i64, tpu.core_type = #tpu.core_type<tc>, window_params = [{pipeline_mode = #tpu.pipeline_mode<synchronous>, transform_indices = @transform_0, window_bounds = array<i64: 32, 144>}, {transform_indices = @transform_1, window_bounds = array<i64: 144, 64>}, {pipeline_mode = #tpu.pipeline_mode<synchronous>, transform_indices = @transform_2, window_bounds = array<i64: 32, 1>}, {transform_indices = @transform_3, window_bounds = array<i64: 32, 64>}]} {
    %c0 = arith.constant 0 : index
    %c0_0 = arith.constant 0 : index
    %0 = vector.load %arg1[%c0, %c0_0] : memref<32x144xbf16, #tpu.memory_space<vmem>>, vector<32x144xbf16>
    %c0_1 = arith.constant 0 : index
    %c0_2 = arith.constant 0 : index
    %1 = vector.load %arg2[%c0_1, %c0_2] : memref<144x64xbf16, #tpu.memory_space<vmem>>, vector<144x64xbf16>
    %cst = arith.constant dense<0.000000e+00> : vector<32x64xf32>
    %2 = tpu.matmul %0, %1, %cst {dimension_numbers = #tpu.dot_dimension_numbers<[1], [0], [0], [1], [0, 0, 1, 1], [], []>} : vector<32x144xbf16>, vector<144x64xbf16>, vector<32x64xf32> -> vector<32x64xf32>
    %c0_3 = arith.constant 0 : index
    %c0_4 = arith.constant 0 : index
    %3 = vector.load %arg3[%c0_3, %c0_4] : memref<32x1xf32, #tpu.memory_space<vmem>>, vector<32x1xf32>
    %4 = vector.broadcast %3 : vector<32x1xf32> to vector<32x64xf32>
    %5 = arith.addf %2, %4 : vector<32x64xf32>
    %cst_5 = arith.constant 0.000000e+00 : f32
    %6 = vector.broadcast %cst_5 : f32 to vector<32x64xf32>
    %7 = arith.maximumf %5, %6 : vector<32x64xf32>
    %8 = arith.truncf %7 : vector<32x64xf32> to vector<32x64xbf16>
    %c0_6 = arith.constant 0 : index
    %c0_7 = arith.constant 0 : index
    %9 = vector.load %arg4[%c0_6, %c0_7] : memref<32x64xbf16, #tpu.memory_space<vmem>>, vector<32x64xbf16>
    tpu.vector_store %arg4[%c0_6, %c0_7], %8 {strides = array<i32>} : memref<32x64xbf16, #tpu.memory_space<vmem>>, vector<32x64xbf16>,
    return
  }
  func.func @transform_0(%arg0: i32) -> (i32, i32) {
    %c0_i32 = arith.constant 0 : i32
    %c0_i32_0 = arith.constant 0 : i32
    %c0_i32_1 = arith.constant 0 : i32
    return %c0_i32, %c0_i32_0 : i32, i32
  }
  func.func @transform_1(%arg0: i32) -> (i32, i32) {
    %c0_i32 = arith.constant 0 : i32
    %c0_i32_0 = arith.constant 0 : i32
    return %c0_i32, %arg0 : i32, i32
  }
  func.func @transform_2(%arg0: i32) -> (i32, i32) {
    %c0_i32 = arith.constant 0 : i32
    %c0_i32_0 = arith.constant 0 : i32
    %c0_i32_1 = arith.constant 0 : i32
    return %c0_i32, %c0_i32_0 : i32, i32
  }
  func.func @transform_3(%arg0: i32) -> (i32, i32) {
    %c0_i32 = arith.constant 0 : i32
    %c0_i32_0 = arith.constant 0 : i32
    return %c0_i32, %arg0 : i32, i32
  }
}

module attributes {stable_mosaic.version = 11 : i64} {
  func.func @_matmul_bias_act_kernel(%arg0: i32, %arg1: memref<16x432xbf16, #tpu.memory_space<vmem>>, %arg2: memref<432x256xbf16, #tpu.memory_space<vmem>>, %arg3: memref<16x1xf32, #tpu.memory_space<vmem>>, %arg4: memref<16x256xbf16, #tpu.memory_space<vmem>>) attributes {dimension_semantics = [#tpu.dimension_semantics<parallel>], iteration_bounds = array<i64: 1>, scalar_prefetch = 0 : i64, scratch_operands = 0 : i64, tpu.core_type = #tpu.core_type<tc>, window_params = [{pipeline_mode = #tpu.pipeline_mode<synchronous>, transform_indices = @transform_0, window_bounds = array<i64: 16, 432>}, {transform_indices = @transform_1, window_bounds = array<i64: 432, 256>}, {pipeline_mode = #tpu.pipeline_mode<synchronous>, transform_indices = @transform_2, window_bounds = array<i64: 16, 1>}, {transform_indices = @transform_3, window_bounds = array<i64: 16, 256>}]} {
    %c0 = arith.constant 0 : index
    %c0_0 = arith.constant 0 : index
    %0 = vector.load %arg1[%c0, %c0_0] : memref<16x432xbf16, #tpu.memory_space<vmem>>, vector<16x432xbf16>
    %c0_1 = arith.constant 0 : index
    %c0_2 = arith.constant 0 : index
    %1 = vector.load %arg2[%c0_1, %c0_2] : memref<432x256xbf16, #tpu.memory_space<vmem>>, vector<432x256xbf16>
    %cst = arith.constant dense<0.000000e+00> : vector<16x256xf32>
    %2 = tpu.matmul %0, %1, %cst {dimension_numbers = #tpu.dot_dimension_numbers<[1], [0], [0], [1], [0, 0, 1, 1], [], []>} : vector<16x432xbf16>, vector<432x256xbf16>, vector<16x256xf32> -> vector<16x256xf32>
    %c0_3 = arith.constant 0 : index
    %c0_4 = arith.constant 0 : index
    %3 = vector.load %arg3[%c0_3, %c0_4] : memref<16x1xf32, #tpu.memory_space<vmem>>, vector<16x1xf32>
    %4 = vector.broadcast %3 : vector<16x1xf32> to vector<16x256xf32>
    %5 = arith.addf %2, %4 : vector<16x256xf32>
    %cst_5 = arith.constant 0.000000e+00 : f32
    %6 = vector.broadcast %cst_5 : f32 to vector<16x256xf32>
    %7 = arith.maximumf %5, %6 : vector<16x256xf32>
    %8 = arith.truncf %7 : vector<16x256xf32> to vector<16x256xbf16>
    %c0_6 = arith.constant 0 : index
    %c0_7 = arith.constant 0 : index
    %9 = vector.load %arg4[%c0_6, %c0_7] : memref<16x256xbf16, #tpu.memory_space<vmem>>, vector<16x256xbf16>
    tpu.vector_store %arg4[%c0_6, %c0_7], %8 {strides = array<i32>} : memref<16x256xbf16, #tpu.memory_space<vmem>>, vector<16x256xbf16>,
    return
  }
  func.func @transform_0(%arg0: i32) -> (i32, i32) {
    %c0_i32 = arith.constant 0 : i32
    %c0_i32_0 = arith.constant 0 : i32
    %c0_i32_1 = arith.constant 0 : i32
    return %c0_i32, %c0_i32_0 : i32, i32
  }
  func.func @transform_1(%arg0: i32) -> (i32, i32) {
    %c0_i32 = arith.constant 0 : i32
    %c0_i32_0 = arith.constant 0 : i32
    return %c0_i32, %arg0 : i32, i32
  }
  func.func @transform_2(%arg0: i32) -> (i32, i32) {
    %c0_i32 = arith.constant 0 : i32
    %c0_i32_0 = arith.constant 0 : i32
    %c0_i32_1 = arith.constant 0 : i32
    return %c0_i32, %c0_i32_0 : i32, i32
  }
  func.func @transform_3(%arg0: i32) -> (i32, i32) {
    %c0_i32 = arith.constant 0 : i32
    %c0_i32_0 = arith.constant 0 : i32
    return %c0_i32, %arg0 : i32, i32
  }
}

module attributes {stable_mosaic.version = 11 : i64} {
  func.func @_matmul_bias_act_kernel(%arg0: i32, %arg1: memref<8x216xbf16, #tpu.memory_space<vmem>>, %arg2: memref<216x1024xbf16, #tpu.memory_space<vmem>>, %arg3: memref<8x1xf32, #tpu.memory_space<vmem>>, %arg4: memref<8x1024xbf16, #tpu.memory_space<vmem>>) attributes {dimension_semantics = [#tpu.dimension_semantics<parallel>], iteration_bounds = array<i64: 1>, scalar_prefetch = 0 : i64, scratch_operands = 0 : i64, tpu.core_type = #tpu.core_type<tc>, window_params = [{pipeline_mode = #tpu.pipeline_mode<synchronous>, transform_indices = @transform_0, window_bounds = array<i64: 8, 216>}, {transform_indices = @transform_1, window_bounds = array<i64: 216, 1024>}, {pipeline_mode = #tpu.pipeline_mode<synchronous>, transform_indices = @transform_2, window_bounds = array<i64: 8, 1>}, {transform_indices = @transform_3, window_bounds = array<i64: 8, 1024>}]} {
    %c0 = arith.constant 0 : index
    %c0_0 = arith.constant 0 : index
    %0 = vector.load %arg1[%c0, %c0_0] : memref<8x216xbf16, #tpu.memory_space<vmem>>, vector<8x216xbf16>
    %c0_1 = arith.constant 0 : index
    %c0_2 = arith.constant 0 : index
    %1 = vector.load %arg2[%c0_1, %c0_2] : memref<216x1024xbf16, #tpu.memory_space<vmem>>, vector<216x1024xbf16>
    %cst = arith.constant dense<0.000000e+00> : vector<8x1024xf32>
    %2 = tpu.matmul %0, %1, %cst {dimension_numbers = #tpu.dot_dimension_numbers<[1], [0], [0], [1], [0, 0, 1, 1], [], []>} : vector<8x216xbf16>, vector<216x1024xbf16>, vector<8x1024xf32> -> vector<8x1024xf32>
    %c0_3 = arith.constant 0 : index
    %c0_4 = arith.constant 0 : index
    %3 = vector.load %arg3[%c0_3, %c0_4] : memref<8x1xf32, #tpu.memory_space<vmem>>, vector<8x1xf32>
    %4 = vector.broadcast %3 : vector<8x1xf32> to vector<8x1024xf32>
    %5 = arith.addf %2, %4 : vector<8x1024xf32>
    %cst_5 = arith.constant 0.000000e+00 : f32
    %6 = vector.broadcast %cst_5 : f32 to vector<8x1024xf32>
    %7 = arith.maximumf %5, %6 : vector<8x1024xf32>
    %8 = arith.truncf %7 : vector<8x1024xf32> to vector<8x1024xbf16>
    %c0_6 = arith.constant 0 : index
    %c0_7 = arith.constant 0 : index
    %9 = vector.load %arg4[%c0_6, %c0_7] : memref<8x1024xbf16, #tpu.memory_space<vmem>>, vector<8x1024xbf16>
    tpu.vector_store %arg4[%c0_6, %c0_7], %8 {strides = array<i32>} : memref<8x1024xbf16, #tpu.memory_space<vmem>>, vector<8x1024xbf16>,
    return
  }
  func.func @transform_0(%arg0: i32) -> (i32, i32) {
    %c0_i32 = arith.constant 0 : i32
    %c0_i32_0 = arith.constant 0 : i32
    %c0_i32_1 = arith.constant 0 : i32
    return %c0_i32, %c0_i32_0 : i32, i32
  }
  func.func @transform_1(%arg0: i32) -> (i32, i32) {
    %c0_i32 = arith.constant 0 : i32
    %c0_i32_0 = arith.constant 0 : i32
    return %c0_i32, %arg0 : i32, i32
  }
  func.func @transform_2(%arg0: i32) -> (i32, i32) {
    %c0_i32 = arith.constant 0 : i32
    %c0_i32_0 = arith.constant 0 : i32
    %c0_i32_1 = arith.constant 0 : i32
    return %c0_i32, %c0_i32_0 : i32, i32
  }
  func.func @transform_3(%arg0: i32) -> (i32, i32) {
    %c0_i32 = arith.constant 0 : i32
    %c0_i32_0 = arith.constant 0 : i32
    return %c0_i32, %arg0 : i32, i32
  }
}

module attributes {stable_mosaic.version = 11 : i64} {
  func.func @_matmul_bias_act_kernel(%arg0: i32, %arg1: memref<1x72xbf16, #tpu.memory_space<vmem>>, %arg2: memref<72x2048xbf16, #tpu.memory_space<vmem>>, %arg3: memref<1x1xf32, #tpu.memory_space<vmem>>, %arg4: memref<1x2048xf32, #tpu.memory_space<vmem>>) attributes {dimension_semantics = [#tpu.dimension_semantics<parallel>], iteration_bounds = array<i64: 2>, scalar_prefetch = 0 : i64, scratch_operands = 0 : i64, tpu.core_type = #tpu.core_type<tc>, window_params = [{pipeline_mode = #tpu.pipeline_mode<synchronous>, transform_indices = @transform_0, window_bounds = array<i64: 1, 72>}, {transform_indices = @transform_1, window_bounds = array<i64: 72, 2048>}, {pipeline_mode = #tpu.pipeline_mode<synchronous>, transform_indices = @transform_2, window_bounds = array<i64: 1, 1>}, {transform_indices = @transform_3, window_bounds = array<i64: 1, 2048>}]} {
    %c0 = arith.constant 0 : index
    %c0_0 = arith.constant 0 : index
    %0 = vector.load %arg1[%c0, %c0_0] : memref<1x72xbf16, #tpu.memory_space<vmem>>, vector<1x72xbf16>
    %c0_1 = arith.constant 0 : index
    %c0_2 = arith.constant 0 : index
    %1 = vector.load %arg2[%c0_1, %c0_2] : memref<72x2048xbf16, #tpu.memory_space<vmem>>, vector<72x2048xbf16>
    %cst = arith.constant dense<0.000000e+00> : vector<1x2048xf32>
    %2 = tpu.matmul %0, %1, %cst {dimension_numbers = #tpu.dot_dimension_numbers<[1], [0], [0], [1], [0, 0, 1, 1], [], []>} : vector<1x72xbf16>, vector<72x2048xbf16>, vector<1x2048xf32> -> vector<1x2048xf32>
    %c0_3 = arith.constant 0 : index
    %c0_4 = arith.constant 0 : index
    %3 = vector.load %arg3[%c0_3, %c0_4] : memref<1x1xf32, #tpu.memory_space<vmem>>, vector<1x1xf32>
    %4 = vector.broadcast %3 : vector<1x1xf32> to vector<1x2048xf32>
    %5 = arith.addf %2, %4 : vector<1x2048xf32>
    %6 = arith.negf %5 : vector<1x2048xf32>
    %7 = math.exp %6 : vector<1x2048xf32>
    %cst_5 = arith.constant 1.000000e+00 : f32
    %8 = vector.broadcast %cst_5 : f32 to vector<1x2048xf32>
    %9 = arith.addf %8, %7 : vector<1x2048xf32>
    %10 = arith.divf %8, %9 : vector<1x2048xf32>
    %cst_6 = arith.constant 1.920000e+02 : f32
    %11 = vector.broadcast %cst_6 : f32 to vector<1x2048xf32>
    %12 = arith.mulf %10, %11 : vector<1x2048xf32>
    %c0_7 = arith.constant 0 : index
    %c0_8 = arith.constant 0 : index
    %13 = vector.load %arg4[%c0_7, %c0_8] : memref<1x2048xf32, #tpu.memory_space<vmem>>, vector<1x2048xf32>
    tpu.vector_store %arg4[%c0_7, %c0_8], %12 {strides = array<i32>} : memref<1x2048xf32, #tpu.memory_space<vmem>>, vector<1x2048xf32>,
    return
  }
  func.func @transform_0(%arg0: i32) -> (i32, i32) {
    %c0_i32 = arith.constant 0 : i32
    %c0_i32_0 = arith.constant 0 : i32
    %c0_i32_1 = arith.constant 0 : i32
    return %c0_i32, %c0_i32_0 : i32, i32
  }
  func.func @transform_1(%arg0: i32) -> (i32, i32) {
    %c0_i32 = arith.constant 0 : i32
    %c0_i32_0 = arith.constant 0 : i32
    return %c0_i32, %arg0 : i32, i32
  }
  func.func @transform_2(%arg0: i32) -> (i32, i32) {
    %c0_i32 = arith.constant 0 : i32
    %c0_i32_0 = arith.constant 0 : i32
    %c0_i32_1 = arith.constant 0 : i32
    return %c0_i32, %c0_i32_0 : i32, i32
  }
  func.func @transform_3(%arg0: i32) -> (i32, i32) {
    %c0_i32 = arith.constant 0 : i32
    %c0_i32_0 = arith.constant 0 : i32
    return %c0_i32, %arg0 : i32, i32
  }
}

</mosaic_0001>

<llo_original>
// kernel: _lambda_.6
$region0: #{_lambda_.6}
  #allocation0 [shape = 'u32[]', space=smem, size = 0x4, offset = 0x4, fixed_abs, tag = 'smem constant byte address 0x4 - core index']
  #allocation1 [shape = 'u32[144,128]{1,0:T(1,128)}', space=vmem, size = 0x12000, scoped, tag = 'internal scratch']
  %s0 = inlined_call_operand.vmem [shape: bf16[8,147], index: 0, kind: input, shape index: {}]
  %s1 = inlined_call_operand.vmem [shape: bf16[147,1024], index: 1, kind: input, shape index: {}]
  %s2 = inlined_call_operand.vmem [shape: f32[8,1], index: 2, kind: input, shape index: {}]
  %s3 = inlined_call_operand.vmem [shape: bf16[8,1024], index: 3, kind: output, shape index: {}]
  %s4 = sld [smem:[#allocation0]]
  $region22: #{_lambda_.6} parent=0
    _
  %s6 = ssub.s32 1, %s4
  %s7 = scalar_select 0, %s6, %s4
  // Predicated region
  $region2: #{_lambda_.6} parent=0 // pred_check
    _
  $region3: #{_lambda_.6} parent=0 // pred_check_branch
    %9 = sbr.rel (0) target = $region5
  $region4: #{_lambda_.6} parent=0 // pred_region
    _
  $region5: #{_lambda_.6} parent=0 // pred_fallthru
    _
  // Predicated region
  $region6: #{_lambda_.6} parent=0 // pred_check
    _
  $region7: #{_lambda_.6} parent=0 // pred_check_branch
    %11 = sbr.rel (0) target = $region9
  $region8: #{_lambda_.6} parent=0 // pred_region
    _
  $region9: #{_lambda_.6} parent=0 // pred_fallthru
    _
  // Predicated region
  $region10: #{_lambda_.6} parent=0 // pred_check
    _
  $region11: #{_lambda_.6} parent=0 // pred_check_branch
    %13 = sbr.rel (0) target = $region13
  $region12: #{_lambda_.6} parent=0 // pred_region
    _
  $region13: #{_lambda_.6} parent=0 // pred_fallthru
    _
  %v15 = vld [vmem:[%s0] sm:$0xff]
  %v16 = vld [vmem:[%s1] sm:$0xff]
  %v17 = vld [vmem:[%s1 + $0x8] sm:$0xff]
  %v18 = vld [vmem:[%s1 + $0x10] sm:$0xff]
  %v19 = vld [vmem:[%s1 + $0x18] sm:$0xff]
  %v20 = vld [vmem:[%s1 + $0x20] sm:$0xff]
  %v21 = vld [vmem:[%s1 + $0x28] sm:$0xff]
  %v22 = vld [vmem:[%s1 + $0x30] sm:$0xff]
  %v23 = vld [vmem:[%s1 + $0x38] sm:$0xff]
  %v24 = vld [vmem:[%s1 + $0x40] sm:$0xff]
  %v25 = vld [vmem:[%s1 + $0x48] sm:$0xff]
  %v26 = vld [vmem:[%s1 + $0x50] sm:$0xff]
  %v27 = vld [vmem:[%s1 + $0x58] sm:$0xff]
  %v28 = vld [vmem:[%s1 + $0x60] sm:$0xff]
  %v29 = vld [vmem:[%s1 + $0x68] sm:$0xff]
  %v30 = vld [vmem:[%s1 + $0x70] sm:$0xff]
  %v31 = vld [vmem:[%s1 + $0x78] sm:$0xff]
  %v32 = vld [vmem:[%s1 + $0x80] sm:$0xff]
  %v33 = vld [vmem:[%s1 + $0x88] sm:$0xff]
  %v34 = vld [vmem:[%s1 + $0x90] sm:$0xff]
  %v35 = vld [vmem:[%s1 + $0x98] sm:$0xff]
  %v36 = vld [vmem:[%s1 + $0xa0] sm:$0xff]
  %v37 = vld [vmem:[%s1 + $0xa8] sm:$0xff]
  %v38 = vld [vmem:[%s1 + $0xb0] sm:$0xff]
  %v39 = vld [vmem:[%s1 + $0xb8] sm:$0xff]
  %v40 = vld [vmem:[%s1 + $0xc0] sm:$0xff]
  %v41 = vld [vmem:[%s1 + $0xc8] sm:$0xff]
  %v42 = vld [vmem:[%s1 + $0xd0] sm:$0xff]
  %v43 = vld [vmem:[%s1 + $0xd8] sm:$0xff]
  %v44 = vld [vmem:[%s1 + $0xe0] sm:$0xff]
  %v45 = vld [vmem:[%s1 + $0xe8] sm:$0xff]
  %v46 = vld [vmem:[%s1 + $0xf0] sm:$0xff]
  %v47 = vld [vmem:[%s1 + $0xf8] sm:$0xff]
  %v48 = vld [vmem:[%s1 + $0x100] sm:$0xff]
  %v49 = vld [vmem:[%s1 + $0x108] sm:$0xff]
  %v50 = vld [vmem:[%s1 + $0x110] sm:$0xff]
  %v51 = vld [vmem:[%s1 + $0x118] sm:$0xff]
  %v52 = vld [vmem:[%s1 + $0x120] sm:$0xff]
  %v53 = vld [vmem:[%s1 + $0x128] sm:$0xff]
  %v54 = vld [vmem:[%s1 + $0x130] sm:$0xff]
  %v55 = vld [vmem:[%s1 + $0x138] sm:$0xff]
  %v56 = vld [vmem:[%s1 + $0x140] sm:$0xff]
  %v57 = vld [vmem:[%s1 + $0x148] sm:$0xff]
  %v58 = vld [vmem:[%s1 + $0x150] sm:$0xff]
  %v59 = vld [vmem:[%s1 + $0x158] sm:$0xff]
  %v60 = vld [vmem:[%s1 + $0x160] sm:$0xff]
  %v61 = vld [vmem:[%s1 + $0x168] sm:$0xff]
  %v62 = vld [vmem:[%s1 + $0x170] sm:$0xff]
  %v63 = vld [vmem:[%s1 + $0x178] sm:$0xff]
  %v64 = vld [vmem:[%s1 + $0x180] sm:$0xff]
  %v65 = vld [vmem:[%s1 + $0x188] sm:$0xff]
  %v66 = vld [vmem:[%s1 + $0x190] sm:$0xff]
  %v67 = vld [vmem:[%s1 + $0x198] sm:$0xff]
  %v68 = vld [vmem:[%s1 + $0x1a0] sm:$0xff]
  %v69 = vld [vmem:[%s1 + $0x1a8] sm:$0xff]
  %v70 = vld [vmem:[%s1 + $0x1b0] sm:$0xff]
  %v71 = vld [vmem:[%s1 + $0x1b8] sm:$0xff]
  %v72 = vld [vmem:[%s1 + $0x1c0] sm:$0xff]
  %v73 = vld [vmem:[%s1 + $0x1c8] sm:$0xff]
  %v74 = vld [vmem:[%s1 + $0x1d0] sm:$0xff]
  %v75 = vld [vmem:[%s1 + $0x1d8] sm:$0xff]
  %v76 = vld [vmem:[%s1 + $0x1e0] sm:$0xff]
  %v77 = vld [vmem:[%s1 + $0x1e8] sm:$0xff]
  %v78 = vld [vmem:[%s1 + $0x1f0] sm:$0xff]
  %v79 = vld [vmem:[%s1 + $0x1f8] sm:$0xff]
  %v80 = vld [vmem:[%s1 + $0x200] sm:$0xff]
  %v81 = vld [vmem:[%s1 + $0x208] sm:$0xff]
  %v82 = vld [vmem:[%s1 + $0x210] sm:$0xff]
  %v83 = vld [vmem:[%s1 + $0x218] sm:$0xff]
  %v84 = vld [vmem:[%s1 + $0x220] sm:$0xff]
  %v85 = vld [vmem:[%s1 + $0x228] sm:$0xff]
  %v86 = vld [vmem:[%s1 + $0x230] sm:$0xff]
  %v87 = vld [vmem:[%s1 + $0x238] sm:$0xff]
  %v88 = vld [vmem:[%s1 + $0x240] sm:$0x33]
  %v89 = vld [vmem:[%s1 + $0x248] sm:$0x33]
  %v90 = vld [vmem:[%s1 + $0x250] sm:$0x33]
  %v91 = vld [vmem:[%s1 + $0x258] sm:$0x33]
  %v92 = vld [vmem:[%s2] sm:$0xff]
  %94 = vset.pattern.permute.xlu0 0
  %95 = vperm.xlu0 %94, %v92
  %v96 = vpop.permute.xlu0 %95
  %v99 = vunpack.c.l.b16 %v15
  %v100 = vunpack.c.h.b16 %v15
  %v101 = vpack.c.b16 %v99, %v99
  %v102 = vpack.c.b16 %v100, %v100
  %v180 = vunpack.c.l.b16 %v16
  %v181 = vunpack.c.h.b16 %v16
  %v182 = vunpack.c.l.b16 %v17
  %v183 = vunpack.c.h.b16 %v17
  %v184 = vunpack.c.l.b16 %v18
  %v185 = vunpack.c.h.b16 %v18
  %v186 = vunpack.c.l.b16 %v19
  %v187 = vunpack.c.h.b16 %v19
  %v188 = vunpack.c.l.b16 %v20
  %v189 = vunpack.c.h.b16 %v20
  %v190 = vunpack.c.l.b16 %v21
  %v191 = vunpack.c.h.b16 %v21
  %v192 = vunpack.c.l.b16 %v22
  %v193 = vunpack.c.h.b16 %v22
  %v194 = vunpack.c.l.b16 %v23
  %v195 = vunpack.c.h.b16 %v23
  %v196 = vunpack.c.l.b16 %v24
  %v197 = vunpack.c.h.b16 %v24
  %v198 = vunpack.c.l.b16 %v25
  %v199 = vunpack.c.h.b16 %v25
  %v200 = vunpack.c.l.b16 %v26
  %v201 = vunpack.c.h.b16 %v26
  %v202 = vunpack.c.l.b16 %v27
  %v203 = vunpack.c.h.b16 %v27
  %v204 = vunpack.c.l.b16 %v28
  %v205 = vunpack.c.h.b16 %v28
  %v206 = vunpack.c.l.b16 %v29
  %v207 = vunpack.c.h.b16 %v29
  %v208 = vunpack.c.l.b16 %v30
  %v209 = vunpack.c.h.b16 %v30
  %v210 = vunpack.c.l.b16 %v31
  %v211 = vunpack.c.h.b16 %v31
  %v212 = vunpack.c.l.b16 %v32
  %v213 = vunpack.c.h.b16 %v32
  %v214 = vunpack.c.l.b16 %v33
  %v215 = vunpack.c.h.b16 %v33
  %v216 = vunpack.c.l.b16 %v34
  %v217 = vunpack.c.h.b16 %v34
  %v218 = vunpack.c.l.b16 %v35
  %v219 = vunpack.c.h.b16 %v35
  %v220 = vunpack.c.l.b16 %v36
  %v221 = vunpack.c.h.b16 %v36
  %v222 = vunpack.c.l.b16 %v37
  %v223 = vunpack.c.h.b16 %v37
  %v224 = vunpack.c.l.b16 %v38
  %v225 = vunpack.c.h.b16 %v38
  %v226 = vunpack.c.l.b16 %v39
  %v227 = vunpack.c.h.b16 %v39
  %v228 = vunpack.c.l.b16 %v40
  %v229 = vunpack.c.h.b16 %v40
  %v230 = vunpack.c.l.b16 %v41
  %v231 = vunpack.c.h.b16 %v41
  %v232 = vunpack.c.l.b16 %v42
  %v233 = vunpack.c.h.b16 %v42
  %v234 = vunpack.c.l.b16 %v43
  %v235 = vunpack.c.h.b16 %v43
  %v236 = vunpack.c.l.b16 %v44
  %v237 = vunpack.c.h.b16 %v44
  %v238 = vunpack.c.l.b16 %v45
  %v239 = vunpack.c.h.b16 %v45
  %v240 = vunpack.c.l.b16 %v46
  %v241 = vunpack.c.h.b16 %v46
  %v242 = vunpack.c.l.b16 %v47
  %v243 = vunpack.c.h.b16 %v47
  %v244 = vunpack.c.l.b16 %v48
  %v245 = vunpack.c.h.b16 %v48
  %v246 = vunpack.c.l.b16 %v49
  %v247 = vunpack.c.h.b16 %v49
  %v248 = vunpack.c.l.b16 %v50
  %v249 = vunpack.c.h.b16 %v50
  %v250 = vunpack.c.l.b16 %v51
  %v251 = vunpack.c.h.b16 %v51
  %v252 = vunpack.c.l.b16 %v52
  %v253 = vunpack.c.h.b16 %v52
  %v254 = vunpack.c.l.b16 %v53
  %v255 = vunpack.c.h.b16 %v53
  %v256 = vunpack.c.l.b16 %v54
  %v257 = vunpack.c.h.b16 %v54
  %v258 = vunpack.c.l.b16 %v55
  %v259 = vunpack.c.h.b16 %v55
  %v260 = vunpack.c.l.b16 %v56
  %v261 = vunpack.c.h.b16 %v56
  %v262 = vunpack.c.l.b16 %v57
  %v263 = vunpack.c.h.b16 %v57
  %v264 = vunpack.c.l.b16 %v58
  %v265 = vunpack.c.h.b16 %v58
  %v266 = vunpack.c.l.b16 %v59
  %v267 = vunpack.c.h.b16 %v59
  %v268 = vunpack.c.l.b16 %v60
  %v269 = vunpack.c.h.b16 %v60
  %v270 = vunpack.c.l.b16 %v61
  %v271 = vunpack.c.h.b16 %v61
  %v272 = vunpack.c.l.b16 %v62
  %v273 = vunpack.c.h.b16 %v62
  %v274 = vunpack.c.l.b16 %v63
  %v275 = vunpack.c.h.b16 %v63
  %v276 = vunpack.c.l.b16 %v64
  %v277 = vunpack.c.h.b16 %v64
  %v278 = vunpack.c.l.b16 %v65
  %v279 = vunpack.c.h.b16 %v65
  %v280 = vunpack.c.l.b16 %v66
  %v281 = vunpack.c.h.b16 %v66
  %v282 = vunpack.c.l.b16 %v67
  %v283 = vunpack.c.h.b16 %v67
  %v284 = vunpack.c.l.b16 %v68
  %v285 = vunpack.c.h.b16 %v68
  %v286 = vunpack.c.l.b16 %v69
  %v287 = vunpack.c.h.b16 %v69
  %v288 = vunpack.c.l.b16 %v70
  %v289 = vunpack.c.h.b16 %v70
  %v290 = vunpack.c.l.b16 %v71
  %v291 = vunpack.c.h.b16 %v71
  %v292 = vunpack.c.l.b16 %v72
  %v293 = vunpack.c.h.b16 %v72
  %v294 = vunpack.c.l.b16 %v73
  %v295 = vunpack.c.h.b16 %v73
  %v296 = vunpack.c.l.b16 %v74
  %v297 = vunpack.c.h.b16 %v74
  %v298 = vunpack.c.l.b16 %v75
  %v299 = vunpack.c.h.b16 %v75
  %v300 = vunpack.c.l.b16 %v76
  %v301 = vunpack.c.h.b16 %v76
  %v302 = vunpack.c.l.b16 %v77
  %v303 = vunpack.c.h.b16 %v77
  %v304 = vunpack.c.l.b16 %v78
  %v305 = vunpack.c.h.b16 %v78
  %v306 = vunpack.c.l.b16 %v79
  %v307 = vunpack.c.h.b16 %v79
  %v308 = vunpack.c.l.b16 %v80
  %v309 = vunpack.c.h.b16 %v80
  %v310 = vunpack.c.l.b16 %v81
  %v311 = vunpack.c.h.b16 %v81
  %v312 = vunpack.c.l.b16 %v82
  %v313 = vunpack.c.h.b16 %v82
  %v314 = vunpack.c.l.b16 %v83
  %v315 = vunpack.c.h.b16 %v83
  %v316 = vunpack.c.l.b16 %v84
  %v317 = vunpack.c.h.b16 %v84
  %v318 = vunpack.c.l.b16 %v85
  %v319 = vunpack.c.h.b16 %v85
  %v320 = vunpack.c.l.b16 %v86
  %v321 = vunpack.c.h.b16 %v86
  %v322 = vunpack.c.l.b16 %v87
  %v323 = vunpack.c.h.b16 %v87
  %v324 = vunpack.c.l.b16 %v88
  %v325 = vunpack.c.h.b16 %v88
  %v326 = vunpack.c.l.b16 %v89
  %v327 = vunpack.c.h.b16 %v89
  %v328 = vunpack.c.l.b16 %v90
  %v329 = vunpack.c.h.b16 %v90
  %v330 = vunpack.c.l.b16 %v91
  %v331 = vunpack.c.h.b16 %v91
  %v332 = vpack.c.b16 %v188, %v180
  %v333 = vpack.c.b16 %v189, %v181
  %v334 = vpack.c.b16 %v190, %v182
  %v335 = vpack.c.b16 %v191, %v183
  %v336 = vpack.c.b16 %v192, %v184
  %v337 = vpack.c.b16 %v193, %v185
  %v338 = vpack.c.b16 %v194, %v186
  %v339 = vpack.c.b16 %v195, %v187
  %v340 = vpack.c.b16 %v204, %v196
  %v341 = vpack.c.b16 %v205, %v197
  %v342 = vpack.c.b16 %v206, %v198
  %v343 = vpack.c.b16 %v207, %v199
  %v344 = vpack.c.b16 %v208, %v200
  %v345 = vpack.c.b16 %v209, %v201
  %v346 = vpack.c.b16 %v210, %v202
  %v347 = vpack.c.b16 %v211, %v203
  %v348 = vpack.c.b16 %v220, %v212
  %v349 = vpack.c.b16 %v221, %v213
  %v350 = vpack.c.b16 %v222, %v214
  %v351 = vpack.c.b16 %v223, %v215
  %v352 = vpack.c.b16 %v224, %v216
  %v353 = vpack.c.b16 %v225, %v217
  %v354 = vpack.c.b16 %v226, %v218
  %v355 = vpack.c.b16 %v227, %v219
  %v356 = vpack.c.b16 %v236, %v228
  %v357 = vpack.c.b16 %v237, %v229
  %v358 = vpack.c.b16 %v238, %v230
  %v359 = vpack.c.b16 %v239, %v231
  %v360 = vpack.c.b16 %v240, %v232
  %v361 = vpack.c.b16 %v241, %v233
  %v362 = vpack.c.b16 %v242, %v234
  %v363 = vpack.c.b16 %v243, %v235
  %v364 = vpack.c.b16 %v252, %v244
  %v365 = vpack.c.b16 %v253, %v245
  %v366 = vpack.c.b16 %v254, %v246
  %v367 = vpack.c.b16 %v255, %v247
  %v368 = vpack.c.b16 %v256, %v248
  %v369 = vpack.c.b16 %v257, %v249
  %v370 = vpack.c.b16 %v258, %v250
  %v371 = vpack.c.b16 %v259, %v251
  %v372 = vpack.c.b16 %v268, %v260
  %v373 = vpack.c.b16 %v269, %v261
  %v374 = vpack.c.b16 %v270, %v262
  %v375 = vpack.c.b16 %v271, %v263
  %v376 = vpack.c.b16 %v272, %v264
  %v377 = vpack.c.b16 %v273, %v265
  %v378 = vpack.c.b16 %v274, %v266
  %v379 = vpack.c.b16 %v275, %v267
  %v380 = vpack.c.b16 %v284, %v276
  %v381 = vpack.c.b16 %v285, %v277
  %v382 = vpack.c.b16 %v286, %v278
  %v383 = vpack.c.b16 %v287, %v279
  %v384 = vpack.c.b16 %v288, %v280
  %v385 = vpack.c.b16 %v289, %v281
  %v386 = vpack.c.b16 %v290, %v282
  %v387 = vpack.c.b16 %v291, %v283
  %v388 = vpack.c.b16 %v300, %v292
  %v389 = vpack.c.b16 %v301, %v293
  %v390 = vpack.c.b16 %v302, %v294
  %v391 = vpack.c.b16 %v303, %v295
  %v392 = vpack.c.b16 %v304, %v296
  %v393 = vpack.c.b16 %v305, %v297
  %v394 = vpack.c.b16 %v306, %v298
  %v395 = vpack.c.b16 %v307, %v299
  %v396 = vpack.c.b16 %v316, %v308
  %v397 = vpack.c.b16 %v317, %v309
  %v398 = vpack.c.b16 %v318, %v310
  %v399 = vpack.c.b16 %v319, %v311
  %v400 = vpack.c.b16 %v320, %v312
  %v401 = vpack.c.b16 %v321, %v313
  %v402 = vpack.c.b16 %v322, %v314
  %v403 = vpack.c.b16 %v323, %v315
  %v404 = vpack.c.b16 %v324, %v324
  %v405 = vpack.c.b16 %v325, %v325
  %v406 = vpack.c.b16 %v326, %v326
  %v407 = vpack.c.b16 %v327, %v327
  %v408 = vpack.c.b16 %v328, %v328
  %v409 = vpack.c.b16 %v329, %v329
  %v410 = vpack.c.b16 %v330, %v330
  %v411 = vpack.c.b16 %v331, %v331
  %vm484 = vcmask 154624
  %v486 = vsel %vm484, %v102, 0
  %vm488 = vcmask 1040384
  %vm489 = vcmask 1041408
  %v490 = vsel %vm488, 4294967295, 65535
  %v491 = vsel %vm489, %v490, 0
  %v493 = vand.u32 %v404, %v491
  %v496 = vand.u32 %v405, %v491
  %v499 = vand.u32 %v406, %v491
  %v502 = vand.u32 %v407, %v491
  %v505 = vand.u32 %v408, %v491
  %v508 = vand.u32 %v409, %v491
  %v511 = vand.u32 %v410, %v491
  %v514 = vand.u32 %v411, %v491
  %516 = vmatprep.subr.bf16.mxu0 %v389
  %517 = vmatpush1.bf16.msra.mxu0 %v388
  %518 = vmatprep.subr.bf16.mxu0 %v381
  %519 = vmatpush1.bf16.msra.mxu0 %v380
  %520 = vmatprep.subr.bf16.mxu0 %v373
  %521 = vmatpush1.bf16.msra.mxu0 %v372
  %522 = vmatprep.subr.bf16.mxu0 %v365
  %523 = vmatpush1.bf16.msra.mxu0 %v364
  %524 = vmatprep.subr.bf16.mxu0 %v357
  %525 = vmatpush1.bf16.msra.mxu0 %v356
  %526 = vmatprep.subr.bf16.mxu0 %v349
  %527 = vmatpush1.bf16.msra.mxu0 %v348
  %528 = vmatprep.subr.bf16.mxu0 %v341
  %529 = vmatpush1.bf16.msra.mxu0 %v340
  %530 = vmatprep.subr.bf16.mxu0 %v333
  %531 = vmatpush1.bf16.msra.mxu0 %v332
  %532 = vmatprep.subr.bf16.mxu0 0
  %533 = vmatpush2.bf16.msra.mxu0 0
  %534 = vmatprep.subr.bf16.mxu0 0
  %535 = vmatpush2.bf16.msra.mxu0 0
  %536 = vmatprep.subr.bf16.mxu0 0
  %537 = vmatpush2.bf16.msra.mxu0 0
  %538 = vmatprep.subr.bf16.mxu0 0
  %539 = vmatpush2.bf16.msra.mxu0 0
  %540 = vmatprep.subr.bf16.mxu0 0
  %541 = vmatpush2.bf16.msra.mxu0 0
  %542 = vmatprep.subr.bf16.mxu0 0
  %543 = vmatpush2.bf16.msra.mxu0 0
  %544 = vmatprep.subr.bf16.mxu0 %v496
  %545 = vmatpush2.bf16.msra.mxu0 %v493
  %546 = vmatprep.subr.bf16.mxu0 %v397
  %547 = vmatpush2.bf16.msra.mxu0 %v396
  %548 = vmatprep.mubr.bf16.mxu0 %v486
  %549 = vmatmul.mubr.bf16.gmra.mxu0 %v101
  %v550 = vpop.f32.mrf.mxu0
  %v551 = vadd.f32 %v96, %v550
  %v552 = vpop.f32.mrf.mxu0
  %v553 = vadd.f32 %v96, %v552
  %v554 = vpop.f32.mrf.mxu0
  %v555 = vpop.f32.mrf.mxu0
  %556 = vdwg.mxu0
  %557 = vmatprep.subr.bf16.mxu0 %v391
  %558 = vmatpush1.bf16.msra.mxu0 %v390
  %559 = vmatprep.subr.bf16.mxu0 %v383
  %560 = vmatpush1.bf16.msra.mxu0 %v382
  %561 = vmatprep.subr.bf16.mxu0 %v375
  %562 = vmatpush1.bf16.msra.mxu0 %v374
  %563 = vmatprep.subr.bf16.mxu0 %v367
  %564 = vmatpush1.bf16.msra.mxu0 %v366
  %565 = vmatprep.subr.bf16.mxu0 %v359
  %566 = vmatpush1.bf16.msra.mxu0 %v358
  %567 = vmatprep.subr.bf16.mxu0 %v351
  %568 = vmatpush1.bf16.msra.mxu0 %v350
  %569 = vmatprep.subr.bf16.mxu0 %v343
  %570 = vmatpush1.bf16.msra.mxu0 %v342
  %571 = vmatprep.subr.bf16.mxu0 %v335
  %572 = vmatpush1.bf16.msra.mxu0 %v334
  %573 = vmatprep.subr.bf16.mxu0 0
  %574 = vmatpush2.bf16.msra.mxu0 0
  %575 = vmatprep.subr.bf16.mxu0 0
  %576 = vmatpush2.bf16.msra.mxu0 0
  %577 = vmatprep.subr.bf16.mxu0 0
  %578 = vmatpush2.bf16.msra.mxu0 0
  %579 = vmatprep.subr.bf16.mxu0 0
  %580 = vmatpush2.bf16.msra.mxu0 0
  %581 = vmatprep.subr.bf16.mxu0 0
  %582 = vmatpush2.bf16.msra.mxu0 0
  %583 = vmatprep.subr.bf16.mxu0 0
  %584 = vmatpush2.bf16.msra.mxu0 0
  %585 = vmatprep.subr.bf16.mxu0 %v502
  %586 = vmatpush2.bf16.msra.mxu0 %v499
  %587 = vmatprep.subr.bf16.mxu0 %v399
  %588 = vmatpush2.bf16.msra.mxu0 %v398
  %589 = vmatprep.mubr.bf16.mxu0 %v486
  %590 = vmatmul.mubr.bf16.gmra.mxu0 %v101
  %v591 = vpop.f32.mrf.mxu0
  %v592 = vadd.f32 %v96, %v591
  %v593 = vpop.f32.mrf.mxu0
  %v594 = vadd.f32 %v96, %v593
  %v595 = vpop.f32.mrf.mxu0
  %v596 = vpop.f32.mrf.mxu0
  %597 = vdwg.mxu0
  %598 = vmatprep.subr.bf16.mxu0 %v393
  %599 = vmatpush1.bf16.msra.mxu0 %v392
  %600 = vmatprep.subr.bf16.mxu0 %v385
  %601 = vmatpush1.bf16.msra.mxu0 %v384
  %602 = vmatprep.subr.bf16.mxu0 %v377
  %603 = vmatpush1.bf16.msra.mxu0 %v376
  %604 = vmatprep.subr.bf16.mxu0 %v369
  %605 = vmatpush1.bf16.msra.mxu0 %v368
  %606 = vmatprep.subr.bf16.mxu0 %v361
  %607 = vmatpush1.bf16.msra.mxu0 %v360
  %608 = vmatprep.subr.bf16.mxu0 %v353
  %609 = vmatpush1.bf16.msra.mxu0 %v352
  %610 = vmatprep.subr.bf16.mxu0 %v345
  %611 = vmatpush1.bf16.msra.mxu0 %v344
  %612 = vmatprep.subr.bf16.mxu0 %v337
  %613 = vmatpush1.bf16.msra.mxu0 %v336
  %614 = vmatprep.subr.bf16.mxu0 0
  %615 = vmatpush2.bf16.msra.mxu0 0
  %616 = vmatprep.subr.bf16.mxu0 0
  %617 = vmatpush2.bf16.msra.mxu0 0
  %618 = vmatprep.subr.bf16.mxu0 0
  %619 = vmatpush2.bf16.msra.mxu0 0
  %620 = vmatprep.subr.bf16.mxu0 0
  %621 = vmatpush2.bf16.msra.mxu0 0
  %622 = vmatprep.subr.bf16.mxu0 0
  %623 = vmatpush2.bf16.msra.mxu0 0
  %624 = vmatprep.subr.bf16.mxu0 0
  %625 = vmatpush2.bf16.msra.mxu0 0
  %626 = vmatprep.subr.bf16.mxu0 %v508
  %627 = vmatpush2.bf16.msra.mxu0 %v505
  %628 = vmatprep.subr.bf16.mxu0 %v401
  %629 = vmatpush2.bf16.msra.mxu0 %v400
  %630 = vmatprep.mubr.bf16.mxu0 %v486
  %631 = vmatmul.mubr.bf16.gmra.mxu0 %v101
  %v632 = vpop.f32.mrf.mxu0
  %v633 = vadd.f32 %v96, %v632
  %v634 = vpop.f32.mrf.mxu0
  %v635 = vadd.f32 %v96, %v634
  %v636 = vpop.f32.mrf.mxu0
  %v637 = vpop.f32.mrf.mxu0
  %638 = vdwg.mxu0
  %639 = vmatprep.subr.bf16.mxu0 %v395
  %640 = vmatpush1.bf16.msra.mxu0 %v394
  %641 = vmatprep.subr.bf16.mxu0 %v387
  %642 = vmatpush1.bf16.msra.mxu0 %v386
  %643 = vmatprep.subr.bf16.mxu0 %v379
  %644 = vmatpush1.bf16.msra.mxu0 %v378
  %645 = vmatprep.subr.bf16.mxu0 %v371
  %646 = vmatpush1.bf16.msra.mxu0 %v370
  %647 = vmatprep.subr.bf16.mxu0 %v363
  %648 = vmatpush1.bf16.msra.mxu0 %v362
  %649 = vmatprep.subr.bf16.mxu0 %v355
  %650 = vmatpush1.bf16.msra.mxu0 %v354
  %651 = vmatprep.subr.bf16.mxu0 %v347
  %652 = vmatpush1.bf16.msra.mxu0 %v346
  %653 = vmatprep.subr.bf16.mxu0 %v339
  %654 = vmatpush1.bf16.msra.mxu0 %v338
  %655 = vmatprep.subr.bf16.mxu0 0
  %656 = vmatpush2.bf16.msra.mxu0 0
  %657 = vmatprep.subr.bf16.mxu0 0
  %658 = vmatpush2.bf16.msra.mxu0 0
  %659 = vmatprep.subr.bf16.mxu0 0
  %660 = vmatpush2.bf16.msra.mxu0 0
  %661 = vmatprep.subr.bf16.mxu0 0
  %662 = vmatpush2.bf16.msra.mxu0 0
  %663 = vmatprep.subr.bf16.mxu0 0
  %664 = vmatpush2.bf16.msra.mxu0 0
  %665 = vmatprep.subr.bf16.mxu0 0
  %666 = vmatpush2.bf16.msra.mxu0 0
  %667 = vmatprep.subr.bf16.mxu0 %v514
  %668 = vmatpush2.bf16.msra.mxu0 %v511
  %669 = vmatprep.subr.bf16.mxu0 %v403
  %670 = vmatpush2.bf16.msra.mxu0 %v402
  %671 = vmatprep.mubr.bf16.mxu0 %v486
  %672 = vmatmul.mubr.bf16.gmra.mxu0 %v101
  %v673 = vpop.f32.mrf.mxu0
  %v674 = vadd.f32 %v96, %v673
  %v675 = vpop.f32.mrf.mxu0
  %v676 = vadd.f32 %v96, %v675
  %v677 = vpop.f32.mrf.mxu0
  %v678 = vpop.f32.mrf.mxu0
  %679 = vdwg.mxu0
  %v680 = vmax.f32 %v551, 0.0
  %v681 = vmax.f32 %v553, 0.0
  %v682 = vmax.f32 %v592, 0.0
  %v683 = vmax.f32 %v594, 0.0
  %v684 = vmax.f32 %v633, 0.0
  %v685 = vmax.f32 %v635, 0.0
  %v686 = vmax.f32 %v674, 0.0
  %v687 = vmax.f32 %v676, 0.0
  %v688 = vpack.c.bf16 %v680, %v680
  %v689 = vpack.c.bf16 %v681, %v681
  %v690 = vpack.c.bf16 %v682, %v682
  %v691 = vpack.c.bf16 %v683, %v683
  %v692 = vpack.c.bf16 %v684, %v684
  %v693 = vpack.c.bf16 %v685, %v685
  %v694 = vpack.c.bf16 %v686, %v686
  %v695 = vpack.c.bf16 %v687, %v687
  %v704 = vunpack.c.l.b16 %v688
  %v705 = vunpack.c.l.b16 %v689
  %v706 = vunpack.c.l.b16 %v690
  %v707 = vunpack.c.l.b16 %v691
  %v708 = vunpack.c.l.b16 %v692
  %v709 = vunpack.c.l.b16 %v693
  %v710 = vunpack.c.l.b16 %v694
  %v711 = vunpack.c.l.b16 %v695
  %v712 = vpack.c.b16 %v705, %v704
  %v713 = vpack.c.b16 %v707, %v706
  %v714 = vpack.c.b16 %v709, %v708
  %v715 = vpack.c.b16 %v711, %v710
  %720 = vst [vmem:[%s3] sm:$0xff] %v712
  %721 = vst [vmem:[%s3 + $0x8] sm:$0xff] %v713
  %722 = vst [vmem:[%s3 + $0x10] sm:$0xff] %v714
  %723 = vst [vmem:[%s3 + $0x18] sm:$0xff] %v715
  // Predicated region
  $region14: #{_lambda_.6} parent=0 // pred_check
    _
  $region15: #{_lambda_.6} parent=0 // pred_check_branch
    %725 = sbr.rel (0) target = $region17
  $region16: #{_lambda_.6} parent=0 // pred_region
    _
  $region17: #{_lambda_.6} parent=0 // pred_fallthru
    _
  // Predicated region
  $region18: #{_lambda_.6} parent=0 // pred_check
    _
  $region19: #{_lambda_.6} parent=0 // pred_check_branch
    %727 = sbr.rel (0) target = $region21
  $region20: #{_lambda_.6} parent=0 // pred_region
    _
  $region21: #{_lambda_.6} parent=0 // pred_fallthru
    _

// kernel: _lambda_.7
$region0: #{_lambda_.7}
  #allocation0 [shape = 'u32[]', space=smem, size = 0x4, offset = 0x4, fixed_abs, tag = 'smem constant byte address 0x4 - core index']
  #allocation1 [shape = 'u32[144,128]{1,0:T(1,128)}', space=vmem, size = 0x12000, scoped, tag = 'internal scratch']
  %s0 = inlined_call_operand.vmem [shape: bf16[16,72], index: 0, kind: input, shape index: {}]
  %s1 = inlined_call_operand.vmem [shape: bf16[72,256], index: 1, kind: input, shape index: {}]
  %s2 = inlined_call_operand.vmem [shape: f32[16,1], index: 2, kind: input, shape index: {}]
  %s3 = inlined_call_operand.vmem [shape: bf16[16,256], index: 3, kind: output, shape index: {}]
  %s4 = sld [smem:[#allocation0]]
  $region22: #{_lambda_.7} parent=0
    _
  %s6 = ssub.s32 1, %s4
  %s7 = scalar_select 0, %s6, %s4
  // Predicated region
  $region2: #{_lambda_.7} parent=0 // pred_check
    _
  $region3: #{_lambda_.7} parent=0 // pred_check_branch
    %9 = sbr.rel (0) target = $region5
  $region4: #{_lambda_.7} parent=0 // pred_region
    _
  $region5: #{_lambda_.7} parent=0 // pred_fallthru
    _
  // Predicated region
  $region6: #{_lambda_.7} parent=0 // pred_check
    _
  $region7: #{_lambda_.7} parent=0 // pred_check_branch
    %11 = sbr.rel (0) target = $region9
  $region8: #{_lambda_.7} parent=0 // pred_region
    _
  $region9: #{_lambda_.7} parent=0 // pred_fallthru
    _
  // Predicated region
  $region10: #{_lambda_.7} parent=0 // pred_check
    _
  $region11: #{_lambda_.7} parent=0 // pred_check_branch
    %13 = sbr.rel (0) target = $region13
  $region12: #{_lambda_.7} parent=0 // pred_region
    _
  $region13: #{_lambda_.7} parent=0 // pred_fallthru
    _
  %v15 = vld [vmem:[%s0] sm:$0xf]
  %v16 = vld [vmem:[%s0 + $0x4] sm:$0xf]
  %v17 = vld [vmem:[%s1] sm:$0xff]
  %v18 = vld [vmem:[%s1 + $0x8] sm:$0xff]
  %v19 = vld [vmem:[%s1 + $0x10] sm:$0xff]
  %v20 = vld [vmem:[%s1 + $0x18] sm:$0xff]
  %v21 = vld [vmem:[%s1 + $0x20] sm:$0xff]
  %v22 = vld [vmem:[%s1 + $0x28] sm:$0xff]
  %v23 = vld [vmem:[%s1 + $0x30] sm:$0xff]
  %v24 = vld [vmem:[%s1 + $0x38] sm:$0xff]
  %v25 = vld [vmem:[%s1 + $0x40] sm:$0xff]
  %v26 = vld [vmem:[%s2] sm:$0xff]
  %v27 = vld [vmem:[%s2 + $0x8] sm:$0xff]
  %29 = vset.pattern.permute.xlu0 0
  %30 = vperm.xlu0 %29, %v26
  %v31 = vpop.permute.xlu0 %30
  %34 = vset.pattern.permute.xlu0 0
  %35 = vperm.xlu0 %34, %v27
  %v36 = vpop.permute.xlu0 %35
  %v40 = vunpack.c.l.b16 %v15
  %v41 = vunpack.c.l.b16 %v16
  %v42 = vpack.c.b16 %v41, %v40
  %v52 = vunpack.c.l.b16 %v17
  %v53 = vunpack.c.h.b16 %v17
  %v54 = vunpack.c.l.b16 %v18
  %v55 = vunpack.c.h.b16 %v18
  %v56 = vunpack.c.l.b16 %v19
  %v57 = vunpack.c.h.b16 %v19
  %v58 = vunpack.c.l.b16 %v20
  %v59 = vunpack.c.h.b16 %v20
  %v60 = vunpack.c.l.b16 %v21
  %v61 = vunpack.c.h.b16 %v21
  %v62 = vunpack.c.l.b16 %v22
  %v63 = vunpack.c.h.b16 %v22
  %v64 = vunpack.c.l.b16 %v23
  %v65 = vunpack.c.h.b16 %v23
  %v66 = vunpack.c.l.b16 %v24
  %v67 = vunpack.c.h.b16 %v24
  %v68 = vunpack.c.l.b16 %v25
  %v69 = vunpack.c.h.b16 %v25
  %v70 = vpack.c.b16 %v54, %v52
  %v71 = vpack.c.b16 %v55, %v53
  %v72 = vpack.c.b16 %v58, %v56
  %v73 = vpack.c.b16 %v59, %v57
  %v74 = vpack.c.b16 %v62, %v60
  %v75 = vpack.c.b16 %v63, %v61
  %v76 = vpack.c.b16 %v66, %v64
  %v77 = vpack.c.b16 %v67, %v65
  %v78 = vpack.c.b16 %v68, %v68
  %v79 = vpack.c.b16 %v69, %v69
  %vm88 = vcmask 588800
  %v90 = vsel %vm88, %v42, 0
  %vm92 = vcmask 1043456
  %v94 = vsel %vm92, %v78, 0
  %v97 = vsel %vm92, %v79, 0
  %99 = vmatprep.subr.bf16.mxu0 0
  %100 = vmatpush1.bf16.msra.mxu0 0
  %101 = vmatprep.subr.bf16.mxu0 0
  %102 = vmatpush1.bf16.msra.mxu0 0
  %103 = vmatprep.subr.bf16.mxu0 0
  %104 = vmatpush1.bf16.msra.mxu0 0
  %105 = vmatprep.subr.bf16.mxu0 %v97
  %106 = vmatpush1.bf16.msra.mxu0 %v94
  %107 = vmatprep.subr.bf16.mxu0 %v77
  %108 = vmatpush1.bf16.msra.mxu0 %v76
  %109 = vmatprep.subr.bf16.mxu0 %v75
  %110 = vmatpush1.bf16.msra.mxu0 %v74
  %111 = vmatprep.subr.bf16.mxu0 %v73
  %112 = vmatpush1.bf16.msra.mxu0 %v72
  %113 = vmatprep.subr.bf16.mxu0 %v71
  %114 = vmatpush1.bf16.msra.mxu0 %v70
  %115 = vmatprep.subr.bf16.mxu0 0
  %116 = vmatpush2.bf16.msra.mxu0 0
  %117 = vmatprep.subr.bf16.mxu0 0
  %118 = vmatpush2.bf16.msra.mxu0 0
  %119 = vmatprep.subr.bf16.mxu0 0
  %120 = vmatpush2.bf16.msra.mxu0 0
  %121 = vmatprep.subr.bf16.mxu0 0
  %122 = vmatpush2.bf16.msra.mxu0 0
  %123 = vmatprep.subr.bf16.mxu0 0
  %124 = vmatpush2.bf16.msra.mxu0 0
  %125 = vmatprep.subr.bf16.mxu0 0
  %126 = vmatpush2.bf16.msra.mxu0 0
  %127 = vmatprep.subr.bf16.mxu0 0
  %128 = vmatpush2.bf16.msra.mxu0 0
  %129 = vmatprep.subr.bf16.mxu0 0
  %130 = vmatpush2.bf16.msra.mxu0 0
  %131 = vmatprep.mubr.bf16.mxu0 0
  %132 = vmatmul.mubr.bf16.gmra.mxu0 %v90
  %v133 = vpop.f32.mrf.mxu0
  %v134 = vadd.f32 %v31, %v133
  %v135 = vpop.f32.mrf.mxu0
  %v136 = vadd.f32 %v31, %v135
  %v137 = vpop.f32.mrf.mxu0
  %v138 = vadd.f32 %v36, %v137
  %v139 = vpop.f32.mrf.mxu0
  %v140 = vadd.f32 %v36, %v139
  %141 = vdwg.mxu0
  %v142 = vmax.f32 %v134, 0.0
  %v143 = vmax.f32 %v136, 0.0
  %v144 = vmax.f32 %v138, 0.0
  %v145 = vmax.f32 %v140, 0.0
  %v146 = vpack.c.bf16 %v144, %v142
  %v147 = vpack.c.bf16 %v145, %v143
  %v150 = vunpack.c.l.b16 %v146
  %v151 = vunpack.c.l.b16 %v147
  %v152 = vunpack.c.h.b16 %v146
  %v153 = vunpack.c.h.b16 %v147
  %v154 = vpack.c.b16 %v151, %v150
  %v155 = vpack.c.b16 %v153, %v152
  %158 = vst [vmem:[%s3] sm:$0xff] %v154
  %159 = vst [vmem:[%s3 + $0x8] sm:$0xff] %v155
  // Predicated region
  $region14: #{_lambda_.7} parent=0 // pred_check
    _
  $region15: #{_lambda_.7} parent=0 // pred_check_branch
    %161 = sbr.rel (0) target = $region17
  $region16: #{_lambda_.7} parent=0 // pred_region
    _
  $region17: #{_lambda_.7} parent=0 // pred_fallthru
    _
  // Predicated region
  $region18: #{_lambda_.7} parent=0 // pred_check
    _
  $region19: #{_lambda_.7} parent=0 // pred_check_branch
    %163 = sbr.rel (0) target = $region21
  $region20: #{_lambda_.7} parent=0 // pred_region
    _
  $region21: #{_lambda_.7} parent=0 // pred_fallthru
    _

// kernel: _lambda_.8
$region0: #{_lambda_.8}
  #allocation0 [shape = 'u32[]', space=smem, size = 0x4, offset = 0x4, fixed_abs, tag = 'smem constant byte address 0x4 - core index']
  #allocation1 [shape = 'u32[144,128]{1,0:T(1,128)}', space=vmem, size = 0x12000, scoped, tag = 'internal scratch']
  %s0 = inlined_call_operand.vmem [shape: bf16[32,144], index: 0, kind: input, shape index: {}]
  %s1 = inlined_call_operand.vmem [shape: bf16[144,64], index: 1, kind: input, shape index: {}]
  %s2 = inlined_call_operand.vmem [shape: f32[32,1], index: 2, kind: input, shape index: {}]
  %s3 = inlined_call_operand.vmem [shape: bf16[32,64], index: 3, kind: output, shape index: {}]
  %s4 = sld [smem:[#allocation0]]
  $region22: #{_lambda_.8} parent=0
    _
  %s6 = ssub.s32 1, %s4
  %s7 = scalar_select 0, %s6, %s4
  // Predicated region
  $region2: #{_lambda_.8} parent=0 // pred_check
    _
  $region3: #{_lambda_.8} parent=0 // pred_check_branch
    %9 = sbr.rel (0) target = $region5
  $region4: #{_lambda_.8} parent=0 // pred_region
    _
  $region5: #{_lambda_.8} parent=0 // pred_fallthru
    _
  // Predicated region
  $region6: #{_lambda_.8} parent=0 // pred_check
    _
  $region7: #{_lambda_.8} parent=0 // pred_check_branch
    %11 = sbr.rel (0) target = $region9
  $region8: #{_lambda_.8} parent=0 // pred_region
    _
  $region9: #{_lambda_.8} parent=0 // pred_fallthru
    _
  // Predicated region
  $region10: #{_lambda_.8} parent=0 // pred_check
    _
  $region11: #{_lambda_.8} parent=0 // pred_check_branch
    %13 = sbr.rel (0) target = $region13
  $region12: #{_lambda_.8} parent=0 // pred_region
    _
  $region13: #{_lambda_.8} parent=0 // pred_fallthru
    _
  %v15 = vld [vmem:[%s0] sm:$0xff]
  %v16 = vld [vmem:[%s0 + $0x8] sm:$0xff]
  %v17 = vld [vmem:[%s0 + $0x10] sm:$0xff]
  %v18 = vld [vmem:[%s0 + $0x18] sm:$0xff]
  %v19 = vld [vmem:[%s1] sm:$0xf]
  %v20 = vld [vmem:[%s1 + $0x4] sm:$0xf]
  %v21 = vld [vmem:[%s1 + $0x8] sm:$0xf]
  %v22 = vld [vmem:[%s1 + $0xc] sm:$0xf]
  %v23 = vld [vmem:[%s1 + $0x10] sm:$0xf]
  %v24 = vld [vmem:[%s1 + $0x14] sm:$0xf]
  %v25 = vld [vmem:[%s1 + $0x18] sm:$0xf]
  %v26 = vld [vmem:[%s1 + $0x1c] sm:$0xf]
  %v27 = vld [vmem:[%s1 + $0x20] sm:$0xf]
  %v28 = vld [vmem:[%s1 + $0x24] sm:$0xf]
  %v29 = vld [vmem:[%s1 + $0x28] sm:$0xf]
  %v30 = vld [vmem:[%s1 + $0x2c] sm:$0xf]
  %v31 = vld [vmem:[%s1 + $0x30] sm:$0xf]
  %v32 = vld [vmem:[%s1 + $0x34] sm:$0xf]
  %v33 = vld [vmem:[%s1 + $0x38] sm:$0xf]
  %v34 = vld [vmem:[%s1 + $0x3c] sm:$0xf]
  %v35 = vld [vmem:[%s1 + $0x40] sm:$0xf]
  %v36 = vld [vmem:[%s1 + $0x44] sm:$0xf]
  %v37 = vld [vmem:[%s2] sm:$0xff]
  %v38 = vld [vmem:[%s2 + $0x8] sm:$0xff]
  %v39 = vld [vmem:[%s2 + $0x10] sm:$0xff]
  %v40 = vld [vmem:[%s2 + $0x18] sm:$0xff]
  %42 = vset.pattern.permute.xlu0 0
  %43 = vperm.xlu0 %42, %v37
  %v44 = vpop.permute.xlu0 %43
  %47 = vset.pattern.permute.xlu0 0
  %48 = vperm.xlu0 %47, %v38
  %v49 = vpop.permute.xlu0 %48
  %52 = vset.pattern.permute.xlu0 0
  %53 = vperm.xlu0 %52, %v39
  %v54 = vpop.permute.xlu0 %53
  %57 = vset.pattern.permute.xlu0 0
  %58 = vperm.xlu0 %57, %v40
  %v59 = vpop.permute.xlu0 %58
  %v65 = vunpack.c.l.b16 %v15
  %v66 = vunpack.c.h.b16 %v15
  %v67 = vunpack.c.l.b16 %v16
  %v68 = vunpack.c.h.b16 %v16
  %v69 = vunpack.c.l.b16 %v17
  %v70 = vunpack.c.h.b16 %v17
  %v71 = vunpack.c.l.b16 %v18
  %v72 = vunpack.c.h.b16 %v18
  %v73 = vpack.c.b16 %v67, %v65
  %v74 = vpack.c.b16 %v68, %v66
  %v75 = vpack.c.b16 %v71, %v69
  %v76 = vpack.c.b16 %v72, %v70
  %v97 = vunpack.c.l.b16 %v19
  %v98 = vunpack.c.l.b16 %v20
  %v99 = vunpack.c.l.b16 %v21
  %v100 = vunpack.c.l.b16 %v22
  %v101 = vunpack.c.l.b16 %v23
  %v102 = vunpack.c.l.b16 %v24
  %v103 = vunpack.c.l.b16 %v25
  %v104 = vunpack.c.l.b16 %v26
  %v105 = vunpack.c.l.b16 %v27
  %v106 = vunpack.c.l.b16 %v28
  %v107 = vunpack.c.l.b16 %v29
  %v108 = vunpack.c.l.b16 %v30
  %v109 = vunpack.c.l.b16 %v31
  %v110 = vunpack.c.l.b16 %v32
  %v111 = vunpack.c.l.b16 %v33
  %v112 = vunpack.c.l.b16 %v34
  %v113 = vunpack.c.l.b16 %v35
  %v114 = vunpack.c.l.b16 %v36
  %v115 = vpack.c.b16 %v98, %v97
  %v116 = vpack.c.b16 %v100, %v99
  %v117 = vpack.c.b16 %v102, %v101
  %v118 = vpack.c.b16 %v104, %v103
  %v119 = vpack.c.b16 %v106, %v105
  %v120 = vpack.c.b16 %v108, %v107
  %v121 = vpack.c.b16 %v110, %v109
  %v122 = vpack.c.b16 %v112, %v111
  %v123 = vpack.c.b16 %v114, %v113
  %vm133 = vcmask 130048
  %v135 = vsel %vm133, %v74, 0
  %v138 = vsel %vm133, %v76, 0
  %140 = vmatprep.subr.bf16.mxu0 0
  %141 = vmatpush1.bf16.msra.mxu0 %v122
  %142 = vmatprep.subr.bf16.mxu0 0
  %143 = vmatpush1.bf16.msra.mxu0 %v121
  %144 = vmatprep.subr.bf16.mxu0 0
  %145 = vmatpush1.bf16.msra.mxu0 %v120
  %146 = vmatprep.subr.bf16.mxu0 0
  %147 = vmatpush1.bf16.msra.mxu0 %v119
  %148 = vmatprep.subr.bf16.mxu0 0
  %149 = vmatpush1.bf16.msra.mxu0 %v118
  %150 = vmatprep.subr.bf16.mxu0 0
  %151 = vmatpush1.bf16.msra.mxu0 %v117
  %152 = vmatprep.subr.bf16.mxu0 0
  %153 = vmatpush1.bf16.msra.mxu0 %v116
  %154 = vmatprep.subr.bf16.mxu0 0
  %155 = vmatpush1.bf16.msra.mxu0 %v115
  %156 = vmatprep.subr.bf16.mxu0 0
  %157 = vmatpush2.bf16.msra.mxu0 0
  %158 = vmatprep.subr.bf16.mxu0 0
  %159 = vmatpush2.bf16.msra.mxu0 0
  %160 = vmatprep.subr.bf16.mxu0 0
  %161 = vmatpush2.bf16.msra.mxu0 0
  %162 = vmatprep.subr.bf16.mxu0 0
  %163 = vmatpush2.bf16.msra.mxu0 0
  %164 = vmatprep.subr.bf16.mxu0 0
  %165 = vmatpush2.bf16.msra.mxu0 0
  %166 = vmatprep.subr.bf16.mxu0 0
  %167 = vmatpush2.bf16.msra.mxu0 0
  %168 = vmatprep.subr.bf16.mxu0 0
  %169 = vmatpush2.bf16.msra.mxu0 0
  %170 = vmatprep.subr.bf16.mxu0 0
  %171 = vmatpush2.bf16.msra.mxu0 %v123
  %172 = vmatprep.mubr.bf16.mxu0 %v135
  %173 = vmatmul.mubr.bf16.gmra.mxu0 %v73
  %v174 = vpop.f32.mrf.mxu0
  %v175 = vadd.f32 %v44, %v174
  %v176 = vpop.f32.mrf.mxu0
  %v177 = vpop.f32.mrf.mxu0
  %v178 = vadd.f32 %v49, %v177
  %v179 = vpop.f32.mrf.mxu0
  %180 = vmatprep.mubr.bf16.mxu0 %v138
  %181 = vmatmul.mubr.bf16.gmra.mxu0 %v75
  %v182 = vpop.f32.mrf.mxu0
  %v183 = vadd.f32 %v54, %v182
  %v184 = vpop.f32.mrf.mxu0
  %v185 = vpop.f32.mrf.mxu0
  %v186 = vadd.f32 %v59, %v185
  %v187 = vpop.f32.mrf.mxu0
  %188 = vdwg.mxu0
  %v189 = vmax.f32 %v175, 0.0
  %v190 = vmax.f32 %v178, 0.0
  %v191 = vmax.f32 %v183, 0.0
  %v192 = vmax.f32 %v186, 0.0
  %v193 = vpack.c.bf16 %v190, %v189
  %v194 = vpack.c.bf16 %v192, %v191
  %v197 = vunpack.c.l.b16 %v193
  %v198 = vunpack.c.h.b16 %v193
  %v199 = vunpack.c.l.b16 %v194
  %v200 = vunpack.c.h.b16 %v194
  %v201 = vpack.c.b16 %v197, %v197
  %v202 = vpack.c.b16 %v198, %v198
  %v203 = vpack.c.b16 %v199, %v199
  %v204 = vpack.c.b16 %v200, %v200
  %vm209 = vcmask 519168
  %210 = vst.msk [vmem:[%s3] sm:$0xf] %vm209, %v201
  %211 = vst.msk [vmem:[%s3 + $0x4] sm:$0xf] %vm209, %v202
  %212 = vst.msk [vmem:[%s3 + $0x8] sm:$0xf] %vm209, %v203
  %213 = vst.msk [vmem:[%s3 + $0xc] sm:$0xf] %vm209, %v204
  // Predicated region
  $region14: #{_lambda_.8} parent=0 // pred_check
    _
  $region15: #{_lambda_.8} parent=0 // pred_check_branch
    %215 = sbr.rel (0) target = $region17
  $region16: #{_lambda_.8} parent=0 // pred_region
    _
  $region17: #{_lambda_.8} parent=0 // pred_fallthru
    _
  // Predicated region
  $region18: #{_lambda_.8} parent=0 // pred_check
    _
  $region19: #{_lambda_.8} parent=0 // pred_check_branch
    %217 = sbr.rel (0) target = $region21
  $region20: #{_lambda_.8} parent=0 // pred_region
    _
  $region21: #{_lambda_.8} parent=0 // pred_fallthru
    _

// kernel: _lambda_.9
$region0: #{_lambda_.9}
  #allocation0 [shape = 'u32[]', space=smem, size = 0x4, offset = 0x4, fixed_abs, tag = 'smem constant byte address 0x4 - core index']
  #allocation1 [shape = 'u32[144,128]{1,0:T(1,128)}', space=vmem, size = 0x12000, scoped, tag = 'internal scratch']
  %s0 = inlined_call_operand.vmem [shape: bf16[16,432], index: 0, kind: input, shape index: {}]
  %s1 = inlined_call_operand.vmem [shape: bf16[432,256], index: 1, kind: input, shape index: {}]
  %s2 = inlined_call_operand.vmem [shape: f32[16,1], index: 2, kind: input, shape index: {}]
  %s3 = inlined_call_operand.vmem [shape: bf16[16,256], index: 3, kind: output, shape index: {}]
  %s4 = sld [smem:[#allocation0]]
  $region22: #{_lambda_.9} parent=0
    _
  %s6 = ssub.s32 1, %s4
  %s7 = scalar_select 0, %s6, %s4
  // Predicated region
  $region2: #{_lambda_.9} parent=0 // pred_check
    _
  $region3: #{_lambda_.9} parent=0 // pred_check_branch
    %9 = sbr.rel (0) target = $region5
  $region4: #{_lambda_.9} parent=0 // pred_region
    _
  $region5: #{_lambda_.9} parent=0 // pred_fallthru
    _
  // Predicated region
  $region6: #{_lambda_.9} parent=0 // pred_check
    _
  $region7: #{_lambda_.9} parent=0 // pred_check_branch
    %11 = sbr.rel (0) target = $region9
  $region8: #{_lambda_.9} parent=0 // pred_region
    _
  $region9: #{_lambda_.9} parent=0 // pred_fallthru
    _
  // Predicated region
  $region10: #{_lambda_.9} parent=0 // pred_check
    _
  $region11: #{_lambda_.9} parent=0 // pred_check_branch
    %13 = sbr.rel (0) target = $region13
  $region12: #{_lambda_.9} parent=0 // pred_region
    _
  $region13: #{_lambda_.9} parent=0 // pred_fallthru
    _
  %v15 = vld [vmem:[%s0] sm:$0xff]
  %v16 = vld [vmem:[%s0 + $0x8] sm:$0xff]
  %v17 = vld [vmem:[%s0 + $0x10] sm:$0xff]
  %v18 = vld [vmem:[%s0 + $0x18] sm:$0xff]
  %v19 = vld [vmem:[%s1] sm:$0xff]
  %v20 = vld [vmem:[%s1 + $0x8] sm:$0xff]
  %v21 = vld [vmem:[%s1 + $0x10] sm:$0xff]
  %v22 = vld [vmem:[%s1 + $0x18] sm:$0xff]
  %v23 = vld [vmem:[%s1 + $0x20] sm:$0xff]
  %v24 = vld [vmem:[%s1 + $0x28] sm:$0xff]
  %v25 = vld [vmem:[%s1 + $0x30] sm:$0xff]
  %v26 = vld [vmem:[%s1 + $0x38] sm:$0xff]
  %v27 = vld [vmem:[%s1 + $0x40] sm:$0xff]
  %v28 = vld [vmem:[%s1 + $0x48] sm:$0xff]
  %v29 = vld [vmem:[%s1 + $0x50] sm:$0xff]
  %v30 = vld [vmem:[%s1 + $0x58] sm:$0xff]
  %v31 = vld [vmem:[%s1 + $0x60] sm:$0xff]
  %v32 = vld [vmem:[%s1 + $0x68] sm:$0xff]
  %v33 = vld [vmem:[%s1 + $0x70] sm:$0xff]
  %v34 = vld [vmem:[%s1 + $0x78] sm:$0xff]
  %v35 = vld [vmem:[%s1 + $0x80] sm:$0xff]
  %v36 = vld [vmem:[%s1 + $0x88] sm:$0xff]
  %v37 = vld [vmem:[%s1 + $0x90] sm:$0xff]
  %v38 = vld [vmem:[%s1 + $0x98] sm:$0xff]
  %v39 = vld [vmem:[%s1 + $0xa0] sm:$0xff]
  %v40 = vld [vmem:[%s1 + $0xa8] sm:$0xff]
  %v41 = vld [vmem:[%s1 + $0xb0] sm:$0xff]
  %v42 = vld [vmem:[%s1 + $0xb8] sm:$0xff]
  %v43 = vld [vmem:[%s1 + $0xc0] sm:$0xff]
  %v44 = vld [vmem:[%s1 + $0xc8] sm:$0xff]
  %v45 = vld [vmem:[%s1 + $0xd0] sm:$0xff]
  %v46 = vld [vmem:[%s1 + $0xd8] sm:$0xff]
  %v47 = vld [vmem:[%s1 + $0xe0] sm:$0xff]
  %v48 = vld [vmem:[%s1 + $0xe8] sm:$0xff]
  %v49 = vld [vmem:[%s1 + $0xf0] sm:$0xff]
  %v50 = vld [vmem:[%s1 + $0xf8] sm:$0xff]
  %v51 = vld [vmem:[%s1 + $0x100] sm:$0xff]
  %v52 = vld [vmem:[%s1 + $0x108] sm:$0xff]
  %v53 = vld [vmem:[%s1 + $0x110] sm:$0xff]
  %v54 = vld [vmem:[%s1 + $0x118] sm:$0xff]
  %v55 = vld [vmem:[%s1 + $0x120] sm:$0xff]
  %v56 = vld [vmem:[%s1 + $0x128] sm:$0xff]
  %v57 = vld [vmem:[%s1 + $0x130] sm:$0xff]
  %v58 = vld [vmem:[%s1 + $0x138] sm:$0xff]
  %v59 = vld [vmem:[%s1 + $0x140] sm:$0xff]
  %v60 = vld [vmem:[%s1 + $0x148] sm:$0xff]
  %v61 = vld [vmem:[%s1 + $0x150] sm:$0xff]
  %v62 = vld [vmem:[%s1 + $0x158] sm:$0xff]
  %v63 = vld [vmem:[%s1 + $0x160] sm:$0xff]
  %v64 = vld [vmem:[%s1 + $0x168] sm:$0xff]
  %v65 = vld [vmem:[%s1 + $0x170] sm:$0xff]
  %v66 = vld [vmem:[%s1 + $0x178] sm:$0xff]
  %v67 = vld [vmem:[%s1 + $0x180] sm:$0xff]
  %v68 = vld [vmem:[%s1 + $0x188] sm:$0xff]
  %v69 = vld [vmem:[%s1 + $0x190] sm:$0xff]
  %v70 = vld [vmem:[%s1 + $0x198] sm:$0xff]
  %v71 = vld [vmem:[%s1 + $0x1a0] sm:$0xff]
  %v72 = vld [vmem:[%s1 + $0x1a8] sm:$0xff]
  %v73 = vld [vmem:[%s2] sm:$0xff]
  %v74 = vld [vmem:[%s2 + $0x8] sm:$0xff]
  %76 = vset.pattern.permute.xlu0 0
  %77 = vperm.xlu0 %76, %v73
  %v78 = vpop.permute.xlu0 %77
  %81 = vset.pattern.permute.xlu0 0
  %82 = vperm.xlu0 %81, %v74
  %v83 = vpop.permute.xlu0 %82
  %v89 = vunpack.c.l.b16 %v15
  %v90 = vunpack.c.h.b16 %v15
  %v91 = vunpack.c.l.b16 %v16
  %v92 = vunpack.c.h.b16 %v16
  %v93 = vunpack.c.l.b16 %v17
  %v94 = vunpack.c.h.b16 %v17
  %v95 = vunpack.c.l.b16 %v18
  %v96 = vunpack.c.h.b16 %v18
  %v97 = vpack.c.b16 %v93, %v89
  %v98 = vpack.c.b16 %v94, %v90
  %v99 = vpack.c.b16 %v95, %v91
  %v100 = vpack.c.b16 %v96, %v92
  %v158 = vunpack.c.l.b16 %v19
  %v159 = vunpack.c.h.b16 %v19
  %v160 = vunpack.c.l.b16 %v20
  %v161 = vunpack.c.h.b16 %v20
  %v162 = vunpack.c.l.b16 %v21
  %v163 = vunpack.c.h.b16 %v21
  %v164 = vunpack.c.l.b16 %v22
  %v165 = vunpack.c.h.b16 %v22
  %v166 = vunpack.c.l.b16 %v23
  %v167 = vunpack.c.h.b16 %v23
  %v168 = vunpack.c.l.b16 %v24
  %v169 = vunpack.c.h.b16 %v24
  %v170 = vunpack.c.l.b16 %v25
  %v171 = vunpack.c.h.b16 %v25
  %v172 = vunpack.c.l.b16 %v26
  %v173 = vunpack.c.h.b16 %v26
  %v174 = vunpack.c.l.b16 %v27
  %v175 = vunpack.c.h.b16 %v27
  %v176 = vunpack.c.l.b16 %v28
  %v177 = vunpack.c.h.b16 %v28
  %v178 = vunpack.c.l.b16 %v29
  %v179 = vunpack.c.h.b16 %v29
  %v180 = vunpack.c.l.b16 %v30
  %v181 = vunpack.c.h.b16 %v30
  %v182 = vunpack.c.l.b16 %v31
  %v183 = vunpack.c.h.b16 %v31
  %v184 = vunpack.c.l.b16 %v32
  %v185 = vunpack.c.h.b16 %v32
  %v186 = vunpack.c.l.b16 %v33
  %v187 = vunpack.c.h.b16 %v33
  %v188 = vunpack.c.l.b16 %v34
  %v189 = vunpack.c.h.b16 %v34
  %v190 = vunpack.c.l.b16 %v35
  %v191 = vunpack.c.h.b16 %v35
  %v192 = vunpack.c.l.b16 %v36
  %v193 = vunpack.c.h.b16 %v36
  %v194 = vunpack.c.l.b16 %v37
  %v195 = vunpack.c.h.b16 %v37
  %v196 = vunpack.c.l.b16 %v38
  %v197 = vunpack.c.h.b16 %v38
  %v198 = vunpack.c.l.b16 %v39
  %v199 = vunpack.c.h.b16 %v39
  %v200 = vunpack.c.l.b16 %v40
  %v201 = vunpack.c.h.b16 %v40
  %v202 = vunpack.c.l.b16 %v41
  %v203 = vunpack.c.h.b16 %v41
  %v204 = vunpack.c.l.b16 %v42
  %v205 = vunpack.c.h.b16 %v42
  %v206 = vunpack.c.l.b16 %v43
  %v207 = vunpack.c.h.b16 %v43
  %v208 = vunpack.c.l.b16 %v44
  %v209 = vunpack.c.h.b16 %v44
  %v210 = vunpack.c.l.b16 %v45
  %v211 = vunpack.c.h.b16 %v45
  %v212 = vunpack.c.l.b16 %v46
  %v213 = vunpack.c.h.b16 %v46
  %v214 = vunpack.c.l.b16 %v47
  %v215 = vunpack.c.h.b16 %v47
  %v216 = vunpack.c.l.b16 %v48
  %v217 = vunpack.c.h.b16 %v48
  %v218 = vunpack.c.l.b16 %v49
  %v219 = vunpack.c.h.b16 %v49
  %v220 = vunpack.c.l.b16 %v50
  %v221 = vunpack.c.h.b16 %v50
  %v222 = vunpack.c.l.b16 %v51
  %v223 = vunpack.c.h.b16 %v51
  %v224 = vunpack.c.l.b16 %v52
  %v225 = vunpack.c.h.b16 %v52
  %v226 = vunpack.c.l.b16 %v53
  %v227 = vunpack.c.h.b16 %v53
  %v228 = vunpack.c.l.b16 %v54
  %v229 = vunpack.c.h.b16 %v54
  %v230 = vunpack.c.l.b16 %v55
  %v231 = vunpack.c.h.b16 %v55
  %v232 = vunpack.c.l.b16 %v56
  %v233 = vunpack.c.h.b16 %v56
  %v234 = vunpack.c.l.b16 %v57
  %v235 = vunpack.c.h.b16 %v57
  %v236 = vunpack.c.l.b16 %v58
  %v237 = vunpack.c.h.b16 %v58
  %v238 = vunpack.c.l.b16 %v59
  %v239 = vunpack.c.h.b16 %v59
  %v240 = vunpack.c.l.b16 %v60
  %v241 = vunpack.c.h.b16 %v60
  %v242 = vunpack.c.l.b16 %v61
  %v243 = vunpack.c.h.b16 %v61
  %v244 = vunpack.c.l.b16 %v62
  %v245 = vunpack.c.h.b16 %v62
  %v246 = vunpack.c.l.b16 %v63
  %v247 = vunpack.c.h.b16 %v63
  %v248 = vunpack.c.l.b16 %v64
  %v249 = vunpack.c.h.b16 %v64
  %v250 = vunpack.c.l.b16 %v65
  %v251 = vunpack.c.h.b16 %v65
  %v252 = vunpack.c.l.b16 %v66
  %v253 = vunpack.c.h.b16 %v66
  %v254 = vunpack.c.l.b16 %v67
  %v255 = vunpack.c.h.b16 %v67
  %v256 = vunpack.c.l.b16 %v68
  %v257 = vunpack.c.h.b16 %v68
  %v258 = vunpack.c.l.b16 %v69
  %v259 = vunpack.c.h.b16 %v69
  %v260 = vunpack.c.l.b16 %v70
  %v261 = vunpack.c.h.b16 %v70
  %v262 = vunpack.c.l.b16 %v71
  %v263 = vunpack.c.h.b16 %v71
  %v264 = vunpack.c.l.b16 %v72
  %v265 = vunpack.c.h.b16 %v72
  %v266 = vpack.c.b16 %v160, %v158
  %v267 = vpack.c.b16 %v161, %v159
  %v268 = vpack.c.b16 %v164, %v162
  %v269 = vpack.c.b16 %v165, %v163
  %v270 = vpack.c.b16 %v168, %v166
  %v271 = vpack.c.b16 %v169, %v167
  %v272 = vpack.c.b16 %v172, %v170
  %v273 = vpack.c.b16 %v173, %v171
  %v274 = vpack.c.b16 %v176, %v174
  %v275 = vpack.c.b16 %v177, %v175
  %v276 = vpack.c.b16 %v180, %v178
  %v277 = vpack.c.b16 %v181, %v179
  %v278 = vpack.c.b16 %v184, %v182
  %v279 = vpack.c.b16 %v185, %v183
  %v280 = vpack.c.b16 %v188, %v186
  %v281 = vpack.c.b16 %v189, %v187
  %v282 = vpack.c.b16 %v192, %v190
  %v283 = vpack.c.b16 %v193, %v191
  %v284 = vpack.c.b16 %v196, %v194
  %v285 = vpack.c.b16 %v197, %v195
  %v286 = vpack.c.b16 %v200, %v198
  %v287 = vpack.c.b16 %v201, %v199
  %v288 = vpack.c.b16 %v204, %v202
  %v289 = vpack.c.b16 %v205, %v203
  %v290 = vpack.c.b16 %v208, %v206
  %v291 = vpack.c.b16 %v209, %v207
  %v292 = vpack.c.b16 %v212, %v210
  %v293 = vpack.c.b16 %v213, %v211
  %v294 = vpack.c.b16 %v216, %v214
  %v295 = vpack.c.b16 %v217, %v215
  %v296 = vpack.c.b16 %v220, %v218
  %v297 = vpack.c.b16 %v221, %v219
  %v298 = vpack.c.b16 %v224, %v222
  %v299 = vpack.c.b16 %v225, %v223
  %v300 = vpack.c.b16 %v228, %v226
  %v301 = vpack.c.b16 %v229, %v227
  %v302 = vpack.c.b16 %v232, %v230
  %v303 = vpack.c.b16 %v233, %v231
  %v304 = vpack.c.b16 %v236, %v234
  %v305 = vpack.c.b16 %v237, %v235
  %v306 = vpack.c.b16 %v240, %v238
  %v307 = vpack.c.b16 %v241, %v239
  %v308 = vpack.c.b16 %v244, %v242
  %v309 = vpack.c.b16 %v245, %v243
  %v310 = vpack.c.b16 %v248, %v246
  %v311 = vpack.c.b16 %v249, %v247
  %v312 = vpack.c.b16 %v252, %v250
  %v313 = vpack.c.b16 %v253, %v251
  %v314 = vpack.c.b16 %v256, %v254
  %v315 = vpack.c.b16 %v257, %v255
  %v316 = vpack.c.b16 %v260, %v258
  %v317 = vpack.c.b16 %v261, %v259
  %v318 = vpack.c.b16 %v264, %v262
  %v319 = vpack.c.b16 %v265, %v263
  %vm374 = vcmask 392192
  %v376 = vsel %vm374, %v100, 0
  %378 = vmatprep.subr.bf16.mxu0 %v281
  %379 = vmatpush1.bf16.msra.mxu0 %v280
  %380 = vmatprep.subr.bf16.mxu0 %v279
  %381 = vmatpush1.bf16.msra.mxu0 %v278
  %382 = vmatprep.subr.bf16.mxu0 %v277
  %383 = vmatpush1.bf16.msra.mxu0 %v276
  %384 = vmatprep.subr.bf16.mxu0 %v275
  %385 = vmatpush1.bf16.msra.mxu0 %v274
  %386 = vmatprep.subr.bf16.mxu0 %v273
  %387 = vmatpush1.bf16.msra.mxu0 %v272
  %388 = vmatprep.subr.bf16.mxu0 %v271
  %389 = vmatpush1.bf16.msra.mxu0 %v270
  %390 = vmatprep.subr.bf16.mxu0 %v269
  %391 = vmatpush1.bf16.msra.mxu0 %v268
  %392 = vmatprep.subr.bf16.mxu0 %v267
  %393 = vmatpush1.bf16.msra.mxu0 %v266
  %394 = vmatprep.subr.bf16.mxu0 %v297
  %395 = vmatpush2.bf16.msra.mxu0 %v296
  %396 = vmatprep.subr.bf16.mxu0 %v295
  %397 = vmatpush2.bf16.msra.mxu0 %v294
  %398 = vmatprep.subr.bf16.mxu0 %v293
  %399 = vmatpush2.bf16.msra.mxu0 %v292
  %400 = vmatprep.subr.bf16.mxu0 %v291
  %401 = vmatpush2.bf16.msra.mxu0 %v290
  %402 = vmatprep.subr.bf16.mxu0 %v289
  %403 = vmatpush2.bf16.msra.mxu0 %v288
  %404 = vmatprep.subr.bf16.mxu0 %v287
  %405 = vmatpush2.bf16.msra.mxu0 %v286
  %406 = vmatprep.subr.bf16.mxu0 %v285
  %407 = vmatpush2.bf16.msra.mxu0 %v284
  %408 = vmatprep.subr.bf16.mxu0 %v283
  %409 = vmatpush2.bf16.msra.mxu0 %v282
  %410 = vmatprep.mubr.bf16.mxu0 %v98
  %411 = vmatmul.mubr.bf16.gmra.mxu0 %v97
  %v412 = vpop.f32.mrf.mxu0
  %v413 = vadd.f32 %v78, %v412
  %v414 = vpop.f32.mrf.mxu0
  %v415 = vadd.f32 %v78, %v414
  %v416 = vpop.f32.mrf.mxu0
  %v417 = vadd.f32 %v83, %v416
  %v418 = vpop.f32.mrf.mxu0
  %v419 = vadd.f32 %v83, %v418
  %420 = vdwg.mxu0
  %421 = vmatprep.subr.bf16.mxu0 %v313
  %422 = vmatpush1.bf16.msra.mxu0 %v312
  %423 = vmatprep.subr.bf16.mxu0 %v311
  %424 = vmatpush1.bf16.msra.mxu0 %v310
  %425 = vmatprep.subr.bf16.mxu0 %v309
  %426 = vmatpush1.bf16.msra.mxu0 %v308
  %427 = vmatprep.subr.bf16.mxu0 %v307
  %428 = vmatpush1.bf16.msra.mxu0 %v306
  %429 = vmatprep.subr.bf16.mxu0 %v305
  %430 = vmatpush1.bf16.msra.mxu0 %v304
  %431 = vmatprep.subr.bf16.mxu0 %v303
  %432 = vmatpush1.bf16.msra.mxu0 %v302
  %433 = vmatprep.subr.bf16.mxu0 %v301
  %434 = vmatpush1.bf16.msra.mxu0 %v300
  %435 = vmatprep.subr.bf16.mxu0 %v299
  %436 = vmatpush1.bf16.msra.mxu0 %v298
  %437 = vmatprep.subr.bf16.mxu0 0
  %438 = vmatpush2.bf16.msra.mxu0 0
  %439 = vmatprep.subr.bf16.mxu0 0
  %440 = vmatpush2.bf16.msra.mxu0 0
  %441 = vmatprep.subr.bf16.mxu0 0
  %442 = vmatpush2.bf16.msra.mxu0 0
  %443 = vmatprep.subr.bf16.mxu0 0
  %444 = vmatpush2.bf16.msra.mxu0 0
  %445 = vmatprep.subr.bf16.mxu0 0
  %446 = vmatpush2.bf16.msra.mxu0 0
  %447 = vmatprep.subr.bf16.mxu0 %v319
  %448 = vmatpush2.bf16.msra.mxu0 %v318
  %449 = vmatprep.subr.bf16.mxu0 %v317
  %450 = vmatpush2.bf16.msra.mxu0 %v316
  %451 = vmatprep.subr.bf16.mxu0 %v315
  %452 = vmatpush2.bf16.msra.mxu0 %v314
  %453 = vmatprep.mubr.bf16.mxu0 %v376
  %454 = vmatmul.mubr.bf16.gmra.mxu0 %v99
  %v455 = vpop.f32.mrf.mxu0
  %v456 = vadd.f32 %v413, %v455
  %v457 = vpop.f32.mrf.mxu0
  %v458 = vadd.f32 %v415, %v457
  %v459 = vpop.f32.mrf.mxu0
  %v460 = vadd.f32 %v417, %v459
  %v461 = vpop.f32.mrf.mxu0
  %v462 = vadd.f32 %v419, %v461
  %463 = vdwg.mxu0
  %v464 = vmax.f32 %v456, 0.0
  %v465 = vmax.f32 %v458, 0.0
  %v466 = vmax.f32 %v460, 0.0
  %v467 = vmax.f32 %v462, 0.0
  %v468 = vpack.c.bf16 %v466, %v464
  %v469 = vpack.c.bf16 %v467, %v465
  %v472 = vunpack.c.l.b16 %v468
  %v473 = vunpack.c.l.b16 %v469
  %v474 = vunpack.c.h.b16 %v468
  %v475 = vunpack.c.h.b16 %v469
  %v476 = vpack.c.b16 %v473, %v472
  %v477 = vpack.c.b16 %v475, %v474
  %480 = vst [vmem:[%s3] sm:$0xff] %v476
  %481 = vst [vmem:[%s3 + $0x8] sm:$0xff] %v477
  // Predicated region
  $region14: #{_lambda_.9} parent=0 // pred_check
    _
  $region15: #{_lambda_.9} parent=0 // pred_check_branch
    %483 = sbr.rel (0) target = $region17
  $region16: #{_lambda_.9} parent=0 // pred_region
    _
  $region17: #{_lambda_.9} parent=0 // pred_fallthru
    _
  // Predicated region
  $region18: #{_lambda_.9} parent=0 // pred_check
    _
  $region19: #{_lambda_.9} parent=0 // pred_check_branch
    %485 = sbr.rel (0) target = $region21
  $region20: #{_lambda_.9} parent=0 // pred_region
    _
  $region21: #{_lambda_.9} parent=0 // pred_fallthru
    _

// kernel: _lambda_.10
$region0: #{_lambda_.10}
  #allocation0 [shape = 'u32[]', space=smem, size = 0x4, offset = 0x4, fixed_abs, tag = 'smem constant byte address 0x4 - core index']
  #allocation1 [shape = 'u32[144,128]{1,0:T(1,128)}', space=vmem, size = 0x12000, scoped, tag = 'internal scratch']
  %s0 = inlined_call_operand.vmem [shape: bf16[8,216], index: 0, kind: input, shape index: {}]
  %s1 = inlined_call_operand.vmem [shape: bf16[216,1024], index: 1, kind: input, shape index: {}]
  %s2 = inlined_call_operand.vmem [shape: f32[8,1], index: 2, kind: input, shape index: {}]
  %s3 = inlined_call_operand.vmem [shape: bf16[8,1024], index: 3, kind: output, shape index: {}]
  %s4 = sld [smem:[#allocation0]]
  $region22: #{_lambda_.10} parent=0
    _
  %s6 = ssub.s32 1, %s4
  %s7 = scalar_select 0, %s6, %s4
  // Predicated region
  $region2: #{_lambda_.10} parent=0 // pred_check
    _
  $region3: #{_lambda_.10} parent=0 // pred_check_branch
    %9 = sbr.rel (0) target = $region5
  $region4: #{_lambda_.10} parent=0 // pred_region
    _
  $region5: #{_lambda_.10} parent=0 // pred_fallthru
    _
  // Predicated region
  $region6: #{_lambda_.10} parent=0 // pred_check
    _
  $region7: #{_lambda_.10} parent=0 // pred_check_branch
    %11 = sbr.rel (0) target = $region9
  $region8: #{_lambda_.10} parent=0 // pred_region
    _
  $region9: #{_lambda_.10} parent=0 // pred_fallthru
    _
  // Predicated region
  $region10: #{_lambda_.10} parent=0 // pred_check
    _
  $region11: #{_lambda_.10} parent=0 // pred_check_branch
    %13 = sbr.rel (0) target = $region13
  $region12: #{_lambda_.10} parent=0 // pred_region
    _
  $region13: #{_lambda_.10} parent=0 // pred_fallthru
    _
  %v15 = vld [vmem:[%s0] sm:$0xff]
  %v16 = vld [vmem:[%s1] sm:$0xff]
  %v17 = vld [vmem:[%s1 + $0x8] sm:$0xff]
  %v18 = vld [vmem:[%s1 + $0x10] sm:$0xff]
  %v19 = vld [vmem:[%s1 + $0x18] sm:$0xff]
  %v20 = vld [vmem:[%s1 + $0x20] sm:$0xff]
  %v21 = vld [vmem:[%s1 + $0x28] sm:$0xff]
  %v22 = vld [vmem:[%s1 + $0x30] sm:$0xff]
  %v23 = vld [vmem:[%s1 + $0x38] sm:$0xff]
  %v24 = vld [vmem:[%s1 + $0x40] sm:$0xff]
  %v25 = vld [vmem:[%s1 + $0x48] sm:$0xff]
  %v26 = vld [vmem:[%s1 + $0x50] sm:$0xff]
  %v27 = vld [vmem:[%s1 + $0x58] sm:$0xff]
  %v28 = vld [vmem:[%s1 + $0x60] sm:$0xff]
  %v29 = vld [vmem:[%s1 + $0x68] sm:$0xff]
  %v30 = vld [vmem:[%s1 + $0x70] sm:$0xff]
  %v31 = vld [vmem:[%s1 + $0x78] sm:$0xff]
  %v32 = vld [vmem:[%s1 + $0x80] sm:$0xff]
  %v33 = vld [vmem:[%s1 + $0x88] sm:$0xff]
  %v34 = vld [vmem:[%s1 + $0x90] sm:$0xff]
  %v35 = vld [vmem:[%s1 + $0x98] sm:$0xff]
  %v36 = vld [vmem:[%s1 + $0xa0] sm:$0xff]
  %v37 = vld [vmem:[%s1 + $0xa8] sm:$0xff]
  %v38 = vld [vmem:[%s1 + $0xb0] sm:$0xff]
  %v39 = vld [vmem:[%s1 + $0xb8] sm:$0xff]
  %v40 = vld [vmem:[%s1 + $0xc0] sm:$0xff]
  %v41 = vld [vmem:[%s1 + $0xc8] sm:$0xff]
  %v42 = vld [vmem:[%s1 + $0xd0] sm:$0xff]
  %v43 = vld [vmem:[%s1 + $0xd8] sm:$0xff]
  %v44 = vld [vmem:[%s1 + $0xe0] sm:$0xff]
  %v45 = vld [vmem:[%s1 + $0xe8] sm:$0xff]
  %v46 = vld [vmem:[%s1 + $0xf0] sm:$0xff]
  %v47 = vld [vmem:[%s1 + $0xf8] sm:$0xff]
  %v48 = vld [vmem:[%s1 + $0x100] sm:$0xff]
  %v49 = vld [vmem:[%s1 + $0x108] sm:$0xff]
  %v50 = vld [vmem:[%s1 + $0x110] sm:$0xff]
  %v51 = vld [vmem:[%s1 + $0x118] sm:$0xff]
  %v52 = vld [vmem:[%s1 + $0x120] sm:$0xff]
  %v53 = vld [vmem:[%s1 + $0x128] sm:$0xff]
  %v54 = vld [vmem:[%s1 + $0x130] sm:$0xff]
  %v55 = vld [vmem:[%s1 + $0x138] sm:$0xff]
  %v56 = vld [vmem:[%s1 + $0x140] sm:$0xff]
  %v57 = vld [vmem:[%s1 + $0x148] sm:$0xff]
  %v58 = vld [vmem:[%s1 + $0x150] sm:$0xff]
  %v59 = vld [vmem:[%s1 + $0x158] sm:$0xff]
  %v60 = vld [vmem:[%s1 + $0x160] sm:$0xff]
  %v61 = vld [vmem:[%s1 + $0x168] sm:$0xff]
  %v62 = vld [vmem:[%s1 + $0x170] sm:$0xff]
  %v63 = vld [vmem:[%s1 + $0x178] sm:$0xff]
  %v64 = vld [vmem:[%s1 + $0x180] sm:$0xff]
  %v65 = vld [vmem:[%s1 + $0x188] sm:$0xff]
  %v66 = vld [vmem:[%s1 + $0x190] sm:$0xff]
  %v67 = vld [vmem:[%s1 + $0x198] sm:$0xff]
  %v68 = vld [vmem:[%s1 + $0x1a0] sm:$0xff]
  %v69 = vld [vmem:[%s1 + $0x1a8] sm:$0xff]
  %v70 = vld [vmem:[%s1 + $0x1b0] sm:$0xff]
  %v71 = vld [vmem:[%s1 + $0x1b8] sm:$0xff]
  %v72 = vld [vmem:[%s1 + $0x1c0] sm:$0xff]
  %v73 = vld [vmem:[%s1 + $0x1c8] sm:$0xff]
  %v74 = vld [vmem:[%s1 + $0x1d0] sm:$0xff]
  %v75 = vld [vmem:[%s1 + $0x1d8] sm:$0xff]
  %v76 = vld [vmem:[%s1 + $0x1e0] sm:$0xff]
  %v77 = vld [vmem:[%s1 + $0x1e8] sm:$0xff]
  %v78 = vld [vmem:[%s1 + $0x1f0] sm:$0xff]
  %v79 = vld [vmem:[%s1 + $0x1f8] sm:$0xff]
  %v80 = vld [vmem:[%s1 + $0x200] sm:$0xff]
  %v81 = vld [vmem:[%s1 + $0x208] sm:$0xff]
  %v82 = vld [vmem:[%s1 + $0x210] sm:$0xff]
  %v83 = vld [vmem:[%s1 + $0x218] sm:$0xff]
  %v84 = vld [vmem:[%s1 + $0x220] sm:$0xff]
  %v85 = vld [vmem:[%s1 + $0x228] sm:$0xff]
  %v86 = vld [vmem:[%s1 + $0x230] sm:$0xff]
  %v87 = vld [vmem:[%s1 + $0x238] sm:$0xff]
  %v88 = vld [vmem:[%s1 + $0x240] sm:$0xff]
  %v89 = vld [vmem:[%s1 + $0x248] sm:$0xff]
  %v90 = vld [vmem:[%s1 + $0x250] sm:$0xff]
  %v91 = vld [vmem:[%s1 + $0x258] sm:$0xff]
  %v92 = vld [vmem:[%s1 + $0x260] sm:$0xff]
  %v93 = vld [vmem:[%s1 + $0x268] sm:$0xff]
  %v94 = vld [vmem:[%s1 + $0x270] sm:$0xff]
  %v95 = vld [vmem:[%s1 + $0x278] sm:$0xff]
  %v96 = vld [vmem:[%s1 + $0x280] sm:$0xff]
  %v97 = vld [vmem:[%s1 + $0x288] sm:$0xff]
  %v98 = vld [vmem:[%s1 + $0x290] sm:$0xff]
  %v99 = vld [vmem:[%s1 + $0x298] sm:$0xff]
  %v100 = vld [vmem:[%s1 + $0x2a0] sm:$0xff]
  %v101 = vld [vmem:[%s1 + $0x2a8] sm:$0xff]
  %v102 = vld [vmem:[%s1 + $0x2b0] sm:$0xff]
  %v103 = vld [vmem:[%s1 + $0x2b8] sm:$0xff]
  %v104 = vld [vmem:[%s1 + $0x2c0] sm:$0xff]
  %v105 = vld [vmem:[%s1 + $0x2c8] sm:$0xff]
  %v106 = vld [vmem:[%s1 + $0x2d0] sm:$0xff]
  %v107 = vld [vmem:[%s1 + $0x2d8] sm:$0xff]
  %v108 = vld [vmem:[%s1 + $0x2e0] sm:$0xff]
  %v109 = vld [vmem:[%s1 + $0x2e8] sm:$0xff]
  %v110 = vld [vmem:[%s1 + $0x2f0] sm:$0xff]
  %v111 = vld [vmem:[%s1 + $0x2f8] sm:$0xff]
  %v112 = vld [vmem:[%s1 + $0x300] sm:$0xff]
  %v113 = vld [vmem:[%s1 + $0x308] sm:$0xff]
  %v114 = vld [vmem:[%s1 + $0x310] sm:$0xff]
  %v115 = vld [vmem:[%s1 + $0x318] sm:$0xff]
  %v116 = vld [vmem:[%s1 + $0x320] sm:$0xff]
  %v117 = vld [vmem:[%s1 + $0x328] sm:$0xff]
  %v118 = vld [vmem:[%s1 + $0x330] sm:$0xff]
  %v119 = vld [vmem:[%s1 + $0x338] sm:$0xff]
  %v120 = vld [vmem:[%s1 + $0x340] sm:$0xff]
  %v121 = vld [vmem:[%s1 + $0x348] sm:$0xff]
  %v122 = vld [vmem:[%s1 + $0x350] sm:$0xff]
  %v123 = vld [vmem:[%s1 + $0x358] sm:$0xff]
  %v124 = vld [vmem:[%s2] sm:$0xff]
  %126 = vset.pattern.permute.xlu0 0
  %127 = vperm.xlu0 %126, %v124
  %v128 = vpop.permute.xlu0 %127
  %v131 = vunpack.c.l.b16 %v15
  %v132 = vunpack.c.h.b16 %v15
  %v133 = vpack.c.b16 %v131, %v131
  %v134 = vpack.c.b16 %v132, %v132
  %v244 = vunpack.c.l.b16 %v16
  %v245 = vunpack.c.h.b16 %v16
  %v246 = vunpack.c.l.b16 %v17
  %v247 = vunpack.c.h.b16 %v17
  %v248 = vunpack.c.l.b16 %v18
  %v249 = vunpack.c.h.b16 %v18
  %v250 = vunpack.c.l.b16 %v19
  %v251 = vunpack.c.h.b16 %v19
  %v252 = vunpack.c.l.b16 %v20
  %v253 = vunpack.c.h.b16 %v20
  %v254 = vunpack.c.l.b16 %v21
  %v255 = vunpack.c.h.b16 %v21
  %v256 = vunpack.c.l.b16 %v22
  %v257 = vunpack.c.h.b16 %v22
  %v258 = vunpack.c.l.b16 %v23
  %v259 = vunpack.c.h.b16 %v23
  %v260 = vunpack.c.l.b16 %v24
  %v261 = vunpack.c.h.b16 %v24
  %v262 = vunpack.c.l.b16 %v25
  %v263 = vunpack.c.h.b16 %v25
  %v264 = vunpack.c.l.b16 %v26
  %v265 = vunpack.c.h.b16 %v26
  %v266 = vunpack.c.l.b16 %v27
  %v267 = vunpack.c.h.b16 %v27
  %v268 = vunpack.c.l.b16 %v28
  %v269 = vunpack.c.h.b16 %v28
  %v270 = vunpack.c.l.b16 %v29
  %v271 = vunpack.c.h.b16 %v29
  %v272 = vunpack.c.l.b16 %v30
  %v273 = vunpack.c.h.b16 %v30
  %v274 = vunpack.c.l.b16 %v31
  %v275 = vunpack.c.h.b16 %v31
  %v276 = vunpack.c.l.b16 %v32
  %v277 = vunpack.c.h.b16 %v32
  %v278 = vunpack.c.l.b16 %v33
  %v279 = vunpack.c.h.b16 %v33
  %v280 = vunpack.c.l.b16 %v34
  %v281 = vunpack.c.h.b16 %v34
  %v282 = vunpack.c.l.b16 %v35
  %v283 = vunpack.c.h.b16 %v35
  %v284 = vunpack.c.l.b16 %v36
  %v285 = vunpack.c.h.b16 %v36
  %v286 = vunpack.c.l.b16 %v37
  %v287 = vunpack.c.h.b16 %v37
  %v288 = vunpack.c.l.b16 %v38
  %v289 = vunpack.c.h.b16 %v38
  %v290 = vunpack.c.l.b16 %v39
  %v291 = vunpack.c.h.b16 %v39
  %v292 = vunpack.c.l.b16 %v40
  %v293 = vunpack.c.h.b16 %v40
  %v294 = vunpack.c.l.b16 %v41
  %v295 = vunpack.c.h.b16 %v41
  %v296 = vunpack.c.l.b16 %v42
  %v297 = vunpack.c.h.b16 %v42
  %v298 = vunpack.c.l.b16 %v43
  %v299 = vunpack.c.h.b16 %v43
  %v300 = vunpack.c.l.b16 %v44
  %v301 = vunpack.c.h.b16 %v44
  %v302 = vunpack.c.l.b16 %v45
  %v303 = vunpack.c.h.b16 %v45
  %v304 = vunpack.c.l.b16 %v46
  %v305 = vunpack.c.h.b16 %v46
  %v306 = vunpack.c.l.b16 %v47
  %v307 = vunpack.c.h.b16 %v47
  %v308 = vunpack.c.l.b16 %v48
  %v309 = vunpack.c.h.b16 %v48
  %v310 = vunpack.c.l.b16 %v49
  %v311 = vunpack.c.h.b16 %v49
  %v312 = vunpack.c.l.b16 %v50
  %v313 = vunpack.c.h.b16 %v50
  %v314 = vunpack.c.l.b16 %v51
  %v315 = vunpack.c.h.b16 %v51
  %v316 = vunpack.c.l.b16 %v52
  %v317 = vunpack.c.h.b16 %v52
  %v318 = vunpack.c.l.b16 %v53
  %v319 = vunpack.c.h.b16 %v53
  %v320 = vunpack.c.l.b16 %v54
  %v321 = vunpack.c.h.b16 %v54
  %v322 = vunpack.c.l.b16 %v55
  %v323 = vunpack.c.h.b16 %v55
  %v324 = vunpack.c.l.b16 %v56
  %v325 = vunpack.c.h.b16 %v56
  %v326 = vunpack.c.l.b16 %v57
  %v327 = vunpack.c.h.b16 %v57
  %v328 = vunpack.c.l.b16 %v58
  %v329 = vunpack.c.h.b16 %v58
  %v330 = vunpack.c.l.b16 %v59
  %v331 = vunpack.c.h.b16 %v59
  %v332 = vunpack.c.l.b16 %v60
  %v333 = vunpack.c.h.b16 %v60
  %v334 = vunpack.c.l.b16 %v61
  %v335 = vunpack.c.h.b16 %v61
  %v336 = vunpack.c.l.b16 %v62
  %v337 = vunpack.c.h.b16 %v62
  %v338 = vunpack.c.l.b16 %v63
  %v339 = vunpack.c.h.b16 %v63
  %v340 = vunpack.c.l.b16 %v64
  %v341 = vunpack.c.h.b16 %v64
  %v342 = vunpack.c.l.b16 %v65
  %v343 = vunpack.c.h.b16 %v65
  %v344 = vunpack.c.l.b16 %v66
  %v345 = vunpack.c.h.b16 %v66
  %v346 = vunpack.c.l.b16 %v67
  %v347 = vunpack.c.h.b16 %v67
  %v348 = vunpack.c.l.b16 %v68
  %v349 = vunpack.c.h.b16 %v68
  %v350 = vunpack.c.l.b16 %v69
  %v351 = vunpack.c.h.b16 %v69
  %v352 = vunpack.c.l.b16 %v70
  %v353 = vunpack.c.h.b16 %v70
  %v354 = vunpack.c.l.b16 %v71
  %v355 = vunpack.c.h.b16 %v71
  %v356 = vunpack.c.l.b16 %v72
  %v357 = vunpack.c.h.b16 %v72
  %v358 = vunpack.c.l.b16 %v73
  %v359 = vunpack.c.h.b16 %v73
  %v360 = vunpack.c.l.b16 %v74
  %v361 = vunpack.c.h.b16 %v74
  %v362 = vunpack.c.l.b16 %v75
  %v363 = vunpack.c.h.b16 %v75
  %v364 = vunpack.c.l.b16 %v76
  %v365 = vunpack.c.h.b16 %v76
  %v366 = vunpack.c.l.b16 %v77
  %v367 = vunpack.c.h.b16 %v77
  %v368 = vunpack.c.l.b16 %v78
  %v369 = vunpack.c.h.b16 %v78
  %v370 = vunpack.c.l.b16 %v79
  %v371 = vunpack.c.h.b16 %v79
  %v372 = vunpack.c.l.b16 %v80
  %v373 = vunpack.c.h.b16 %v80
  %v374 = vunpack.c.l.b16 %v81
  %v375 = vunpack.c.h.b16 %v81
  %v376 = vunpack.c.l.b16 %v82
  %v377 = vunpack.c.h.b16 %v82
  %v378 = vunpack.c.l.b16 %v83
  %v379 = vunpack.c.h.b16 %v83
  %v380 = vunpack.c.l.b16 %v84
  %v381 = vunpack.c.h.b16 %v84
  %v382 = vunpack.c.l.b16 %v85
  %v383 = vunpack.c.h.b16 %v85
  %v384 = vunpack.c.l.b16 %v86
  %v385 = vunpack.c.h.b16 %v86
  %v386 = vunpack.c.l.b16 %v87
  %v387 = vunpack.c.h.b16 %v87
  %v388 = vunpack.c.l.b16 %v88
  %v389 = vunpack.c.h.b16 %v88
  %v390 = vunpack.c.l.b16 %v89
  %v391 = vunpack.c.h.b16 %v89
  %v392 = vunpack.c.l.b16 %v90
  %v393 = vunpack.c.h.b16 %v90
  %v394 = vunpack.c.l.b16 %v91
  %v395 = vunpack.c.h.b16 %v91
  %v396 = vunpack.c.l.b16 %v92
  %v397 = vunpack.c.h.b16 %v92
  %v398 = vunpack.c.l.b16 %v93
  %v399 = vunpack.c.h.b16 %v93
  %v400 = vunpack.c.l.b16 %v94
  %v401 = vunpack.c.h.b16 %v94
  %v402 = vunpack.c.l.b16 %v95
  %v403 = vunpack.c.h.b16 %v95
  %v404 = vunpack.c.l.b16 %v96
  %v405 = vunpack.c.h.b16 %v96
  %v406 = vunpack.c.l.b16 %v97
  %v407 = vunpack.c.h.b16 %v97
  %v408 = vunpack.c.l.b16 %v98
  %v409 = vunpack.c.h.b16 %v98
  %v410 = vunpack.c.l.b16 %v99
  %v411 = vunpack.c.h.b16 %v99
  %v412 = vunpack.c.l.b16 %v100
  %v413 = vunpack.c.h.b16 %v100
  %v414 = vunpack.c.l.b16 %v101
  %v415 = vunpack.c.h.b16 %v101
  %v416 = vunpack.c.l.b16 %v102
  %v417 = vunpack.c.h.b16 %v102
  %v418 = vunpack.c.l.b16 %v103
  %v419 = vunpack.c.h.b16 %v103
  %v420 = vunpack.c.l.b16 %v104
  %v421 = vunpack.c.h.b16 %v104
  %v422 = vunpack.c.l.b16 %v105
  %v423 = vunpack.c.h.b16 %v105
  %v424 = vunpack.c.l.b16 %v106
  %v425 = vunpack.c.h.b16 %v106
  %v426 = vunpack.c.l.b16 %v107
  %v427 = vunpack.c.h.b16 %v107
  %v428 = vunpack.c.l.b16 %v108
  %v429 = vunpack.c.h.b16 %v108
  %v430 = vunpack.c.l.b16 %v109
  %v431 = vunpack.c.h.b16 %v109
  %v432 = vunpack.c.l.b16 %v110
  %v433 = vunpack.c.h.b16 %v110
  %v434 = vunpack.c.l.b16 %v111
  %v435 = vunpack.c.h.b16 %v111
  %v436 = vunpack.c.l.b16 %v112
  %v437 = vunpack.c.h.b16 %v112
  %v438 = vunpack.c.l.b16 %v113
  %v439 = vunpack.c.h.b16 %v113
  %v440 = vunpack.c.l.b16 %v114
  %v441 = vunpack.c.h.b16 %v114
  %v442 = vunpack.c.l.b16 %v115
  %v443 = vunpack.c.h.b16 %v115
  %v444 = vunpack.c.l.b16 %v116
  %v445 = vunpack.c.h.b16 %v116
  %v446 = vunpack.c.l.b16 %v117
  %v447 = vunpack.c.h.b16 %v117
  %v448 = vunpack.c.l.b16 %v118
  %v449 = vunpack.c.h.b16 %v118
  %v450 = vunpack.c.l.b16 %v119
  %v451 = vunpack.c.h.b16 %v119
  %v452 = vunpack.c.l.b16 %v120
  %v453 = vunpack.c.h.b16 %v120
  %v454 = vunpack.c.l.b16 %v121
  %v455 = vunpack.c.h.b16 %v121
  %v456 = vunpack.c.l.b16 %v122
  %v457 = vunpack.c.h.b16 %v122
  %v458 = vunpack.c.l.b16 %v123
  %v459 = vunpack.c.h.b16 %v123
  %v460 = vpack.c.b16 %v252, %v244
  %v461 = vpack.c.b16 %v253, %v245
  %v462 = vpack.c.b16 %v254, %v246
  %v463 = vpack.c.b16 %v255, %v247
  %v464 = vpack.c.b16 %v256, %v248
  %v465 = vpack.c.b16 %v257, %v249
  %v466 = vpack.c.b16 %v258, %v250
  %v467 = vpack.c.b16 %v259, %v251
  %v468 = vpack.c.b16 %v268, %v260
  %v469 = vpack.c.b16 %v269, %v261
  %v470 = vpack.c.b16 %v270, %v262
  %v471 = vpack.c.b16 %v271, %v263
  %v472 = vpack.c.b16 %v272, %v264
  %v473 = vpack.c.b16 %v273, %v265
  %v474 = vpack.c.b16 %v274, %v266
  %v475 = vpack.c.b16 %v275, %v267
  %v476 = vpack.c.b16 %v284, %v276
  %v477 = vpack.c.b16 %v285, %v277
  %v478 = vpack.c.b16 %v286, %v278
  %v479 = vpack.c.b16 %v287, %v279
  %v480 = vpack.c.b16 %v288, %v280
  %v481 = vpack.c.b16 %v289, %v281
  %v482 = vpack.c.b16 %v290, %v282
  %v483 = vpack.c.b16 %v291, %v283
  %v484 = vpack.c.b16 %v300, %v292
  %v485 = vpack.c.b16 %v301, %v293
  %v486 = vpack.c.b16 %v302, %v294
  %v487 = vpack.c.b16 %v303, %v295
  %v488 = vpack.c.b16 %v304, %v296
  %v489 = vpack.c.b16 %v305, %v297
  %v490 = vpack.c.b16 %v306, %v298
  %v491 = vpack.c.b16 %v307, %v299
  %v492 = vpack.c.b16 %v316, %v308
  %v493 = vpack.c.b16 %v317, %v309
  %v494 = vpack.c.b16 %v318, %v310
  %v495 = vpack.c.b16 %v319, %v311
  %v496 = vpack.c.b16 %v320, %v312
  %v497 = vpack.c.b16 %v321, %v313
  %v498 = vpack.c.b16 %v322, %v314
  %v499 = vpack.c.b16 %v323, %v315
  %v500 = vpack.c.b16 %v332, %v324
  %v501 = vpack.c.b16 %v333, %v325
  %v502 = vpack.c.b16 %v334, %v326
  %v503 = vpack.c.b16 %v335, %v327
  %v504 = vpack.c.b16 %v336, %v328
  %v505 = vpack.c.b16 %v337, %v329
  %v506 = vpack.c.b16 %v338, %v330
  %v507 = vpack.c.b16 %v339, %v331
  %v508 = vpack.c.b16 %v348, %v340
  %v509 = vpack.c.b16 %v349, %v341
  %v510 = vpack.c.b16 %v350, %v342
  %v511 = vpack.c.b16 %v351, %v343
  %v512 = vpack.c.b16 %v352, %v344
  %v513 = vpack.c.b16 %v353, %v345
  %v514 = vpack.c.b16 %v354, %v346
  %v515 = vpack.c.b16 %v355, %v347
  %v516 = vpack.c.b16 %v364, %v356
  %v517 = vpack.c.b16 %v365, %v357
  %v518 = vpack.c.b16 %v366, %v358
  %v519 = vpack.c.b16 %v367, %v359
  %v520 = vpack.c.b16 %v368, %v360
  %v521 = vpack.c.b16 %v369, %v361
  %v522 = vpack.c.b16 %v370, %v362
  %v523 = vpack.c.b16 %v371, %v363
  %v524 = vpack.c.b16 %v380, %v372
  %v525 = vpack.c.b16 %v381, %v373
  %v526 = vpack.c.b16 %v382, %v374
  %v527 = vpack.c.b16 %v383, %v375
  %v528 = vpack.c.b16 %v384, %v376
  %v529 = vpack.c.b16 %v385, %v377
  %v530 = vpack.c.b16 %v386, %v378
  %v531 = vpack.c.b16 %v387, %v379
  %v532 = vpack.c.b16 %v396, %v388
  %v533 = vpack.c.b16 %v397, %v389
  %v534 = vpack.c.b16 %v398, %v390
  %v535 = vpack.c.b16 %v399, %v391
  %v536 = vpack.c.b16 %v400, %v392
  %v537 = vpack.c.b16 %v401, %v393
  %v538 = vpack.c.b16 %v402, %v394
  %v539 = vpack.c.b16 %v403, %v395
  %v540 = vpack.c.b16 %v412, %v404
  %v541 = vpack.c.b16 %v413, %v405
  %v542 = vpack.c.b16 %v414, %v406
  %v543 = vpack.c.b16 %v415, %v407
  %v544 = vpack.c.b16 %v416, %v408
  %v545 = vpack.c.b16 %v417, %v409
  %v546 = vpack.c.b16 %v418, %v410
  %v547 = vpack.c.b16 %v419, %v411
  %v548 = vpack.c.b16 %v428, %v420
  %v549 = vpack.c.b16 %v429, %v421
  %v550 = vpack.c.b16 %v430, %v422
  %v551 = vpack.c.b16 %v431, %v423
  %v552 = vpack.c.b16 %v432, %v424
  %v553 = vpack.c.b16 %v433, %v425
  %v554 = vpack.c.b16 %v434, %v426
  %v555 = vpack.c.b16 %v435, %v427
  %v556 = vpack.c.b16 %v444, %v436
  %v557 = vpack.c.b16 %v445, %v437
  %v558 = vpack.c.b16 %v446, %v438
  %v559 = vpack.c.b16 %v447, %v439
  %v560 = vpack.c.b16 %v448, %v440
  %v561 = vpack.c.b16 %v449, %v441
  %v562 = vpack.c.b16 %v450, %v442
  %v563 = vpack.c.b16 %v451, %v443
  %v564 = vpack.c.b16 %v452, %v452
  %v565 = vpack.c.b16 %v453, %v453
  %v566 = vpack.c.b16 %v454, %v454
  %v567 = vpack.c.b16 %v455, %v455
  %v568 = vpack.c.b16 %v456, %v456
  %v569 = vpack.c.b16 %v457, %v457
  %v570 = vpack.c.b16 %v458, %v458
  %v571 = vpack.c.b16 %v459, %v459
  %vm676 = vcmask 719872
  %v678 = vsel %vm676, %v134, 0
  %vm680 = vcmask 1043456
  %v682 = vsel %vm680, %v564, 0
  %v685 = vsel %vm680, %v565, 0
  %v688 = vsel %vm680, %v566, 0
  %v691 = vsel %vm680, %v567, 0
  %v694 = vsel %vm680, %v568, 0
  %v697 = vsel %vm680, %v569, 0
  %v700 = vsel %vm680, %v570, 0
  %v703 = vsel %vm680, %v571, 0
  %705 = vmatprep.subr.bf16.mxu0 %v517
  %706 = vmatpush1.bf16.msra.mxu0 %v516
  %707 = vmatprep.subr.bf16.mxu0 %v509
  %708 = vmatpush1.bf16.msra.mxu0 %v508
  %709 = vmatprep.subr.bf16.mxu0 %v501
  %710 = vmatpush1.bf16.msra.mxu0 %v500
  %711 = vmatprep.subr.bf16.mxu0 %v493
  %712 = vmatpush1.bf16.msra.mxu0 %v492
  %713 = vmatprep.subr.bf16.mxu0 %v485
  %714 = vmatpush1.bf16.msra.mxu0 %v484
  %715 = vmatprep.subr.bf16.mxu0 %v477
  %716 = vmatpush1.bf16.msra.mxu0 %v476
  %717 = vmatprep.subr.bf16.mxu0 %v469
  %718 = vmatpush1.bf16.msra.mxu0 %v468
  %719 = vmatprep.subr.bf16.mxu0 %v461
  %720 = vmatpush1.bf16.msra.mxu0 %v460
  %721 = vmatprep.subr.bf16.mxu0 0
  %722 = vmatpush2.bf16.msra.mxu0 0
  %723 = vmatprep.subr.bf16.mxu0 0
  %724 = vmatpush2.bf16.msra.mxu0 0
  %725 = vmatprep.subr.bf16.mxu0 %v685
  %726 = vmatpush2.bf16.msra.mxu0 %v682
  %727 = vmatprep.subr.bf16.mxu0 %v557
  %728 = vmatpush2.bf16.msra.mxu0 %v556
  %729 = vmatprep.subr.bf16.mxu0 %v549
  %730 = vmatpush2.bf16.msra.mxu0 %v548
  %731 = vmatprep.subr.bf16.mxu0 %v541
  %732 = vmatpush2.bf16.msra.mxu0 %v540
  %733 = vmatprep.subr.bf16.mxu0 %v533
  %734 = vmatpush2.bf16.msra.mxu0 %v532
  %735 = vmatprep.subr.bf16.mxu0 %v525
  %736 = vmatpush2.bf16.msra.mxu0 %v524
  %737 = vmatprep.mubr.bf16.mxu0 %v678
  %738 = vmatmul.mubr.bf16.gmra.mxu0 %v133
  %v739 = vpop.f32.mrf.mxu0
  %v740 = vadd.f32 %v128, %v739
  %v741 = vpop.f32.mrf.mxu0
  %v742 = vadd.f32 %v128, %v741
  %v743 = vpop.f32.mrf.mxu0
  %v744 = vpop.f32.mrf.mxu0
  %745 = vdwg.mxu0
  %746 = vmatprep.subr.bf16.mxu0 %v519
  %747 = vmatpush1.bf16.msra.mxu0 %v518
  %748 = vmatprep.subr.bf16.mxu0 %v511
  %749 = vmatpush1.bf16.msra.mxu0 %v510
  %750 = vmatprep.subr.bf16.mxu0 %v503
  %751 = vmatpush1.bf16.msra.mxu0 %v502
  %752 = vmatprep.subr.bf16.mxu0 %v495
  %753 = vmatpush1.bf16.msra.mxu0 %v494
  %754 = vmatprep.subr.bf16.mxu0 %v487
  %755 = vmatpush1.bf16.msra.mxu0 %v486
  %756 = vmatprep.subr.bf16.mxu0 %v479
  %757 = vmatpush1.bf16.msra.mxu0 %v478
  %758 = vmatprep.subr.bf16.mxu0 %v471
  %759 = vmatpush1.bf16.msra.mxu0 %v470
  %760 = vmatprep.subr.bf16.mxu0 %v463
  %761 = vmatpush1.bf16.msra.mxu0 %v462
  %762 = vmatprep.subr.bf16.mxu0 0
  %763 = vmatpush2.bf16.msra.mxu0 0
  %764 = vmatprep.subr.bf16.mxu0 0
  %765 = vmatpush2.bf16.msra.mxu0 0
  %766 = vmatprep.subr.bf16.mxu0 %v691
  %767 = vmatpush2.bf16.msra.mxu0 %v688
  %768 = vmatprep.subr.bf16.mxu0 %v559
  %769 = vmatpush2.bf16.msra.mxu0 %v558
  %770 = vmatprep.subr.bf16.mxu0 %v551
  %771 = vmatpush2.bf16.msra.mxu0 %v550
  %772 = vmatprep.subr.bf16.mxu0 %v543
  %773 = vmatpush2.bf16.msra.mxu0 %v542
  %774 = vmatprep.subr.bf16.mxu0 %v535
  %775 = vmatpush2.bf16.msra.mxu0 %v534
  %776 = vmatprep.subr.bf16.mxu0 %v527
  %777 = vmatpush2.bf16.msra.mxu0 %v526
  %778 = vmatprep.mubr.bf16.mxu0 %v678
  %779 = vmatmul.mubr.bf16.gmra.mxu0 %v133
  %v780 = vpop.f32.mrf.mxu0
  %v781 = vadd.f32 %v128, %v780
  %v782 = vpop.f32.mrf.mxu0
  %v783 = vadd.f32 %v128, %v782
  %v784 = vpop.f32.mrf.mxu0
  %v785 = vpop.f32.mrf.mxu0
  %786 = vdwg.mxu0
  %787 = vmatprep.subr.bf16.mxu0 %v521
  %788 = vmatpush1.bf16.msra.mxu0 %v520
  %789 = vmatprep.subr.bf16.mxu0 %v513
  %790 = vmatpush1.bf16.msra.mxu0 %v512
  %791 = vmatprep.subr.bf16.mxu0 %v505
  %792 = vmatpush1.bf16.msra.mxu0 %v504
  %793 = vmatprep.subr.bf16.mxu0 %v497
  %794 = vmatpush1.bf16.msra.mxu0 %v496
  %795 = vmatprep.subr.bf16.mxu0 %v489
  %796 = vmatpush1.bf16.msra.mxu0 %v488
  %797 = vmatprep.subr.bf16.mxu0 %v481
  %798 = vmatpush1.bf16.msra.mxu0 %v480
  %799 = vmatprep.subr.bf16.mxu0 %v473
  %800 = vmatpush1.bf16.msra.mxu0 %v472
  %801 = vmatprep.subr.bf16.mxu0 %v465
  %802 = vmatpush1.bf16.msra.mxu0 %v464
  %803 = vmatprep.subr.bf16.mxu0 0
  %804 = vmatpush2.bf16.msra.mxu0 0
  %805 = vmatprep.subr.bf16.mxu0 0
  %806 = vmatpush2.bf16.msra.mxu0 0
  %807 = vmatprep.subr.bf16.mxu0 %v697
  %808 = vmatpush2.bf16.msra.mxu0 %v694
  %809 = vmatprep.subr.bf16.mxu0 %v561
  %810 = vmatpush2.bf16.msra.mxu0 %v560
  %811 = vmatprep.subr.bf16.mxu0 %v553
  %812 = vmatpush2.bf16.msra.mxu0 %v552
  %813 = vmatprep.subr.bf16.mxu0 %v545
  %814 = vmatpush2.bf16.msra.mxu0 %v544
  %815 = vmatprep.subr.bf16.mxu0 %v537
  %816 = vmatpush2.bf16.msra.mxu0 %v536
  %817 = vmatprep.subr.bf16.mxu0 %v529
  %818 = vmatpush2.bf16.msra.mxu0 %v528
  %819 = vmatprep.mubr.bf16.mxu0 %v678
  %820 = vmatmul.mubr.bf16.gmra.mxu0 %v133
  %v821 = vpop.f32.mrf.mxu0
  %v822 = vadd.f32 %v128, %v821
  %v823 = vpop.f32.mrf.mxu0
  %v824 = vadd.f32 %v128, %v823
  %v825 = vpop.f32.mrf.mxu0
  %v826 = vpop.f32.mrf.mxu0
  %827 = vdwg.mxu0
  %828 = vmatprep.subr.bf16.mxu0 %v523
  %829 = vmatpush1.bf16.msra.mxu0 %v522
  %830 = vmatprep.subr.bf16.mxu0 %v515
  %831 = vmatpush1.bf16.msra.mxu0 %v514
  %832 = vmatprep.subr.bf16.mxu0 %v507
  %833 = vmatpush1.bf16.msra.mxu0 %v506
  %834 = vmatprep.subr.bf16.mxu0 %v499
  %835 = vmatpush1.bf16.msra.mxu0 %v498
  %836 = vmatprep.subr.bf16.mxu0 %v491
  %837 = vmatpush1.bf16.msra.mxu0 %v490
  %838 = vmatprep.subr.bf16.mxu0 %v483
  %839 = vmatpush1.bf16.msra.mxu0 %v482
  %840 = vmatprep.subr.bf16.mxu0 %v475
  %841 = vmatpush1.bf16.msra.mxu0 %v474
  %842 = vmatprep.subr.bf16.mxu0 %v467
  %843 = vmatpush1.bf16.msra.mxu0 %v466
  %844 = vmatprep.subr.bf16.mxu0 0
  %845 = vmatpush2.bf16.msra.mxu0 0
  %846 = vmatprep.subr.bf16.mxu0 0
  %847 = vmatpush2.bf16.msra.mxu0 0
  %848 = vmatprep.subr.bf16.mxu0 %v703
  %849 = vmatpush2.bf16.msra.mxu0 %v700
  %850 = vmatprep.subr.bf16.mxu0 %v563
  %851 = vmatpush2.bf16.msra.mxu0 %v562
  %852 = vmatprep.subr.bf16.mxu0 %v555
  %853 = vmatpush2.bf16.msra.mxu0 %v554
  %854 = vmatprep.subr.bf16.mxu0 %v547
  %855 = vmatpush2.bf16.msra.mxu0 %v546
  %856 = vmatprep.subr.bf16.mxu0 %v539
  %857 = vmatpush2.bf16.msra.mxu0 %v538
  %858 = vmatprep.subr.bf16.mxu0 %v531
  %859 = vmatpush2.bf16.msra.mxu0 %v530
  %860 = vmatprep.mubr.bf16.mxu0 %v678
  %861 = vmatmul.mubr.bf16.gmra.mxu0 %v133
  %v862 = vpop.f32.mrf.mxu0
  %v863 = vadd.f32 %v128, %v862
  %v864 = vpop.f32.mrf.mxu0
  %v865 = vadd.f32 %v128, %v864
  %v866 = vpop.f32.mrf.mxu0
  %v867 = vpop.f32.mrf.mxu0
  %868 = vdwg.mxu0
  %v869 = vmax.f32 %v740, 0.0
  %v870 = vmax.f32 %v742, 0.0
  %v871 = vmax.f32 %v781, 0.0
  %v872 = vmax.f32 %v783, 0.0
  %v873 = vmax.f32 %v822, 0.0
  %v874 = vmax.f32 %v824, 0.0
  %v875 = vmax.f32 %v863, 0.0
  %v876 = vmax.f32 %v865, 0.0
  %v877 = vpack.c.bf16 %v869, %v869
  %v878 = vpack.c.bf16 %v870, %v870
  %v879 = vpack.c.bf16 %v871, %v871
  %v880 = vpack.c.bf16 %v872, %v872
  %v881 = vpack.c.bf16 %v873, %v873
  %v882 = vpack.c.bf16 %v874, %v874
  %v883 = vpack.c.bf16 %v875, %v875
  %v884 = vpack.c.bf16 %v876, %v876
  %v893 = vunpack.c.l.b16 %v877
  %v894 = vunpack.c.l.b16 %v878
  %v895 = vunpack.c.l.b16 %v879
  %v896 = vunpack.c.l.b16 %v880
  %v897 = vunpack.c.l.b16 %v881
  %v898 = vunpack.c.l.b16 %v882
  %v899 = vunpack.c.l.b16 %v883
  %v900 = vunpack.c.l.b16 %v884
  %v901 = vpack.c.b16 %v894, %v893
  %v902 = vpack.c.b16 %v896, %v895
  %v903 = vpack.c.b16 %v898, %v897
  %v904 = vpack.c.b16 %v900, %v899
  %909 = vst [vmem:[%s3] sm:$0xff] %v901
  %910 = vst [vmem:[%s3 + $0x8] sm:$0xff] %v902
  %911 = vst [vmem:[%s3 + $0x10] sm:$0xff] %v903
  %912 = vst [vmem:[%s3 + $0x18] sm:$0xff] %v904
  // Predicated region
  $region14: #{_lambda_.10} parent=0 // pred_check
    _
  $region15: #{_lambda_.10} parent=0 // pred_check_branch
    %914 = sbr.rel (0) target = $region17
  $region16: #{_lambda_.10} parent=0 // pred_region
    _
  $region17: #{_lambda_.10} parent=0 // pred_fallthru
    _
  // Predicated region
  $region18: #{_lambda_.10} parent=0 // pred_check
    _
  $region19: #{_lambda_.10} parent=0 // pred_check_branch
    %916 = sbr.rel (0) target = $region21
  $region20: #{_lambda_.10} parent=0 // pred_region
    _
  $region21: #{_lambda_.10} parent=0 // pred_fallthru
    _

// kernel: _lambda_.11
$region0: #{_lambda_.11}
  #allocation0 [shape = 'u32[]', space=smem, size = 0x4, offset = 0x4, fixed_abs, tag = 'smem constant byte address 0x4 - core index']
  #allocation1 [shape = 'u32[144,128]{1,0:T(1,128)}', space=vmem, size = 0x12000, scoped, tag = 'internal scratch']
  #allocation2 [shape = 'f32[1,1]{1,0:T(1,128)S(1)}', space=vmem, size = 0x200, scoped, tag = 'scoped memory for _lambda_.11']
  %s0 = inlined_call_operand.vmem [shape: bf16[1,72], index: 0, kind: input, shape index: {}]
  %s1 = inlined_call_operand.vmem [shape: bf16[72,4096], index: 1, kind: input, shape index: {}]
  %s2 = inlined_call_operand.<no memory space> [shape: f32[1,1], index: 2, kind: input, shape index: {}]
  %s3 = inlined_call_operand.vmem [shape: f32[1,4096], index: 3, kind: output, shape index: {}]
  %s4 = sld [smem:[#allocation0]]
  $region68: #{_lambda_.11} parent=0
    _
  %s6 = ssub.s32 1, %s4
  %s7 = scalar_select 0, %s6, %s4
  %v8 = vstv %s2
  %9 = vst [vmem:[#allocation2] sm:$0x1] %v8
  $region1: #{_lambda_.11} parent=0
    #allocation3 [shape = 'u8[589824]{0}', space=vmem, size = 0x90000, scoped, tag = 'input window, operand 1']
    loop: start=0, step=1, limit=4
    $region2: #{_lambda_.11} parent=1 // loop_pre_header
      _
    $region3: #{_lambda_.11} parent=1 // loop_header
      %s11 = sphi 0, %s15
      %p12 = scmp.ge.s32.totalorder %s11, 4
      %s19 = sphi 0, %s19
      %s21 = sphi 0, %s19
      %s22 = sphi 0, %s21
      %s36 = sphi 0, %s22
      %s42 = sphi 0, %s44
      %s45 = sphi 0, %s42
      %s46 = sphi 0, %s45
      %s62 = sphi 0, %s46
      %s66 = sphi 0, %s66
      %s68 = sphi 0, %s66
      %s69 = sphi 0, %s68
      %s83 = sphi 0, %s69
      %s89 = sphi 0, %s91
      %s92 = sphi 0, %s89
      %s93 = sphi 0, %s92
      %s109 = sphi 0, %s93
    $region4: #{_lambda_.11} parent=1 // loop_header_branch
      %14 = sbr.rel (%p12) target = $region8
    $region5: #{_lambda_.11} parent=1 // loop_body
      %s16 = ssub.s32 %s11, 1
      %s17 = ssub.s32 %s11, 2
      %s18 = sadd.s32 %s11, 1
      %s20 = sadd.s32 %s19, 1
      %p23 = scmp.eq.s32.totalorder %s11, 1
      %p24 = scmp.ne.s32.totalorder %s19, %s21
      %p25 = scmp.eq.s32.totalorder %s11, 0
      %p26 = por %p24, %p25
      %p27 = scmp.ne.s32.totalorder %s19, %s21
      %p28 = scmp.eq.s32.totalorder %s16, 1
      %p29 = por %p27, %p28
      %p30 = scmp.ne.s32.totalorder %s21, %s22
      %p31 = scmp.eq.s32.totalorder %s16, 0
      %p32 = por %p30, %p31
      %p33 = scmp.ne.s32.totalorder %s21, %s22
      %p34 = scmp.eq.s32.totalorder %s17, 1
      %p35 = por %p33, %p34
      %p37 = scmp.ne.s32.totalorder %s22, %s36
      %p38 = scmp.eq.s32.totalorder %s17, 0
      %p39 = por %p37, %p38
      %s40 = ssub.s32 %s11, %s18
      %p41 = scmp.eq.s32.totalorder %s40, 0
      %s43 = sadd.s32 %s42, 1
      %s44 = scalar_select %p41, %s42, %s43
      %p47 = pneg %p41
      %p48 = scmp.eq.s32.totalorder %s11, 1
      %p49 = por %p47, %p48
      %p50 = scmp.ne.s32.totalorder %s42, %s45
      %p51 = scmp.eq.s32.totalorder %s11, 0
      %p52 = por %p50, %p51
      %p53 = scmp.ne.s32.totalorder %s42, %s45
      %p54 = scmp.eq.s32.totalorder %s16, 1
      %p55 = por %p53, %p54
      %p56 = scmp.ne.s32.totalorder %s45, %s46
      %p57 = scmp.eq.s32.totalorder %s16, 0
      %p58 = por %p56, %p57
      %p59 = scmp.ne.s32.totalorder %s45, %s46
      %p60 = scmp.eq.s32.totalorder %s17, 1
      %p61 = por %p59, %p60
      %p63 = scmp.ne.s32.totalorder %s46, %s62
      %p64 = scmp.eq.s32.totalorder %s17, 0
      %p65 = por %p63, %p64
      %s67 = sadd.s32 %s66, 1
      %p70 = scmp.eq.s32.totalorder %s11, 1
      %p71 = scmp.ne.s32.totalorder %s66, %s68
      %p72 = scmp.eq.s32.totalorder %s11, 0
      %p73 = por %p71, %p72
      %p74 = scmp.ne.s32.totalorder %s66, %s68
      %p75 = scmp.eq.s32.totalorder %s16, 1
      %p76 = por %p74, %p75
      %p77 = scmp.ne.s32.totalorder %s68, %s69
      %p78 = scmp.eq.s32.totalorder %s16, 0
      %p79 = por %p77, %p78
      %p80 = scmp.ne.s32.totalorder %s68, %s69
      %p81 = scmp.eq.s32.totalorder %s17, 1
      %p82 = por %p80, %p81
      %p84 = scmp.ne.s32.totalorder %s69, %s83
      %p85 = scmp.eq.s32.totalorder %s17, 0
      %p86 = por %p84, %p85
      %s87 = ssub.s32 %s11, %s18
      %p88 = scmp.eq.s32.totalorder %s87, 0
      %s90 = sadd.s32 %s89, 1
      %s91 = scalar_select %p88, %s89, %s90
      %p94 = pneg %p88
      %p95 = scmp.eq.s32.totalorder %s11, 1
      %p96 = por %p94, %p95
      %p97 = scmp.ne.s32.totalorder %s89, %s92
      %p98 = scmp.eq.s32.totalorder %s11, 0
      %p99 = por %p97, %p98
      %p100 = scmp.ne.s32.totalorder %s89, %s92
      %p101 = scmp.eq.s32.totalorder %s16, 1
      %p102 = por %p100, %p101
      %p103 = scmp.ne.s32.totalorder %s92, %s93
      %p104 = scmp.eq.s32.totalorder %s16, 0
      %p105 = por %p103, %p104
      %p106 = scmp.ne.s32.totalorder %s92, %s93
      %p107 = scmp.eq.s32.totalorder %s17, 1
      %p108 = por %p106, %p107
      %p110 = scmp.ne.s32.totalorder %s93, %s109
      %p111 = scmp.eq.s32.totalorder %s17, 0
      %p112 = por %p110, %p111
      %p113 = scmp.le.s32.totalorder 1, %s11
      %p114 = scmp.lt.s32.totalorder %s11, 3
      %p115 = pnand %p113, %p114
      %p116 = pneg %p115
      // Predicated region
      $region9: #{_lambda_.11} parent=5 // pred_check
        _
      $region10: #{_lambda_.11} parent=5 // pred_check_branch
        %118 = sbr.rel (%p115) target = $region12
      $region11: #{_lambda_.11} parent=5 // pred_region
        %s119 = ssub.s32 %s11, 1
        // Predicated region
        $region13: #{_lambda_.11} parent=11 // pred_check
          %p120 = pneg %p32
        $region14: #{_lambda_.11} parent=11 // pred_check_branch
          %122 = sbr.rel (%p120) target = $region16
        $region15: #{_lambda_.11} parent=11 // pred_region
          _
        $region16: #{_lambda_.11} parent=11 // pred_fallthru
          _
        // Predicated region
        $region17: #{_lambda_.11} parent=11 // pred_check
          %p123 = pneg %p79
        $region18: #{_lambda_.11} parent=11 // pred_check_branch
          %125 = sbr.rel (%p123) target = $region20
        $region19: #{_lambda_.11} parent=11 // pred_region
          _
        $region20: #{_lambda_.11} parent=11 // pred_fallthru
          _
      $region12: #{_lambda_.11} parent=5 // pred_fallthru
        _
      %p126 = scmp.lt.s32.totalorder %s11, 2
      // Predicated region
      $region21: #{_lambda_.11} parent=5 // pred_check
        %p127 = pneg %p126
      $region22: #{_lambda_.11} parent=5 // pred_check_branch
        %129 = sbr.rel (%p127) target = $region24
      $region23: #{_lambda_.11} parent=5 // pred_region
        // Predicated region
        $region25: #{_lambda_.11} parent=23 // pred_check
          %p130 = pneg %p52
        $region26: #{_lambda_.11} parent=23 // pred_check_branch
          %132 = sbr.rel (%p130) target = $region28
        $region27: #{_lambda_.11} parent=23 // pred_region
          %s133 = sand.u32 %s42, 1
          %s134 = sand.u32 %s42, 1
          %s135 = smul.addr %s134, 576
          %s136 = scalar_lea.vmem [#allocation3], %s135
          %s137 = smul.u32 16, %s11
          %s138 = smul.addr %s137, 4
          %s139 = scalar_lea.vmem %s1, %s138
          // Predicated region
          $region29: #{_lambda_.11} parent=27 // pred_check
            _
          $region30: #{_lambda_.11} parent=27 // pred_check_branch
            %141 = sbr.rel (0) target = $region32
          $region31: #{_lambda_.11} parent=27 // pred_region
            // Predicated region
            $region33: #{_lambda_.11} parent=31 // pred_check
              _
            $region34: #{_lambda_.11} parent=31 // pred_check_branch
              %143 = sbr.rel (0) target = $region36
            $region35: #{_lambda_.11} parent=31 // pred_region
              loop: start=0, step=1, limit=1
              $region37: #{_lambda_.11} parent=35 // loop_pre_header
                _
              $region38: #{_lambda_.11} parent=35 // loop_header
                %s145 = sphi 0, %s149
                %p146 = scmp.ge.s32.totalorder %s145, 1
                %s150 = sphi %s139, %s139
                %s151 = sphi %s136, %s136
              $region39: #{_lambda_.11} parent=35 // loop_header_branch
                %148 = sbr.rel (%p146) target = $region43
              $region40: #{_lambda_.11} parent=35 // loop_body
                %v152 = vld [vmem:[%s150] sm:$0xff]
                %153 = vst [vmem:[%s151] sm:$0xff] %v152
                %v154 = vld [vmem:[%s150 + $0x8] sm:$0xff]
                %155 = vst [vmem:[%s151 + $0x8] sm:$0xff] %v154
                %v156 = vld [vmem:[%s150 + $0x10] sm:$0xff]
                %157 = vst [vmem:[%s151 + $0x10] sm:$0xff] %v156
                %v158 = vld [vmem:[%s150 + $0x18] sm:$0xff]
                %159 = vst [vmem:[%s151 + $0x18] sm:$0xff] %v158
                %v160 = vld [vmem:[%s150 + $0x20] sm:$0xff]
                %161 = vst [vmem:[%s151 + $0x20] sm:$0xff] %v160
                %v162 = vld [vmem:[%s150 + $0x28] sm:$0xff]
                %163 = vst [vmem:[%s151 + $0x28] sm:$0xff] %v162
                %v164 = vld [vmem:[%s150 + $0x30] sm:$0xff]
                %165 = vst [vmem:[%s151 + $0x30] sm:$0xff] %v164
                %v166 = vld [vmem:[%s150 + $0x38] sm:$0xff]
                %167 = vst [vmem:[%s151 + $0x38] sm:$0xff] %v166
                %v168 = vld [vmem:[%s150 + $0x80] sm:$0xff]
                %169 = vst [vmem:[%s151 + $0x40] sm:$0xff] %v168
                %v170 = vld [vmem:[%s150 + $0x88] sm:$0xff]
                %171 = vst [vmem:[%s151 + $0x48] sm:$0xff] %v170
                %v172 = vld [vmem:[%s150 + $0x90] sm:$0xff]
                %173 = vst [vmem:[%s151 + $0x50] sm:$0xff] %v172
                %v174 = vld [vmem:[%s150 + $0x98] sm:$0xff]
                %175 = vst [vmem:[%s151 + $0x58] sm:$0xff] %v174
                %v176 = vld [vmem:[%s150 + $0xa0] sm:$0xff]
                %177 = vst [vmem:[%s151 + $0x60] sm:$0xff] %v176
                %v178 = vld [vmem:[%s150 + $0xa8] sm:$0xff]
                %179 = vst [vmem:[%s151 + $0x68] sm:$0xff] %v178
                %v180 = vld [vmem:[%s150 + $0xb0] sm:$0xff]
                %181 = vst [vmem:[%s151 + $0x70] sm:$0xff] %v180
                %v182 = vld [vmem:[%s150 + $0xb8] sm:$0xff]
                %183 = vst [vmem:[%s151 + $0x78] sm:$0xff] %v182
                %v184 = vld [vmem:[%s150 + $0x100] sm:$0xff]
                %185 = vst [vmem:[%s151 + $0x80] sm:$0xff] %v184
                %v186 = vld [vmem:[%s150 + $0x108] sm:$0xff]
                %187 = vst [vmem:[%s151 + $0x88] sm:$0xff] %v186
                %v188 = vld [vmem:[%s150 + $0x110] sm:$0xff]
                %189 = vst [vmem:[%s151 + $0x90] sm:$0xff] %v188
                %v190 = vld [vmem:[%s150 + $0x118] sm:$0xff]
                %191 = vst [vmem:[%s151 + $0x98] sm:$0xff] %v190
                %v192 = vld [vmem:[%s150 + $0x120] sm:$0xff]
                %193 = vst [vmem:[%s151 + $0xa0] sm:$0xff] %v192
                %v194 = vld [vmem:[%s150 + $0x128] sm:$0xff]
                %195 = vst [vmem:[%s151 + $0xa8] sm:$0xff] %v194
                %v196 = vld [vmem:[%s150 + $0x130] sm:$0xff]
                %197 = vst [vmem:[%s151 + $0xb0] sm:$0xff] %v196
                %v198 = vld [vmem:[%s150 + $0x138] sm:$0xff]
                %199 = vst [vmem:[%s151 + $0xb8] sm:$0xff] %v198
                %v200 = vld [vmem:[%s150 + $0x180] sm:$0xff]
                %201 = vst [vmem:[%s151 + $0xc0] sm:$0xff] %v200
                %v202 = vld [vmem:[%s150 + $0x188] sm:$0xff]
                %203 = vst [vmem:[%s151 + $0xc8] sm:$0xff] %v202
                %v204 = vld [vmem:[%s150 + $0x190] sm:$0xff]
                %205 = vst [vmem:[%s151 + $0xd0] sm:$0xff] %v204
                %v206 = vld [vmem:[%s150 + $0x198] sm:$0xff]
                %207 = vst [vmem:[%s151 + $0xd8] sm:$0xff] %v206
                %v208 = vld [vmem:[%s150 + $0x1a0] sm:$0xff]
                %209 = vst [vmem:[%s151 + $0xe0] sm:$0xff] %v208
                %v210 = vld [vmem:[%s150 + $0x1a8] sm:$0xff]
                %211 = vst [vmem:[%s151 + $0xe8] sm:$0xff] %v210
                %v212 = vld [vmem:[%s150 + $0x1b0] sm:$0xff]
                %213 = vst [vmem:[%s151 + $0xf0] sm:$0xff] %v212
                %v214 = vld [vmem:[%s150 + $0x1b8] sm:$0xff]
                %215 = vst [vmem:[%s151 + $0xf8] sm:$0xff] %v214
                %v216 = vld [vmem:[%s150 + $0x200] sm:$0xff]
                %217 = vst [vmem:[%s151 + $0x100] sm:$0xff] %v216
                %v218 = vld [vmem:[%s150 + $0x208] sm:$0xff]
                %219 = vst [vmem:[%s151 + $0x108] sm:$0xff] %v218
                %v220 = vld [vmem:[%s150 + $0x210] sm:$0xff]
                %221 = vst [vmem:[%s151 + $0x110] sm:$0xff] %v220
                %v222 = vld [vmem:[%s150 + $0x218] sm:$0xff]
                %223 = vst [vmem:[%s151 + $0x118] sm:$0xff] %v222
                %v224 = vld [vmem:[%s150 + $0x220] sm:$0xff]
                %225 = vst [vmem:[%s151 + $0x120] sm:$0xff] %v224
                %v226 = vld [vmem:[%s150 + $0x228] sm:$0xff]
                %227 = vst [vmem:[%s151 + $0x128] sm:$0xff] %v226
                %v228 = vld [vmem:[%s150 + $0x230] sm:$0xff]
                %229 = vst [vmem:[%s151 + $0x130] sm:$0xff] %v228
                %v230 = vld [vmem:[%s150 + $0x238] sm:$0xff]
                %231 = vst [vmem:[%s151 + $0x138] sm:$0xff] %v230
                %v232 = vld [vmem:[%s150 + $0x280] sm:$0xff]
                %233 = vst [vmem:[%s151 + $0x140] sm:$0xff] %v232
                %v234 = vld [vmem:[%s150 + $0x288] sm:$0xff]
                %235 = vst [vmem:[%s151 + $0x148] sm:$0xff] %v234
                %v236 = vld [vmem:[%s150 + $0x290] sm:$0xff]
                %237 = vst [vmem:[%s151 + $0x150] sm:$0xff] %v236
                %v238 = vld [vmem:[%s150 + $0x298] sm:$0xff]
                %239 = vst [vmem:[%s151 + $0x158] sm:$0xff] %v238
                %v240 = vld [vmem:[%s150 + $0x2a0] sm:$0xff]
                %241 = vst [vmem:[%s151 + $0x160] sm:$0xff] %v240
                %v242 = vld [vmem:[%s150 + $0x2a8] sm:$0xff]
                %243 = vst [vmem:[%s151 + $0x168] sm:$0xff] %v242
                %v244 = vld [vmem:[%s150 + $0x2b0] sm:$0xff]
                %245 = vst [vmem:[%s151 + $0x170] sm:$0xff] %v244
                %v246 = vld [vmem:[%s150 + $0x2b8] sm:$0xff]
                %247 = vst [vmem:[%s151 + $0x178] sm:$0xff] %v246
                %v248 = vld [vmem:[%s150 + $0x300] sm:$0xff]
                %249 = vst [vmem:[%s151 + $0x180] sm:$0xff] %v248
                %v250 = vld [vmem:[%s150 + $0x308] sm:$0xff]
                %251 = vst [vmem:[%s151 + $0x188] sm:$0xff] %v250
                %v252 = vld [vmem:[%s150 + $0x310] sm:$0xff]
                %253 = vst [vmem:[%s151 + $0x190] sm:$0xff] %v252
                %v254 = vld [vmem:[%s150 + $0x318] sm:$0xff]
                %255 = vst [vmem:[%s151 + $0x198] sm:$0xff] %v254
                %v256 = vld [vmem:[%s150 + $0x320] sm:$0xff]
                %257 = vst [vmem:[%s151 + $0x1a0] sm:$0xff] %v256
                %v258 = vld [vmem:[%s150 + $0x328] sm:$0xff]
                %259 = vst [vmem:[%s151 + $0x1a8] sm:$0xff] %v258
                %v260 = vld [vmem:[%s150 + $0x330] sm:$0xff]
                %261 = vst [vmem:[%s151 + $0x1b0] sm:$0xff] %v260
                %v262 = vld [vmem:[%s150 + $0x338] sm:$0xff]
                %263 = vst [vmem:[%s151 + $0x1b8] sm:$0xff] %v262
                %v264 = vld [vmem:[%s150 + $0x380] sm:$0xff]
                %265 = vst [vmem:[%s151 + $0x1c0] sm:$0xff] %v264
                %v266 = vld [vmem:[%s150 + $0x388] sm:$0xff]
                %267 = vst [vmem:[%s151 + $0x1c8] sm:$0xff] %v266
                %v268 = vld [vmem:[%s150 + $0x390] sm:$0xff]
                %269 = vst [vmem:[%s151 + $0x1d0] sm:$0xff] %v268
                %v270 = vld [vmem:[%s150 + $0x398] sm:$0xff]
                %271 = vst [vmem:[%s151 + $0x1d8] sm:$0xff] %v270
                %v272 = vld [vmem:[%s150 + $0x3a0] sm:$0xff]
                %273 = vst [vmem:[%s151 + $0x1e0] sm:$0xff] %v272
                %v274 = vld [vmem:[%s150 + $0x3a8] sm:$0xff]
                %275 = vst [vmem:[%s151 + $0x1e8] sm:$0xff] %v274
                %v276 = vld [vmem:[%s150 + $0x3b0] sm:$0xff]
                %277 = vst [vmem:[%s151 + $0x1f0] sm:$0xff] %v276
                %v278 = vld [vmem:[%s150 + $0x3b8] sm:$0xff]
                %279 = vst [vmem:[%s151 + $0x1f8] sm:$0xff] %v278
                %v280 = vld [vmem:[%s150 + $0x400] sm:$0xff]
                %281 = vst [vmem:[%s151 + $0x200] sm:$0xff] %v280
                %v282 = vld [vmem:[%s150 + $0x408] sm:$0xff]
                %283 = vst [vmem:[%s151 + $0x208] sm:$0xff] %v282
                %v284 = vld [vmem:[%s150 + $0x410] sm:$0xff]
                %285 = vst [vmem:[%s151 + $0x210] sm:$0xff] %v284
                %v286 = vld [vmem:[%s150 + $0x418] sm:$0xff]
                %287 = vst [vmem:[%s151 + $0x218] sm:$0xff] %v286
                %v288 = vld [vmem:[%s150 + $0x420] sm:$0xff]
                %289 = vst [vmem:[%s151 + $0x220] sm:$0xff] %v288
                %v290 = vld [vmem:[%s150 + $0x428] sm:$0xff]
                %291 = vst [vmem:[%s151 + $0x228] sm:$0xff] %v290
                %v292 = vld [vmem:[%s150 + $0x430] sm:$0xff]
                %293 = vst [vmem:[%s151 + $0x230] sm:$0xff] %v292
                %v294 = vld [vmem:[%s150 + $0x438] sm:$0xff]
                %295 = vst [vmem:[%s151 + $0x238] sm:$0xff] %v294
              $region41: #{_lambda_.11} parent=35 // loop_footer
                %s149 = sadd.s32 1, %s145
              $region42: #{_lambda_.11} parent=35 // loop_footer_branch
                %144 = sbr.rel target = $region38
              $region43: #{_lambda_.11} parent=35 // loop_exit
                _
            $region36: #{_lambda_.11} parent=31 // pred_fallthru
              _
            // Predicated region
            $region44: #{_lambda_.11} parent=31 // pred_check
              _
            $region45: #{_lambda_.11} parent=31 // pred_check_branch
              %297 = sbr.rel target = $region47
            $region46: #{_lambda_.11} parent=31 // pred_region
              _
            $region47: #{_lambda_.11} parent=31 // pred_fallthru
              _
          $region32: #{_lambda_.11} parent=27 // pred_fallthru
            _
          %298 = vnop
        $region28: #{_lambda_.11} parent=23 // pred_fallthru
          _
      $region24: #{_lambda_.11} parent=5 // pred_fallthru
        _
      %p299 = scmp.le.s32.totalorder 1, %s11
      %p300 = scmp.lt.s32.totalorder %s11, 3
      %p301 = pnand %p299, %p300
      %p302 = pneg %p301
      // Predicated region
      $region48: #{_lambda_.11} parent=5 // pred_check
        _
      $region49: #{_lambda_.11} parent=5 // pred_check_branch
        %304 = sbr.rel (%p301) target = $region51
      $region50: #{_lambda_.11} parent=5 // pred_region
        %s305 = ssub.s32 %s11, 1
        %s306 = sand.u32 %s45, 1
        %s307 = sand.u32 %s45, 1
        %s308 = smul.addr %s307, 576
        %s309 = scalar_lea.vmem [#allocation3], %s308
        // Predicated region
        $region52: #{_lambda_.11} parent=50 // pred_check
          %p310 = pneg %p58
        $region53: #{_lambda_.11} parent=50 // pred_check_branch
          %312 = sbr.rel (%p310) target = $region55
        $region54: #{_lambda_.11} parent=50 // pred_region
          _
        $region55: #{_lambda_.11} parent=50 // pred_fallthru
          _
        %p313 = pneg %p32
        %p314 = pneg %p29
        %s315 = sand.u32 %s45, 1
        %s316 = sand.u32 %s45, 1
        %s317 = smul.addr %s316, 576
        %s318 = scalar_lea.vmem [#allocation3], %s317
        %p319 = pneg %p58
        %p320 = pneg %p55
        %p321 = pneg %p79
        %p322 = pneg %p76
        %p323 = pneg %p105
        %p324 = pneg %p102
        %s325 = smul.u32 16, %s16
        %p326 = scmp.lt.s32.totalorder %s325, 31
        %s327 = scalar_select %p326, %s325, 31
        %s328 = scalar_lea.vmem %s3, %s327
        %s329 = smul.u32 16, %s16
        %s330 = smul.u32 16, %s16
        %p331 = scmp.lt.s32.totalorder %s330, 31
        %s332 = scalar_select %p331, %s330, 31
        %s333 = scalar_lea.vmem %s3, %s332
        %s334 = smul.u32 16, %s16
        %v336 = vld [vmem:[%s0] sm:$0x1]
        %v337 = vld [vmem:[%s309] sm:$0xff]
        %v338 = vld [vmem:[%s309 + $0x8] sm:$0xff]
        %v339 = vld [vmem:[%s309 + $0x10] sm:$0xff]
        %v340 = vld [vmem:[%s309 + $0x18] sm:$0xff]
        %v341 = vld [vmem:[%s309 + $0x20] sm:$0xff]
        %v342 = vld [vmem:[%s309 + $0x28] sm:$0xff]
        %v343 = vld [vmem:[%s309 + $0x30] sm:$0xff]
        %v344 = vld [vmem:[%s309 + $0x38] sm:$0xff]
        %v345 = vld [vmem:[%s309 + $0x40] sm:$0xff]
        %v346 = vld [vmem:[%s309 + $0x48] sm:$0xff]
        %v347 = vld [vmem:[%s309 + $0x50] sm:$0xff]
        %v348 = vld [vmem:[%s309 + $0x58] sm:$0xff]
        %v349 = vld [vmem:[%s309 + $0x60] sm:$0xff]
        %v350 = vld [vmem:[%s309 + $0x68] sm:$0xff]
        %v351 = vld [vmem:[%s309 + $0x70] sm:$0xff]
        %v352 = vld [vmem:[%s309 + $0x78] sm:$0xff]
        %v353 = vld [vmem:[%s309 + $0x80] sm:$0xff]
        %v354 = vld [vmem:[%s309 + $0x88] sm:$0xff]
        %v355 = vld [vmem:[%s309 + $0x90] sm:$0xff]
        %v356 = vld [vmem:[%s309 + $0x98] sm:$0xff]
        %v357 = vld [vmem:[%s309 + $0xa0] sm:$0xff]
        %v358 = vld [vmem:[%s309 + $0xa8] sm:$0xff]
        %v359 = vld [vmem:[%s309 + $0xb0] sm:$0xff]
        %v360 = vld [vmem:[%s309 + $0xb8] sm:$0xff]
        %v361 = vld [vmem:[%s309 + $0xc0] sm:$0xff]
        %v362 = vld [vmem:[%s309 + $0xc8] sm:$0xff]
        %v363 = vld [vmem:[%s309 + $0xd0] sm:$0xff]
        %v364 = vld [vmem:[%s309 + $0xd8] sm:$0xff]
        %v365 = vld [vmem:[%s309 + $0xe0] sm:$0xff]
        %v366 = vld [vmem:[%s309 + $0xe8] sm:$0xff]
        %v367 = vld [vmem:[%s309 + $0xf0] sm:$0xff]
        %v368 = vld [vmem:[%s309 + $0xf8] sm:$0xff]
        %v369 = vld [vmem:[%s309 + $0x100] sm:$0xff]
        %v370 = vld [vmem:[%s309 + $0x108] sm:$0xff]
        %v371 = vld [vmem:[%s309 + $0x110] sm:$0xff]
        %v372 = vld [vmem:[%s309 + $0x118] sm:$0xff]
        %v373 = vld [vmem:[%s309 + $0x120] sm:$0xff]
        %v374 = vld [vmem:[%s309 + $0x128] sm:$0xff]
        %v375 = vld [vmem:[%s309 + $0x130] sm:$0xff]
        %v376 = vld [vmem:[%s309 + $0x138] sm:$0xff]
        %v377 = vld [vmem:[%s309 + $0x140] sm:$0xff]
        %v378 = vld [vmem:[%s309 + $0x148] sm:$0xff]
        %v379 = vld [vmem:[%s309 + $0x150] sm:$0xff]
        %v380 = vld [vmem:[%s309 + $0x158] sm:$0xff]
        %v381 = vld [vmem:[%s309 + $0x160] sm:$0xff]
        %v382 = vld [vmem:[%s309 + $0x168] sm:$0xff]
        %v383 = vld [vmem:[%s309 + $0x170] sm:$0xff]
        %v384 = vld [vmem:[%s309 + $0x178] sm:$0xff]
        %v385 = vld [vmem:[%s309 + $0x180] sm:$0xff]
        %v386 = vld [vmem:[%s309 + $0x188] sm:$0xff]
        %v387 = vld [vmem:[%s309 + $0x190] sm:$0xff]
        %v388 = vld [vmem:[%s309 + $0x198] sm:$0xff]
        %v389 = vld [vmem:[%s309 + $0x1a0] sm:$0xff]
        %v390 = vld [vmem:[%s309 + $0x1a8] sm:$0xff]
        %v391 = vld [vmem:[%s309 + $0x1b0] sm:$0xff]
        %v392 = vld [vmem:[%s309 + $0x1b8] sm:$0xff]
        %v393 = vld [vmem:[%s309 + $0x1c0] sm:$0xff]
        %v394 = vld [vmem:[%s309 + $0x1c8] sm:$0xff]
        %v395 = vld [vmem:[%s309 + $0x1d0] sm:$0xff]
        %v396 = vld [vmem:[%s309 + $0x1d8] sm:$0xff]
        %v397 = vld [vmem:[%s309 + $0x1e0] sm:$0xff]
        %v398 = vld [vmem:[%s309 + $0x1e8] sm:$0xff]
        %v399 = vld [vmem:[%s309 + $0x1f0] sm:$0xff]
        %v400 = vld [vmem:[%s309 + $0x1f8] sm:$0xff]
        %v401 = vld [vmem:[%s309 + $0x200] sm:$0xff]
        %v402 = vld [vmem:[%s309 + $0x208] sm:$0xff]
        %v403 = vld [vmem:[%s309 + $0x210] sm:$0xff]
        %v404 = vld [vmem:[%s309 + $0x218] sm:$0xff]
        %v405 = vld [vmem:[%s309 + $0x220] sm:$0xff]
        %v406 = vld [vmem:[%s309 + $0x228] sm:$0xff]
        %v407 = vld [vmem:[%s309 + $0x230] sm:$0xff]
        %v408 = vld [vmem:[%s309 + $0x238] sm:$0xff]
        %v409 = vld [vmem:[#allocation2] sm:$0x1]
        %411 = vset.pattern.permute.xlu0 0
        %412 = vperm.xlu0 %411, %v409
        %v413 = vpop.permute.xlu0 %412
        %v415 = vlaneseq
        %v416 = vshrl.u32 %v415, 7
        %v417 = vsub.s32 0, %v416
        %v418 = vrot.slane %v413, %v417
        %v491 = vunpack.c.l.b16 %v337
        %v492 = vunpack.c.h.b16 %v337
        %v493 = vunpack.c.l.b16 %v338
        %v494 = vunpack.c.h.b16 %v338
        %v495 = vunpack.c.l.b16 %v339
        %v496 = vunpack.c.h.b16 %v339
        %v497 = vunpack.c.l.b16 %v340
        %v498 = vunpack.c.h.b16 %v340
        %v499 = vunpack.c.l.b16 %v341
        %v500 = vunpack.c.h.b16 %v341
        %v501 = vunpack.c.l.b16 %v342
        %v502 = vunpack.c.h.b16 %v342
        %v503 = vunpack.c.l.b16 %v343
        %v504 = vunpack.c.h.b16 %v343
        %v505 = vunpack.c.l.b16 %v344
        %v506 = vunpack.c.h.b16 %v344
        %v507 = vunpack.c.l.b16 %v345
        %v508 = vunpack.c.h.b16 %v345
        %v509 = vunpack.c.l.b16 %v346
        %v510 = vunpack.c.h.b16 %v346
        %v511 = vunpack.c.l.b16 %v347
        %v512 = vunpack.c.h.b16 %v347
        %v513 = vunpack.c.l.b16 %v348
        %v514 = vunpack.c.h.b16 %v348
        %v515 = vunpack.c.l.b16 %v349
        %v516 = vunpack.c.h.b16 %v349
        %v517 = vunpack.c.l.b16 %v350
        %v518 = vunpack.c.h.b16 %v350
        %v519 = vunpack.c.l.b16 %v351
        %v520 = vunpack.c.h.b16 %v351
        %v521 = vunpack.c.l.b16 %v352
        %v522 = vunpack.c.h.b16 %v352
        %v523 = vunpack.c.l.b16 %v353
        %v524 = vunpack.c.h.b16 %v353
        %v525 = vunpack.c.l.b16 %v354
        %v526 = vunpack.c.h.b16 %v354
        %v527 = vunpack.c.l.b16 %v355
        %v528 = vunpack.c.h.b16 %v355
        %v529 = vunpack.c.l.b16 %v356
        %v530 = vunpack.c.h.b16 %v356
        %v531 = vunpack.c.l.b16 %v357
        %v532 = vunpack.c.h.b16 %v357
        %v533 = vunpack.c.l.b16 %v358
        %v534 = vunpack.c.h.b16 %v358
        %v535 = vunpack.c.l.b16 %v359
        %v536 = vunpack.c.h.b16 %v359
        %v537 = vunpack.c.l.b16 %v360
        %v538 = vunpack.c.h.b16 %v360
        %v539 = vunpack.c.l.b16 %v361
        %v540 = vunpack.c.h.b16 %v361
        %v541 = vunpack.c.l.b16 %v362
        %v542 = vunpack.c.h.b16 %v362
        %v543 = vunpack.c.l.b16 %v363
        %v544 = vunpack.c.h.b16 %v363
        %v545 = vunpack.c.l.b16 %v364
        %v546 = vunpack.c.h.b16 %v364
        %v547 = vunpack.c.l.b16 %v365
        %v548 = vunpack.c.h.b16 %v365
        %v549 = vunpack.c.l.b16 %v366
        %v550 = vunpack.c.h.b16 %v366
        %v551 = vunpack.c.l.b16 %v367
        %v552 = vunpack.c.h.b16 %v367
        %v553 = vunpack.c.l.b16 %v368
        %v554 = vunpack.c.h.b16 %v368
        %v555 = vunpack.c.l.b16 %v369
        %v556 = vunpack.c.h.b16 %v369
        %v557 = vunpack.c.l.b16 %v370
        %v558 = vunpack.c.h.b16 %v370
        %v559 = vunpack.c.l.b16 %v371
        %v560 = vunpack.c.h.b16 %v371
        %v561 = vunpack.c.l.b16 %v372
        %v562 = vunpack.c.h.b16 %v372
        %v563 = vunpack.c.l.b16 %v373
        %v564 = vunpack.c.h.b16 %v373
        %v565 = vunpack.c.l.b16 %v374
        %v566 = vunpack.c.h.b16 %v374
        %v567 = vunpack.c.l.b16 %v375
        %v568 = vunpack.c.h.b16 %v375
        %v569 = vunpack.c.l.b16 %v376
        %v570 = vunpack.c.h.b16 %v376
        %v571 = vunpack.c.l.b16 %v377
        %v572 = vunpack.c.h.b16 %v377
        %v573 = vunpack.c.l.b16 %v378
        %v574 = vunpack.c.h.b16 %v378
        %v575 = vunpack.c.l.b16 %v379
        %v576 = vunpack.c.h.b16 %v379
        %v577 = vunpack.c.l.b16 %v380
        %v578 = vunpack.c.h.b16 %v380
        %v579 = vunpack.c.l.b16 %v381
        %v580 = vunpack.c.h.b16 %v381
        %v581 = vunpack.c.l.b16 %v382
        %v582 = vunpack.c.h.b16 %v382
        %v583 = vunpack.c.l.b16 %v383
        %v584 = vunpack.c.h.b16 %v383
        %v585 = vunpack.c.l.b16 %v384
        %v586 = vunpack.c.h.b16 %v384
        %v587 = vunpack.c.l.b16 %v385
        %v588 = vunpack.c.h.b16 %v385
        %v589 = vunpack.c.l.b16 %v386
        %v590 = vunpack.c.h.b16 %v386
        %v591 = vunpack.c.l.b16 %v387
        %v592 = vunpack.c.h.b16 %v387
        %v593 = vunpack.c.l.b16 %v388
        %v594 = vunpack.c.h.b16 %v388
        %v595 = vunpack.c.l.b16 %v389
        %v596 = vunpack.c.h.b16 %v389
        %v597 = vunpack.c.l.b16 %v390
        %v598 = vunpack.c.h.b16 %v390
        %v599 = vunpack.c.l.b16 %v391
        %v600 = vunpack.c.h.b16 %v391
        %v601 = vunpack.c.l.b16 %v392
        %v602 = vunpack.c.h.b16 %v392
        %v603 = vunpack.c.l.b16 %v393
        %v604 = vunpack.c.h.b16 %v393
        %v605 = vunpack.c.l.b16 %v394
        %v606 = vunpack.c.h.b16 %v394
        %v607 = vunpack.c.l.b16 %v395
        %v608 = vunpack.c.h.b16 %v395
        %v609 = vunpack.c.l.b16 %v396
        %v610 = vunpack.c.h.b16 %v396
        %v611 = vunpack.c.l.b16 %v397
        %v612 = vunpack.c.h.b16 %v397
        %v613 = vunpack.c.l.b16 %v398
        %v614 = vunpack.c.h.b16 %v398
        %v615 = vunpack.c.l.b16 %v399
        %v616 = vunpack.c.h.b16 %v399
        %v617 = vunpack.c.l.b16 %v400
        %v618 = vunpack.c.h.b16 %v400
        %v619 = vunpack.c.l.b16 %v401
        %v620 = vunpack.c.h.b16 %v401
        %v621 = vunpack.c.l.b16 %v402
        %v622 = vunpack.c.h.b16 %v402
        %v623 = vunpack.c.l.b16 %v403
        %v624 = vunpack.c.h.b16 %v403
        %v625 = vunpack.c.l.b16 %v404
        %v626 = vunpack.c.h.b16 %v404
        %v627 = vunpack.c.l.b16 %v405
        %v628 = vunpack.c.h.b16 %v405
        %v629 = vunpack.c.l.b16 %v406
        %v630 = vunpack.c.h.b16 %v406
        %v631 = vunpack.c.l.b16 %v407
        %v632 = vunpack.c.h.b16 %v407
        %v633 = vunpack.c.l.b16 %v408
        %v634 = vunpack.c.h.b16 %v408
        %v635 = vpack.c.b16 %v507, %v491
        %v636 = vpack.c.b16 %v508, %v492
        %v637 = vpack.c.b16 %v509, %v493
        %v638 = vpack.c.b16 %v510, %v494
        %v639 = vpack.c.b16 %v511, %v495
        %v640 = vpack.c.b16 %v512, %v496
        %v641 = vpack.c.b16 %v513, %v497
        %v642 = vpack.c.b16 %v514, %v498
        %v643 = vpack.c.b16 %v515, %v499
        %v644 = vpack.c.b16 %v516, %v500
        %v645 = vpack.c.b16 %v517, %v501
        %v646 = vpack.c.b16 %v518, %v502
        %v647 = vpack.c.b16 %v519, %v503
        %v648 = vpack.c.b16 %v520, %v504
        %v649 = vpack.c.b16 %v521, %v505
        %v650 = vpack.c.b16 %v522, %v506
        %v651 = vpack.c.b16 %v539, %v523
        %v652 = vpack.c.b16 %v540, %v524
        %v653 = vpack.c.b16 %v541, %v525
        %v654 = vpack.c.b16 %v542, %v526
        %v655 = vpack.c.b16 %v543, %v527
        %v656 = vpack.c.b16 %v544, %v528
        %v657 = vpack.c.b16 %v545, %v529
        %v658 = vpack.c.b16 %v546, %v530
        %v659 = vpack.c.b16 %v547, %v531
        %v660 = vpack.c.b16 %v548, %v532
        %v661 = vpack.c.b16 %v549, %v533
        %v662 = vpack.c.b16 %v550, %v534
        %v663 = vpack.c.b16 %v551, %v535
        %v664 = vpack.c.b16 %v552, %v536
        %v665 = vpack.c.b16 %v553, %v537
        %v666 = vpack.c.b16 %v554, %v538
        %v667 = vpack.c.b16 %v571, %v555
        %v668 = vpack.c.b16 %v572, %v556
        %v669 = vpack.c.b16 %v573, %v557
        %v670 = vpack.c.b16 %v574, %v558
        %v671 = vpack.c.b16 %v575, %v559
        %v672 = vpack.c.b16 %v576, %v560
        %v673 = vpack.c.b16 %v577, %v561
        %v674 = vpack.c.b16 %v578, %v562
        %v675 = vpack.c.b16 %v579, %v563
        %v676 = vpack.c.b16 %v580, %v564
        %v677 = vpack.c.b16 %v581, %v565
        %v678 = vpack.c.b16 %v582, %v566
        %v679 = vpack.c.b16 %v583, %v567
        %v680 = vpack.c.b16 %v584, %v568
        %v681 = vpack.c.b16 %v585, %v569
        %v682 = vpack.c.b16 %v586, %v570
        %v683 = vpack.c.b16 %v603, %v587
        %v684 = vpack.c.b16 %v604, %v588
        %v685 = vpack.c.b16 %v605, %v589
        %v686 = vpack.c.b16 %v606, %v590
        %v687 = vpack.c.b16 %v607, %v591
        %v688 = vpack.c.b16 %v608, %v592
        %v689 = vpack.c.b16 %v609, %v593
        %v690 = vpack.c.b16 %v610, %v594
        %v691 = vpack.c.b16 %v611, %v595
        %v692 = vpack.c.b16 %v612, %v596
        %v693 = vpack.c.b16 %v613, %v597
        %v694 = vpack.c.b16 %v614, %v598
        %v695 = vpack.c.b16 %v615, %v599
        %v696 = vpack.c.b16 %v616, %v600
        %v697 = vpack.c.b16 %v617, %v601
        %v698 = vpack.c.b16 %v618, %v602
        %v699 = vpack.c.b16 %v619, %v619
        %v700 = vpack.c.b16 %v620, %v620
        %v701 = vpack.c.b16 %v621, %v621
        %v702 = vpack.c.b16 %v622, %v622
        %v703 = vpack.c.b16 %v623, %v623
        %v704 = vpack.c.b16 %v624, %v624
        %v705 = vpack.c.b16 %v625, %v625
        %v706 = vpack.c.b16 %v626, %v626
        %v707 = vpack.c.b16 %v627, %v627
        %v708 = vpack.c.b16 %v628, %v628
        %v709 = vpack.c.b16 %v629, %v629
        %v710 = vpack.c.b16 %v630, %v630
        %v711 = vpack.c.b16 %v631, %v631
        %v712 = vpack.c.b16 %v632, %v632
        %v713 = vpack.c.b16 %v633, %v633
        %v714 = vpack.c.b16 %v634, %v634
        %vm779 = vcmask 588800
        %v781 = vsel %vm779, %v336, 0
        %vm783 = vcmask 1043456
        %v785 = vsel %vm783, %v699, 0
        %v788 = vsel %vm783, %v700, 0
        %v791 = vsel %vm783, %v701, 0
        %v794 = vsel %vm783, %v702, 0
        %v797 = vsel %vm783, %v703, 0
        %v800 = vsel %vm783, %v704, 0
        %v803 = vsel %vm783, %v705, 0
        %v806 = vsel %vm783, %v706, 0
        %v809 = vsel %vm783, %v707, 0
        %v812 = vsel %vm783, %v708, 0
        %v815 = vsel %vm783, %v709, 0
        %v818 = vsel %vm783, %v710, 0
        %v821 = vsel %vm783, %v711, 0
        %v824 = vsel %vm783, %v712, 0
        %v827 = vsel %vm783, %v713, 0
        %v830 = vsel %vm783, %v714, 0
        %832 = vmatprep.subr.bf16.mxu0 0
        %833 = vmatpush1.bf16.msra.mxu0 0
        %834 = vmatprep.subr.bf16.mxu0 0
        %835 = vmatpush1.bf16.msra.mxu0 0
        %836 = vmatprep.subr.bf16.mxu0 0
        %837 = vmatpush1.bf16.msra.mxu0 0
        %838 = vmatprep.subr.bf16.mxu0 %v788
        %839 = vmatpush1.bf16.msra.mxu0 %v785
        %840 = vmatprep.subr.bf16.mxu0 %v684
        %841 = vmatpush1.bf16.msra.mxu0 %v683
        %842 = vmatprep.subr.bf16.mxu0 %v668
        %843 = vmatpush1.bf16.msra.mxu0 %v667
        %844 = vmatprep.subr.bf16.mxu0 %v652
        %845 = vmatpush1.bf16.msra.mxu0 %v651
        %846 = vmatprep.subr.bf16.mxu0 %v636
        %847 = vmatpush1.bf16.msra.mxu0 %v635
        %848 = vmatprep.subr.bf16.mxu0 0
        %849 = vmatpush2.bf16.msra.mxu0 0
        %850 = vmatprep.subr.bf16.mxu0 0
        %851 = vmatpush2.bf16.msra.mxu0 0
        %852 = vmatprep.subr.bf16.mxu0 0
        %853 = vmatpush2.bf16.msra.mxu0 0
        %854 = vmatprep.subr.bf16.mxu0 0
        %855 = vmatpush2.bf16.msra.mxu0 0
        %856 = vmatprep.subr.bf16.mxu0 0
        %857 = vmatpush2.bf16.msra.mxu0 0
        %858 = vmatprep.subr.bf16.mxu0 0
        %859 = vmatpush2.bf16.msra.mxu0 0
        %860 = vmatprep.subr.bf16.mxu0 0
        %861 = vmatpush2.bf16.msra.mxu0 0
        %862 = vmatprep.subr.bf16.mxu0 0
        %863 = vmatpush2.bf16.msra.mxu0 0
        %864 = vmatprep.mubr.bf16.mxu0 0
        %865 = vmatmul.mubr.bf16.gmra.mxu0 %v781
        %v866 = vpop.f32.mrf.mxu0
        %v867 = vadd.f32 %v418, %v866
        %v868 = vpop.f32.mrf.mxu0
        %v869 = vadd.f32 %v418, %v868
        %v870 = vpop.f32.mrf.mxu0
        %v871 = vpop.f32.mrf.mxu0
        %872 = vdwg.mxu0
        %873 = vmatprep.subr.bf16.mxu0 0
        %874 = vmatpush1.bf16.msra.mxu0 0
        %875 = vmatprep.subr.bf16.mxu0 0
        %876 = vmatpush1.bf16.msra.mxu0 0
        %877 = vmatprep.subr.bf16.mxu0 0
        %878 = vmatpush1.bf16.msra.mxu0 0
        %879 = vmatprep.subr.bf16.mxu0 %v794
        %880 = vmatpush1.bf16.msra.mxu0 %v791
        %881 = vmatprep.subr.bf16.mxu0 %v686
        %882 = vmatpush1.bf16.msra.mxu0 %v685
        %883 = vmatprep.subr.bf16.mxu0 %v670
        %884 = vmatpush1.bf16.msra.mxu0 %v669
        %885 = vmatprep.subr.bf16.mxu0 %v654
        %886 = vmatpush1.bf16.msra.mxu0 %v653
        %887 = vmatprep.subr.bf16.mxu0 %v638
        %888 = vmatpush1.bf16.msra.mxu0 %v637
        %889 = vmatprep.subr.bf16.mxu0 0
        %890 = vmatpush2.bf16.msra.mxu0 0
        %891 = vmatprep.subr.bf16.mxu0 0
        %892 = vmatpush2.bf16.msra.mxu0 0
        %893 = vmatprep.subr.bf16.mxu0 0
        %894 = vmatpush2.bf16.msra.mxu0 0
        %895 = vmatprep.subr.bf16.mxu0 0
        %896 = vmatpush2.bf16.msra.mxu0 0
        %897 = vmatprep.subr.bf16.mxu0 0
        %898 = vmatpush2.bf16.msra.mxu0 0
        %899 = vmatprep.subr.bf16.mxu0 0
        %900 = vmatpush2.bf16.msra.mxu0 0
        %901 = vmatprep.subr.bf16.mxu0 0
        %902 = vmatpush2.bf16.msra.mxu0 0
        %903 = vmatprep.subr.bf16.mxu0 0
        %904 = vmatpush2.bf16.msra.mxu0 0
        %905 = vmatprep.mubr.bf16.mxu0 0
        %906 = vmatmul.mubr.bf16.gmra.mxu0 %v781
        %v907 = vpop.f32.mrf.mxu0
        %v908 = vadd.f32 %v418, %v907
        %v909 = vpop.f32.mrf.mxu0
        %v910 = vadd.f32 %v418, %v909
        %v911 = vpop.f32.mrf.mxu0
        %v912 = vpop.f32.mrf.mxu0
        %913 = vdwg.mxu0
        %914 = vmatprep.subr.bf16.mxu0 0
        %915 = vmatpush1.bf16.msra.mxu0 0
        %916 = vmatprep.subr.bf16.mxu0 0
        %917 = vmatpush1.bf16.msra.mxu0 0
        %918 = vmatprep.subr.bf16.mxu0 0
        %919 = vmatpush1.bf16.msra.mxu0 0
        %920 = vmatprep.subr.bf16.mxu0 %v800
        %921 = vmatpush1.bf16.msra.mxu0 %v797
        %922 = vmatprep.subr.bf16.mxu0 %v688
        %923 = vmatpush1.bf16.msra.mxu0 %v687
        %924 = vmatprep.subr.bf16.mxu0 %v672
        %925 = vmatpush1.bf16.msra.mxu0 %v671
        %926 = vmatprep.subr.bf16.mxu0 %v656
        %927 = vmatpush1.bf16.msra.mxu0 %v655
        %928 = vmatprep.subr.bf16.mxu0 %v640
        %929 = vmatpush1.bf16.msra.mxu0 %v639
        %930 = vmatprep.subr.bf16.mxu0 0
        %931 = vmatpush2.bf16.msra.mxu0 0
        %932 = vmatprep.subr.bf16.mxu0 0
        %933 = vmatpush2.bf16.msra.mxu0 0
        %934 = vmatprep.subr.bf16.mxu0 0
        %935 = vmatpush2.bf16.msra.mxu0 0
        %936 = vmatprep.subr.bf16.mxu0 0
        %937 = vmatpush2.bf16.msra.mxu0 0
        %938 = vmatprep.subr.bf16.mxu0 0
        %939 = vmatpush2.bf16.msra.mxu0 0
        %940 = vmatprep.subr.bf16.mxu0 0
        %941 = vmatpush2.bf16.msra.mxu0 0
        %942 = vmatprep.subr.bf16.mxu0 0
        %943 = vmatpush2.bf16.msra.mxu0 0
        %944 = vmatprep.subr.bf16.mxu0 0
        %945 = vmatpush2.bf16.msra.mxu0 0
        %946 = vmatprep.mubr.bf16.mxu0 0
        %947 = vmatmul.mubr.bf16.gmra.mxu0 %v781
        %v948 = vpop.f32.mrf.mxu0
        %v949 = vadd.f32 %v418, %v948
        %v950 = vpop.f32.mrf.mxu0
        %v951 = vadd.f32 %v418, %v950
        %v952 = vpop.f32.mrf.mxu0
        %v953 = vpop.f32.mrf.mxu0
        %954 = vdwg.mxu0
        %955 = vmatprep.subr.bf16.mxu0 0
        %956 = vmatpush1.bf16.msra.mxu0 0
        %957 = vmatprep.subr.bf16.mxu0 0
        %958 = vmatpush1.bf16.msra.mxu0 0
        %959 = vmatprep.subr.bf16.mxu0 0
        %960 = vmatpush1.bf16.msra.mxu0 0
        %961 = vmatprep.subr.bf16.mxu0 %v806
        %962 = vmatpush1.bf16.msra.mxu0 %v803
        %963 = vmatprep.subr.bf16.mxu0 %v690
        %964 = vmatpush1.bf16.msra.mxu0 %v689
        %965 = vmatprep.subr.bf16.mxu0 %v674
        %966 = vmatpush1.bf16.msra.mxu0 %v673
        %967 = vmatprep.subr.bf16.mxu0 %v658
        %968 = vmatpush1.bf16.msra.mxu0 %v657
        %969 = vmatprep.subr.bf16.mxu0 %v642
        %970 = vmatpush1.bf16.msra.mxu0 %v641
        %971 = vmatprep.subr.bf16.mxu0 0
        %972 = vmatpush2.bf16.msra.mxu0 0
        %973 = vmatprep.subr.bf16.mxu0 0
        %974 = vmatpush2.bf16.msra.mxu0 0
        %975 = vmatprep.subr.bf16.mxu0 0
        %976 = vmatpush2.bf16.msra.mxu0 0
        %977 = vmatprep.subr.bf16.mxu0 0
        %978 = vmatpush2.bf16.msra.mxu0 0
        %979 = vmatprep.subr.bf16.mxu0 0
        %980 = vmatpush2.bf16.msra.mxu0 0
        %981 = vmatprep.subr.bf16.mxu0 0
        %982 = vmatpush2.bf16.msra.mxu0 0
        %983 = vmatprep.subr.bf16.mxu0 0
        %984 = vmatpush2.bf16.msra.mxu0 0
        %985 = vmatprep.subr.bf16.mxu0 0
        %986 = vmatpush2.bf16.msra.mxu0 0
        %987 = vmatprep.mubr.bf16.mxu0 0
        %988 = vmatmul.mubr.bf16.gmra.mxu0 %v781
        %v989 = vpop.f32.mrf.mxu0
        %v990 = vadd.f32 %v418, %v989
        %v991 = vpop.f32.mrf.mxu0
        %v992 = vadd.f32 %v418, %v991
        %v993 = vpop.f32.mrf.mxu0
        %v994 = vpop.f32.mrf.mxu0
        %995 = vdwg.mxu0
        %996 = vmatprep.subr.bf16.mxu0 0
        %997 = vmatpush1.bf16.msra.mxu0 0
        %998 = vmatprep.subr.bf16.mxu0 0
        %999 = vmatpush1.bf16.msra.mxu0 0
        %1000 = vmatprep.subr.bf16.mxu0 0
        %1001 = vmatpush1.bf16.msra.mxu0 0
        %1002 = vmatprep.subr.bf16.mxu0 %v812
        %1003 = vmatpush1.bf16.msra.mxu0 %v809
        %1004 = vmatprep.subr.bf16.mxu0 %v692
        %1005 = vmatpush1.bf16.msra.mxu0 %v691
        %1006 = vmatprep.subr.bf16.mxu0 %v676
        %1007 = vmatpush1.bf16.msra.mxu0 %v675
        %1008 = vmatprep.subr.bf16.mxu0 %v660
        %1009 = vmatpush1.bf16.msra.mxu0 %v659
        %1010 = vmatprep.subr.bf16.mxu0 %v644
        %1011 = vmatpush1.bf16.msra.mxu0 %v643
        %1012 = vmatprep.subr.bf16.mxu0 0
        %1013 = vmatpush2.bf16.msra.mxu0 0
        %1014 = vmatprep.subr.bf16.mxu0 0
        %1015 = vmatpush2.bf16.msra.mxu0 0
        %1016 = vmatprep.subr.bf16.mxu0 0
        %1017 = vmatpush2.bf16.msra.mxu0 0
        %1018 = vmatprep.subr.bf16.mxu0 0
        %1019 = vmatpush2.bf16.msra.mxu0 0
        %1020 = vmatprep.subr.bf16.mxu0 0
        %1021 = vmatpush2.bf16.msra.mxu0 0
        %1022 = vmatprep.subr.bf16.mxu0 0
        %1023 = vmatpush2.bf16.msra.mxu0 0
        %1024 = vmatprep.subr.bf16.mxu0 0
        %1025 = vmatpush2.bf16.msra.mxu0 0
        %1026 = vmatprep.subr.bf16.mxu0 0
        %1027 = vmatpush2.bf16.msra.mxu0 0
        %1028 = vmatprep.mubr.bf16.mxu0 0
        %1029 = vmatmul.mubr.bf16.gmra.mxu0 %v781
        %v1030 = vpop.f32.mrf.mxu0
        %v1031 = vadd.f32 %v418, %v1030
        %v1032 = vpop.f32.mrf.mxu0
        %v1033 = vadd.f32 %v418, %v1032
        %v1034 = vpop.f32.mrf.mxu0
        %v1035 = vpop.f32.mrf.mxu0
        %1036 = vdwg.mxu0
        %1037 = vmatprep.subr.bf16.mxu0 0
        %1038 = vmatpush1.bf16.msra.mxu0 0
        %1039 = vmatprep.subr.bf16.mxu0 0
        %1040 = vmatpush1.bf16.msra.mxu0 0
        %1041 = vmatprep.subr.bf16.mxu0 0
        %1042 = vmatpush1.bf16.msra.mxu0 0
        %1043 = vmatprep.subr.bf16.mxu0 %v818
        %1044 = vmatpush1.bf16.msra.mxu0 %v815
        %1045 = vmatprep.subr.bf16.mxu0 %v694
        %1046 = vmatpush1.bf16.msra.mxu0 %v693
        %1047 = vmatprep.subr.bf16.mxu0 %v678
        %1048 = vmatpush1.bf16.msra.mxu0 %v677
        %1049 = vmatprep.subr.bf16.mxu0 %v662
        %1050 = vmatpush1.bf16.msra.mxu0 %v661
        %1051 = vmatprep.subr.bf16.mxu0 %v646
        %1052 = vmatpush1.bf16.msra.mxu0 %v645
        %1053 = vmatprep.subr.bf16.mxu0 0
        %1054 = vmatpush2.bf16.msra.mxu0 0
        %1055 = vmatprep.subr.bf16.mxu0 0
        %1056 = vmatpush2.bf16.msra.mxu0 0
        %1057 = vmatprep.subr.bf16.mxu0 0
        %1058 = vmatpush2.bf16.msra.mxu0 0
        %1059 = vmatprep.subr.bf16.mxu0 0
        %1060 = vmatpush2.bf16.msra.mxu0 0
        %1061 = vmatprep.subr.bf16.mxu0 0
        %1062 = vmatpush2.bf16.msra.mxu0 0
        %1063 = vmatprep.subr.bf16.mxu0 0
        %1064 = vmatpush2.bf16.msra.mxu0 0
        %1065 = vmatprep.subr.bf16.mxu0 0
        %1066 = vmatpush2.bf16.msra.mxu0 0
        %1067 = vmatprep.subr.bf16.mxu0 0
        %1068 = vmatpush2.bf16.msra.mxu0 0
        %1069 = vmatprep.mubr.bf16.mxu0 0
        %1070 = vmatmul.mubr.bf16.gmra.mxu0 %v781
        %v1071 = vpop.f32.mrf.mxu0
        %v1072 = vadd.f32 %v418, %v1071
        %v1073 = vpop.f32.mrf.mxu0
        %v1074 = vadd.f32 %v418, %v1073
        %v1075 = vpop.f32.mrf.mxu0
        %v1076 = vpop.f32.mrf.mxu0
        %1077 = vdwg.mxu0
        %1078 = vmatprep.subr.bf16.mxu0 0
        %1079 = vmatpush1.bf16.msra.mxu0 0
        %1080 = vmatprep.subr.bf16.mxu0 0
        %1081 = vmatpush1.bf16.msra.mxu0 0
        %1082 = vmatprep.subr.bf16.mxu0 0
        %1083 = vmatpush1.bf16.msra.mxu0 0
        %1084 = vmatprep.subr.bf16.mxu0 %v824
        %1085 = vmatpush1.bf16.msra.mxu0 %v821
        %1086 = vmatprep.subr.bf16.mxu0 %v696
        %1087 = vmatpush1.bf16.msra.mxu0 %v695
        %1088 = vmatprep.subr.bf16.mxu0 %v680
        %1089 = vmatpush1.bf16.msra.mxu0 %v679
        %1090 = vmatprep.subr.bf16.mxu0 %v664
        %1091 = vmatpush1.bf16.msra.mxu0 %v663
        %1092 = vmatprep.subr.bf16.mxu0 %v648
        %1093 = vmatpush1.bf16.msra.mxu0 %v647
        %1094 = vmatprep.subr.bf16.mxu0 0
        %1095 = vmatpush2.bf16.msra.mxu0 0
        %1096 = vmatprep.subr.bf16.mxu0 0
        %1097 = vmatpush2.bf16.msra.mxu0 0
        %1098 = vmatprep.subr.bf16.mxu0 0
        %1099 = vmatpush2.bf16.msra.mxu0 0
        %1100 = vmatprep.subr.bf16.mxu0 0
        %1101 = vmatpush2.bf16.msra.mxu0 0
        %1102 = vmatprep.subr.bf16.mxu0 0
        %1103 = vmatpush2.bf16.msra.mxu0 0
        %1104 = vmatprep.subr.bf16.mxu0 0
        %1105 = vmatpush2.bf16.msra.mxu0 0
        %1106 = vmatprep.subr.bf16.mxu0 0
        %1107 = vmatpush2.bf16.msra.mxu0 0
        %1108 = vmatprep.subr.bf16.mxu0 0
        %1109 = vmatpush2.bf16.msra.mxu0 0
        %1110 = vmatprep.mubr.bf16.mxu0 0
        %1111 = vmatmul.mubr.bf16.gmra.mxu0 %v781
        %v1112 = vpop.f32.mrf.mxu0
        %v1113 = vadd.f32 %v418, %v1112
        %v1114 = vpop.f32.mrf.mxu0
        %v1115 = vadd.f32 %v418, %v1114
        %v1116 = vpop.f32.mrf.mxu0
        %v1117 = vpop.f32.mrf.mxu0
        %1118 = vdwg.mxu0
        %1119 = vmatprep.subr.bf16.mxu0 0
        %1120 = vmatpush1.bf16.msra.mxu0 0
        %1121 = vmatprep.subr.bf16.mxu0 0
        %1122 = vmatpush1.bf16.msra.mxu0 0
        %1123 = vmatprep.subr.bf16.mxu0 0
        %1124 = vmatpush1.bf16.msra.mxu0 0
        %1125 = vmatprep.subr.bf16.mxu0 %v830
        %1126 = vmatpush1.bf16.msra.mxu0 %v827
        %1127 = vmatprep.subr.bf16.mxu0 %v698
        %1128 = vmatpush1.bf16.msra.mxu0 %v697
        %1129 = vmatprep.subr.bf16.mxu0 %v682
        %1130 = vmatpush1.bf16.msra.mxu0 %v681
        %1131 = vmatprep.subr.bf16.mxu0 %v666
        %1132 = vmatpush1.bf16.msra.mxu0 %v665
        %1133 = vmatprep.subr.bf16.mxu0 %v650
        %1134 = vmatpush1.bf16.msra.mxu0 %v649
        %1135 = vmatprep.subr.bf16.mxu0 0
        %1136 = vmatpush2.bf16.msra.mxu0 0
        %1137 = vmatprep.subr.bf16.mxu0 0
        %1138 = vmatpush2.bf16.msra.mxu0 0
        %1139 = vmatprep.subr.bf16.mxu0 0
        %1140 = vmatpush2.bf16.msra.mxu0 0
        %1141 = vmatprep.subr.bf16.mxu0 0
        %1142 = vmatpush2.bf16.msra.mxu0 0
        %1143 = vmatprep.subr.bf16.mxu0 0
        %1144 = vmatpush2.bf16.msra.mxu0 0
        %1145 = vmatprep.subr.bf16.mxu0 0
        %1146 = vmatpush2.bf16.msra.mxu0 0
        %1147 = vmatprep.subr.bf16.mxu0 0
        %1148 = vmatpush2.bf16.msra.mxu0 0
        %1149 = vmatprep.subr.bf16.mxu0 0
        %1150 = vmatpush2.bf16.msra.mxu0 0
        %1151 = vmatprep.mubr.bf16.mxu0 0
        %1152 = vmatmul.mubr.bf16.gmra.mxu0 %v781
        %v1153 = vpop.f32.mrf.mxu0
        %v1154 = vadd.f32 %v418, %v1153
        %v1155 = vpop.f32.mrf.mxu0
        %v1156 = vadd.f32 %v418, %v1155
        %v1157 = vpop.f32.mrf.mxu0
        %v1158 = vpop.f32.mrf.mxu0
        %1159 = vdwg.mxu0
        %v1160 = vxor.u32 %v867, 2147483648
        %v1161 = vxor.u32 %v869, 2147483648
        %v1162 = vxor.u32 %v908, 2147483648
        %v1163 = vxor.u32 %v910, 2147483648
        %v1164 = vxor.u32 %v949, 2147483648
        %v1165 = vxor.u32 %v951, 2147483648
        %v1166 = vxor.u32 %v990, 2147483648
        %v1167 = vxor.u32 %v992, 2147483648
        %v1168 = vxor.u32 %v1031, 2147483648
        %v1169 = vxor.u32 %v1033, 2147483648
        %v1170 = vxor.u32 %v1072, 2147483648
        %v1171 = vxor.u32 %v1074, 2147483648
        %v1172 = vxor.u32 %v1113, 2147483648
        %v1173 = vxor.u32 %v1115, 2147483648
        %v1174 = vxor.u32 %v1154, 2147483648
        %v1175 = vxor.u32 %v1156, 2147483648
        %v1176 = vmul.f32 %v1160, 1.442695
        %v1177 = vpow.pop %v1176
        %v1178 = vmul.f32 %v1161, 1.442695
        %v1179 = vpow.pop %v1178
        %v1180 = vmul.f32 %v1162, 1.442695
        %v1181 = vpow.pop %v1180
        %v1182 = vmul.f32 %v1163, 1.442695
        %v1183 = vpow.pop %v1182
        %v1184 = vmul.f32 %v1164, 1.442695
        %v1185 = vpow.pop %v1184
        %v1186 = vmul.f32 %v1165, 1.442695
        %v1187 = vpow.pop %v1186
        %v1188 = vmul.f32 %v1166, 1.442695
        %v1189 = vpow.pop %v1188
        %v1190 = vmul.f32 %v1167, 1.442695
        %v1191 = vpow.pop %v1190
        %v1192 = vmul.f32 %v1168, 1.442695
        %v1193 = vpow.pop %v1192
        %v1194 = vmul.f32 %v1169, 1.442695
        %v1195 = vpow.pop %v1194
        %v1196 = vmul.f32 %v1170, 1.442695
        %v1197 = vpow.pop %v1196
        %v1198 = vmul.f32 %v1171, 1.442695
        %v1199 = vpow.pop %v1198
        %v1200 = vmul.f32 %v1172, 1.442695
        %v1201 = vpow.pop %v1200
        %v1202 = vmul.f32 %v1173, 1.442695
        %v1203 = vpow.pop %v1202
        %v1204 = vmul.f32 %v1174, 1.442695
        %v1205 = vpow.pop %v1204
        %v1206 = vmul.f32 %v1175, 1.442695
        %v1207 = vpow.pop %v1206
        %v1208 = vadd.f32 %v1177, 1.0
        %v1209 = vadd.f32 %v1179, 1.0
        %v1210 = vadd.f32 %v1181, 1.0
        %v1211 = vadd.f32 %v1183, 1.0
        %v1212 = vadd.f32 %v1185, 1.0
        %v1213 = vadd.f32 %v1187, 1.0
        %v1214 = vadd.f32 %v1189, 1.0
        %v1215 = vadd.f32 %v1191, 1.0
        %v1216 = vadd.f32 %v1193, 1.0
        %v1217 = vadd.f32 %v1195, 1.0
        %v1218 = vadd.f32 %v1197, 1.0
        %v1219 = vadd.f32 %v1199, 1.0
        %v1220 = vadd.f32 %v1201, 1.0
        %v1221 = vadd.f32 %v1203, 1.0
        %v1222 = vadd.f32 %v1205, 1.0
        %v1223 = vadd.f32 %v1207, 1.0
        %v1224 = vrcp.pop %v1208
        %v1225 = vmul.f32 1.0, %v1224
        %v1226 = vrcp.pop %v1209
        %v1227 = vmul.f32 1.0, %v1226
        %v1228 = vrcp.pop %v1210
        %v1229 = vmul.f32 1.0, %v1228
        %v1230 = vrcp.pop %v1211
        %v1231 = vmul.f32 1.0, %v1230
        %v1232 = vrcp.pop %v1212
        %v1233 = vmul.f32 1.0, %v1232
        %v1234 = vrcp.pop %v1213
        %v1235 = vmul.f32 1.0, %v1234
        %v1236 = vrcp.pop %v1214
        %v1237 = vmul.f32 1.0, %v1236
        %v1238 = vrcp.pop %v1215
        %v1239 = vmul.f32 1.0, %v1238
        %v1240 = vrcp.pop %v1216
        %v1241 = vmul.f32 1.0, %v1240
        %v1242 = vrcp.pop %v1217
        %v1243 = vmul.f32 1.0, %v1242
        %v1244 = vrcp.pop %v1218
        %v1245 = vmul.f32 1.0, %v1244
        %v1246 = vrcp.pop %v1219
        %v1247 = vmul.f32 1.0, %v1246
        %v1248 = vrcp.pop %v1220
        %v1249 = vmul.f32 1.0, %v1248
        %v1250 = vrcp.pop %v1221
        %v1251 = vmul.f32 1.0, %v1250
        %v1252 = vrcp.pop %v1222
        %v1253 = vmul.f32 1.0, %v1252
        %v1254 = vrcp.pop %v1223
        %v1255 = vmul.f32 1.0, %v1254
        %v1256 = vmul.f32 %v1225, 192.0
        %v1257 = vmul.f32 %v1227, 192.0
        %v1258 = vmul.f32 %v1229, 192.0
        %v1259 = vmul.f32 %v1231, 192.0
        %v1260 = vmul.f32 %v1233, 192.0
        %v1261 = vmul.f32 %v1235, 192.0
        %v1262 = vmul.f32 %v1237, 192.0
        %v1263 = vmul.f32 %v1239, 192.0
        %v1264 = vmul.f32 %v1241, 192.0
        %v1265 = vmul.f32 %v1243, 192.0
        %v1266 = vmul.f32 %v1245, 192.0
        %v1267 = vmul.f32 %v1247, 192.0
        %v1268 = vmul.f32 %v1249, 192.0
        %v1269 = vmul.f32 %v1251, 192.0
        %v1270 = vmul.f32 %v1253, 192.0
        %v1271 = vmul.f32 %v1255, 192.0
        %v1288 = vcombine.low %v1256, %v1257
        %v1289 = vcombine.low %v1258, %v1259
        %v1290 = vcombine.low %v1260, %v1261
        %v1291 = vcombine.low %v1262, %v1263
        %v1293 = vunpack.c.l.s4 1966171168
        %v1294 = vunpack.c.0.s8 %v1293
        %v1295 = vlaneseq
        %v1296 = vshrl.u32 %v1295, 7
        %v1297 = vsub.s32 %v1294, %v1296
        %v1298 = vrot.slane %v1288, %v1297
        %v1300 = vunpack.c.l.s4 1966171168
        %v1301 = vunpack.c.0.s8 %v1300
        %v1302 = vlaneseq
        %v1303 = vshrl.u32 %v1302, 7
        %v1304 = vsub.s32 %v1301, %v1303
        %v1305 = vrot.slane %v1289, %v1304
        %v1307 = vunpack.c.l.s4 1966171168
        %v1308 = vunpack.c.0.s8 %v1307
        %v1309 = vlaneseq
        %v1310 = vshrl.u32 %v1309, 7
        %v1311 = vsub.s32 %v1308, %v1310
        %v1312 = vrot.slane %v1290, %v1311
        %v1314 = vunpack.c.l.s4 1966171168
        %v1315 = vunpack.c.0.s8 %v1314
        %v1316 = vlaneseq
        %v1317 = vshrl.u32 %v1316, 7
        %v1318 = vsub.s32 %v1315, %v1317
        %v1319 = vrot.slane %v1291, %v1318
        %v1320 = vcombine.low %v1298, %v1305
        %v1321 = vcombine.low %v1312, %v1319
        %v1323 = vunpack.c.l.s4 1966171168
        %v1324 = vunpack.c.0.s8 %v1323
        %v1325 = vlaneseq
        %v1326 = vshrl.u32 %v1325, 7
        %v1327 = vsub.s32 %v1324, %v1326
        %v1328 = vrot.slane %v1320, %v1327
        %v1330 = vunpack.c.l.s4 1966171168
        %v1331 = vunpack.c.0.s8 %v1330
        %v1332 = vlaneseq
        %v1333 = vshrl.u32 %v1332, 7
        %v1334 = vsub.s32 %v1331, %v1333
        %v1335 = vrot.slane %v1321, %v1334
        %v1336 = vcombine.low %v1328, %v1335
        %v1337 = vcombine.low %v1264, %v1265
        %v1338 = vcombine.low %v1266, %v1267
        %v1339 = vcombine.low %v1268, %v1269
        %v1340 = vcombine.low %v1270, %v1271
        %v1342 = vunpack.c.l.s4 1966171168
        %v1343 = vunpack.c.0.s8 %v1342
        %v1344 = vlaneseq
        %v1345 = vshrl.u32 %v1344, 7
        %v1346 = vsub.s32 %v1343, %v1345
        %v1347 = vrot.slane %v1337, %v1346
        %v1349 = vunpack.c.l.s4 1966171168
        %v1350 = vunpack.c.0.s8 %v1349
        %v1351 = vlaneseq
        %v1352 = vshrl.u32 %v1351, 7
        %v1353 = vsub.s32 %v1350, %v1352
        %v1354 = vrot.slane %v1338, %v1353
        %v1356 = vunpack.c.l.s4 1966171168
        %v1357 = vunpack.c.0.s8 %v1356
        %v1358 = vlaneseq
        %v1359 = vshrl.u32 %v1358, 7
        %v1360 = vsub.s32 %v1357, %v1359
        %v1361 = vrot.slane %v1339, %v1360
        %v1363 = vunpack.c.l.s4 1966171168
        %v1364 = vunpack.c.0.s8 %v1363
        %v1365 = vlaneseq
        %v1366 = vshrl.u32 %v1365, 7
        %v1367 = vsub.s32 %v1364, %v1366
        %v1368 = vrot.slane %v1340, %v1367
        %v1369 = vcombine.low %v1347, %v1354
        %v1370 = vcombine.low %v1361, %v1368
        %v1372 = vunpack.c.l.s4 1966171168
        %v1373 = vunpack.c.0.s8 %v1372
        %v1374 = vlaneseq
        %v1375 = vshrl.u32 %v1374, 7
        %v1376 = vsub.s32 %v1373, %v1375
        %v1377 = vrot.slane %v1369, %v1376
        %v1379 = vunpack.c.l.s4 1966171168
        %v1380 = vunpack.c.0.s8 %v1379
        %v1381 = vlaneseq
        %v1382 = vshrl.u32 %v1381, 7
        %v1383 = vsub.s32 %v1380, %v1382
        %v1384 = vrot.slane %v1370, %v1383
        %v1385 = vcombine.low %v1377, %v1384
        %1388 = vst [vmem:[%s333] sm:$0xff] %v1336
        %1389 = vst [vmem:[%s333 + $0x8] sm:$0xff] %v1385
        %s1390 = smul.u32 16, %s16
        %p1391 = scmp.lt.s32.totalorder %s1390, 31
        %s1392 = scalar_select %p1391, %s1390, 31
        %s1393 = scalar_lea.vmem %s3, %s1392
        // Predicated region
        $region56: #{_lambda_.11} parent=50 // pred_check
          %p1394 = pneg %p102
        $region57: #{_lambda_.11} parent=50 // pred_check_branch
          %1396 = sbr.rel (%p1394) target = $region59
        $region58: #{_lambda_.11} parent=50 // pred_region
          %s1397 = smul.u32 16, %s16
        $region59: #{_lambda_.11} parent=50 // pred_fallthru
          _
      $region51: #{_lambda_.11} parent=5 // pred_fallthru
        _
      %p1398 = scmp.le.s32.totalorder 2, %s11
      // Predicated region
      $region60: #{_lambda_.11} parent=5 // pred_check
        %p1399 = pneg %p1398
      $region61: #{_lambda_.11} parent=5 // pred_check_branch
        %1401 = sbr.rel (%p1399) target = $region63
      $region62: #{_lambda_.11} parent=5 // pred_region
        %s1402 = ssub.s32 %s11, 2
        // Predicated region
        $region64: #{_lambda_.11} parent=62 // pred_check
          %p1403 = pneg %p108
        $region65: #{_lambda_.11} parent=62 // pred_check_branch
          %1405 = sbr.rel (%p1403) target = $region67
        $region66: #{_lambda_.11} parent=62 // pred_region
          %s1406 = smul.u32 16, %s17
          %p1407 = scmp.lt.s32.totalorder %s1406, 31
          %s1408 = scalar_select %p1407, %s1406, 31
          %s1409 = scalar_lea.vmem %s3, %s1408
        $region67: #{_lambda_.11} parent=62 // pred_fallthru
          _
      $region63: #{_lambda_.11} parent=5 // pred_fallthru
        _
    $region6: #{_lambda_.11} parent=1 // loop_footer
      %s15 = sadd.s32 1, %s11
    $region7: #{_lambda_.11} parent=1 // loop_footer_branch
      %10 = sbr.rel target = $region3
    $region8: #{_lambda_.11} parent=1 // loop_exit
      _

</llo_original>
